<compile_context>
chip_gen: v6e
topology: v6e:2x2x1
jax: 0.10.0
libtpu: 0.0.40
codegen_flags: <defaults>
</compile_context>

<pallas_src>
import functools

import jax
import jax.numpy as jnp
from jax.experimental import pallas as pl
from jax.experimental.pallas import tpu as pltpu


def _round_up(x, m):
    return (x + m - 1) // m * m


# ----------------------------------------------------------------------------
# Tiling policy.
# ----------------------------------------------------------------------------
_TK_CAP = 8448                      # 66*128; exactly divides the real fc K=219648
_TM_CAP = 4096
_TILE_VMEM_BUDGET = 18 * 1024 * 1024


def _choose_tk(kp):
    """Largest K tile <= _TK_CAP that exactly divides the (padded) K."""
    if kp <= _TK_CAP:
        return kp                                   # single full-K block
    assert kp % 128 == 0, kp
    for t in range(_TK_CAP - _TK_CAP % 128, 0, -128):
        if kp % t == 0:
            return t
    return 128


def _tile_vmem_bytes(tm, tk, tn, out_bytes):
    # double-buffered X/W/bias/out blocks + f32 accumulator scratch
    return (2 * tm * tk * 2) + (2 * tk * tn * 2) + (2 * tn * 4) \
        + (2 * tm * tn * out_bytes) + (tm * tn * 4)


def _choose_tm(m, tk, tn, out_bytes):
    """Largest M tile fitting the VMEM budget; prefer exact divisors of M so
    no M-pad / output slice is ever needed."""
    cap = _TM_CAP
    while cap > 8 and _tile_vmem_bytes(cap, tk, tn, out_bytes) > _TILE_VMEM_BUDGET:
        cap //= 2
    if m <= cap:
        return m, m                                 # one full-M block
    for t in range(cap - cap % 8, max(cap // 4, 8) - 1, -8):
        if m % t == 0:
            return t, m                             # exact divisor, no pad
    tm = max(8, cap - cap % 8)
    return tm, _round_up(m, tm)                     # rare fallback: pad M


# ----------------------------------------------------------------------------
# Pallas kernel: tiled, fused  Y = act(X @ W + b)  with f32 accumulation.
# ----------------------------------------------------------------------------
def _matmul_bias_kernel(x_ref, w_ref, b_ref, o_ref, acc_ref, *, relu):
    @pl.when(pl.program_id(2) == 0)
    def _():
        acc_ref[...] = jnp.zeros_like(acc_ref)

    acc_ref[...] += jnp.dot(
        x_ref[...], w_ref[...], preferred_element_type=jnp.float32
    )

    @pl.when(pl.program_id(2) == pl.num_programs(2) - 1)
    def _():
        y = acc_ref[...] + b_ref[...]               # (tm, tn) + (1, tn)
        if relu:
            y = jnp.maximum(y, 0.0)
        o_ref[...] = y.astype(o_ref.dtype)


def matmul_bias(x, w_pad, b_pad, *, n_logical, relu, out_dtype=jnp.float32):
    """act(X @ W + b).

    x: (M, K) activations (cast to bf16 if needed).
    w_pad: (Kp, Np) bf16, pre-padded in prepare_params (Kp >= K, Np >= n_logical).
    b_pad: (1, Np) f32.
    """
    m, k = x.shape
    kp, np_ = w_pad.shape
    assert kp >= k and np_ >= n_logical
    assert b_pad.shape == (1, np_)

    if x.dtype != jnp.bfloat16:
        x = x.astype(jnp.bfloat16)
    if w_pad.dtype != jnp.bfloat16:
        w_pad = w_pad.astype(jnp.bfloat16)
    if b_pad.dtype != jnp.float32:
        b_pad = b_pad.astype(jnp.float32)
    if kp > k:                                      # never hit on Encoder shapes
        x = jnp.pad(x, ((0, 0), (0, kp - k)))

    tk = _choose_tk(kp)

    # N tiling: native width (<128) fallback, >=2 parallel N tiles when N>=512
    # (keeps both v7x TensorCores streaming disjoint fc-weight halves).
    if np_ < 128:
        tn = np_
    elif np_ >= 512 and np_ % 256 == 0:
        tn = 256
    elif np_ % 128 == 0 and np_ <= 512:
        tn = np_
    elif np_ % 128 == 0:
        tn = 128
    else:
        tn = np_

    out_bytes = jnp.dtype(out_dtype).itemsize
    tm, mp = _choose_tm(m, tk, tn, out_bytes)
    if mp > m:
        x = jnp.pad(x, ((0, mp - m), (0, 0)))

    grid = (mp // tm, np_ // tn, kp // tk)

    need = _tile_vmem_bytes(tm, tk, tn, out_bytes)
    vlim = int(max(24 << 20, min(40 << 20, 2 * need + (4 << 20))))

    out = pl.pallas_call(
        functools.partial(_matmul_bias_kernel, relu=relu),
        out_shape=jax.ShapeDtypeStruct((mp, np_), out_dtype),
        grid_spec=pltpu.PrefetchScalarGridSpec(
            num_scalar_prefetch=0,
            grid=grid,
            in_specs=[
                pl.BlockSpec((tm, tk), lambda i, j, kk: (i, kk)),
                pl.BlockSpec((tk, tn), lambda i, j, kk: (kk, j)),
                pl.BlockSpec((1, tn), lambda i, j, kk: (0, j)),
            ],
            out_specs=pl.BlockSpec((tm, tn), lambda i, j, kk: (i, j)),
            scratch_shapes=[pltpu.VMEM((tm, tn), jnp.float32)],
        ),
        compiler_params=pltpu.CompilerParams(
            dimension_semantics=("parallel", "parallel", "arbitrary"),
            vmem_limit_bytes=vlim,
        ),
    )(x, w_pad, b_pad)

    if mp > m:
        out = out[:m]
    if np_ > n_logical:
        out = out[:, :n_logical]
    return out


# ----------------------------------------------------------------------------
# Conv3d(kernel=3, stride=2, padding=1) + ReLU via im2col + Pallas GEMM.
# ----------------------------------------------------------------------------
def _im2col_3d_k3s2p1(x_ndhwc):
    # TODO(synk): implicit-GEMM conv (in-kernel 27-tap gather from a
    #             VMEM-resident halo window) to avoid this HBM round trip.
    n, d, h, w, c = x_ndhwc.shape
    do, ho, wo = (d + 1) // 2, (h + 1) // 2, (w + 1) // 2
    xp = jnp.pad(x_ndhwc, ((0, 0), (1, 1), (1, 1), (1, 1), (0, 0)))
    patches = []
    for kd in range(3):
        for kh in range(3):
            for kw in range(3):
                patches.append(
                    xp[:, kd:kd + 2 * do:2, kh:kh + 2 * ho:2, kw:kw + 2 * wo:2, :]
                )
    p = jnp.stack(patches, axis=4)              # (N, Do, Ho, Wo, 27, C)
    p = p.reshape(n * do * ho * wo, 27 * c)     # rows in (N, D, H, W) order
    return p, (n, do, ho, wo)


def conv3d_relu(x_ndhwc, cp):
    cols, (n, do, ho, wo) = _im2col_3d_k3s2p1(x_ndhwc)
    m, k = cols.shape
    cout = cp["b"].shape[1]
    r = (cp["wf"].shape[1] // cout) if "wf" in cp else 1
    if r > 1 and m % r == 0:
        # Lane-dense path: fold r output positions per GEMM row.  The column
        # reshape and the output reshape are free (identical HBM bytes); the
        # block-diagonal (r*K, 128) weight was built once in prepare_params,
        # so the conv output is written with full 128-lane unmasked stores.
        y = matmul_bias(cols.reshape(m // r, r * k), cp["wf"], cp["bf"],
                        n_logical=r * cout, relu=True, out_dtype=jnp.bfloat16)
        y = y.reshape(m, cout)
    else:
        # Native-width fallback (odd row counts): correct, masked stores.
        y = matmul_bias(cols, cp["w"], cp["b"], n_logical=cout, relu=True,
                        out_dtype=jnp.bfloat16)
    return y.reshape(n, do, ho, wo, cout)


# ----------------------------------------------------------------------------
# Encoder forward (matches the PyTorch module semantics).
# ----------------------------------------------------------------------------
def encoder_forward(x_ncdhw, kparams, *, fc_n):
    # NCDHW -> NDHWC (Cin=1 so layout-trivial); activations flow in bf16.
    x = jnp.transpose(x_ncdhw, (0, 2, 3, 4, 1)).astype(jnp.bfloat16)
    x = conv3d_relu(x, kparams["c1"])
    x = conv3d_relu(x, kparams["c2"])
    x = conv3d_relu(x, kparams["c3"])
    # fc weight rows were pre-permuted to (D, H, W, C) order, so PyTorch's
    # x.view(N, -1) (C-major) flatten becomes a free channels-last reshape.
    x = x.reshape(x.shape[0], -1)
    return matmul_bias(x, kparams["fc_w"], kparams["fc_b"], n_logical=fc_n,
                       relu=False, out_dtype=jnp.float32)


# ----------------------------------------------------------------------------
# Parameters.  Generated in PyTorch layout, then repacked once for the kernels.
# The original fc1 is Linear(128*12*11*13, 512); at the small test spatial
# size (16^3 -> 2^3 after three stride-2 convs) fc_in becomes 128*2*2*2.
# ----------------------------------------------------------------------------
def init_params(key, conv3_out_dhw, fc_out=512):
    d3, h3, w3 = conv3_out_dhw
    fc_in = 128 * d3 * h3 * w3
    ks = jax.random.split(key, 8)

    def winit(k, shape, fan_in):
        return jax.random.normal(k, shape, jnp.float32) / jnp.sqrt(float(fan_in))

    return {
        # Conv3d weights in PyTorch (Cout, Cin, kd, kh, kw) layout.
        "w1": winit(ks[0], (32, 1, 3, 3, 3), 27 * 1),
        "b1": winit(ks[1], (32,), 27 * 1),
        "w2": winit(ks[2], (64, 32, 3, 3, 3), 27 * 32),
        "b2": winit(ks[3], (64,), 27 * 32),
        "w3": winit(ks[4], (128, 64, 3, 3, 3), 27 * 64),
        "b3": winit(ks[5], (128,), 27 * 64),
        # Linear weight stored as (fc_in, fc_out) == fc1.weight.T, with fc_in
        # indexed in PyTorch's (C, D, H, W) flatten order.
        "w_fc": winit(ks[6], (fc_in, fc_out), fc_in),
        "b_fc": winit(ks[7], (fc_out,), fc_in),
    }


def _fold_conv_weight(w2d, b2d, r):
    """Block-diagonal fold: (K, Cout) -> (r*K, r*Cout), bias (1,Cout)->(1,r*Cout).
    Y2 = X2 @ Wf computes r consecutive output positions per row, so the
    (M/r, 128) output has exactly the same HBM bytes as the (M, Cout) one."""
    k, cout = w2d.shape
    wf = jnp.zeros((r, k, r, cout), w2d.dtype)
    ridx = jnp.arange(r)
    wf = wf.at[ridx, :, ridx, :].set(w2d)
    wf = wf.reshape(r * k, r * cout)
    bf = jnp.tile(b2d, (1, r))
    return wf, bf


def prepare_params(params, conv3_out_dhw):
    """One-time repack (outside the hot path): bf16 weights, conv taps as
    (27*Cin, Cout) plus a lane-dense block-diagonal fold to 128 output lanes,
    fc weight rows permuted from (C,D,H,W) to (D,H,W,C) order and pre-padded
    to 128-multiples (no jnp.pad of the big fc weight at call time)."""
    d3, h3, w3 = conv3_out_dhw

    def conv_entry(w_oidhw, b):
        cout = w_oidhw.shape[0]
        w = jnp.transpose(w_oidhw, (2, 3, 4, 1, 0))       # (kd,kh,kw,Cin,Cout)
        w2d = w.reshape(-1, cout).astype(jnp.bfloat16)
        b2d = b.astype(jnp.float32).reshape(1, cout)
        entry = {"w": w2d, "b": b2d}
        r = 128 // cout
        if r > 1:
            wf, bf = _fold_conv_weight(w2d, b2d, r)
            entry["wf"] = wf
            entry["bf"] = bf
        return entry

    w_fc = params["w_fc"]
    fc_in, fc_out = w_fc.shape
    w_fc = w_fc.reshape(128, d3, h3, w3, fc_out)
    w_fc = jnp.transpose(w_fc, (1, 2, 3, 0, 4)).reshape(fc_in, fc_out)
    kpad = _round_up(fc_in, 128)
    npad = _round_up(fc_out, 128)
    w_fc = jnp.pad(w_fc.astype(jnp.bfloat16),
                   ((0, kpad - fc_in), (0, npad - fc_out)))
    b_fc = jnp.pad(params["b_fc"].astype(jnp.float32),
                   ((0, npad - fc_out),)).reshape(1, npad)

    return {
        "c1": conv_entry(params["w1"], params["b1"]),
        "c2": conv_entry(params["w2"], params["b2"]),
        "c3": conv_entry(params["w3"], params["b3"]),
        "fc_w": w_fc, "fc_b": b_fc,
    }


# ----------------------------------------------------------------------------
# Pure-JAX (XLA) references — same bf16-stored weight values, f32 HIGHEST math.
# ----------------------------------------------------------------------------
def _ref_conv(x_ncdhw, w_oidhw, b):
    w = w_oidhw.astype(jnp.bfloat16).astype(jnp.float32)
    y = jax.lax.conv_general_dilated(
        x_ncdhw, w, window_strides=(2, 2, 2), padding=[(1, 1)] * 3,
        dimension_numbers=("NCDHW", "OIDHW", "NCDHW"),
        precision=jax.lax.Precision.HIGHEST,
    )
    return jax.nn.relu(y + b.reshape(1, -1, 1, 1, 1))


def _reference_forward(x_ncdhw, params):
    y = _ref_conv(x_ncdhw, params["w1"], params["b1"])
    y = _ref_conv(y, params["w2"], params["b2"])
    y = _ref_conv(y, params["w3"], params["b3"])
    y = y.reshape(y.shape[0], -1)                         # (C, D, H, W) flatten
    w = params["w_fc"].astype(jnp.bfloat16).astype(jnp.float32)
    return (jnp.dot(y, w, precision=jax.lax.Precision.HIGHEST)
            + params["b_fc"])


if __name__ == "__main__":
    key = jax.random.PRNGKey(0)
    kx, kp_key, kg, kxo = jax.random.split(key, 4)

    # --- Encoder smoke test (small shapes consistent with the module) -------
    x = jax.random.normal(kx, (2, 1, 16, 16, 16), jnp.float32)
    conv3_dhw = (2, 2, 2)          # 16 -> 8 -> 4 -> 2 through three s=2 convs

    params = init_params(kp_key, conv3_dhw, fc_out=512)
    kparams = prepare_params(params, conv3_dhw)

    fwd = jax.jit(functools.partial(encoder_forward, fc_n=512))
    y = jax.block_until_ready(fwd(x, kparams))
    assert y.shape == (2, 512) and y.dtype == jnp.float32

    y_ref = jax.block_until_ready(_reference_forward(x, params))
    assert jnp.allclose(y, y_ref, rtol=2e-2, atol=2e-2), float(
        jnp.max(jnp.abs(y - y_ref)))

    # --- fc-style GEMM with multiple K steps (tk=8448, tn=256, 2 N tiles) ---
    km, kk, kn = 16, 2 * _TK_CAP, 512
    gx = jax.random.normal(kg, (km, kk), jnp.float32)
    gw = jax.random.normal(jax.random.fold_in(kg, 1), (kk, kn),
                           jnp.float32) / jnp.sqrt(float(kk))
    gb = jax.random.normal(jax.random.fold_in(kg, 2), (kn,), jnp.float32)
    gw_b = gw.astype(jnp.bfloat16)
    gy = jax.block_until_ready(
        matmul_bias(gx.astype(jnp.bfloat16), gw_b, gb.reshape(1, kn),
                    n_logical=kn, relu=False, out_dtype=jnp.float32))
    gy_ref = jnp.dot(gx.astype(jnp.bfloat16).astype(jnp.float32),
                     gw_b.astype(jnp.float32),
                     precision=jax.lax.Precision.HIGHEST) + gb
    assert jnp.allclose(gy, gy_ref, rtol=2e-2, atol=2e-2), float(
        jnp.max(jnp.abs(gy - gy_ref)))

    # --- Odd spatial size: exercises the non-folded (native-width) conv path
    xo = jax.random.normal(kxo, (1, 1, 6, 6, 6), jnp.float32)
    yo = jax.block_until_ready(
        conv3d_relu(jnp.transpose(xo, (0, 2, 3, 4, 1)).astype(jnp.bfloat16),
                    kparams["c1"]))
    yo_ref = jnp.transpose(_ref_conv(xo, params["w1"], params["b1"]),
                           (0, 2, 3, 4, 1))
    assert jnp.allclose(yo.astype(jnp.float32), yo_ref, rtol=2e-2, atol=2e-2)

    print("KERNEL_OK")
</pallas_src>

<mosaic_0001>
module attributes {stable_mosaic.version = 11 : i64} {
  func.func @_matmul_bias_kernel(%arg0: i32, %arg1: i32, %arg2: i32, %arg3: memref<256x108xbf16, #tpu.memory_space<vmem>>, %arg4: memref<108x128xbf16, #tpu.memory_space<vmem>>, %arg5: memref<1x128xf32, #tpu.memory_space<vmem>>, %arg6: memref<256x128xbf16, #tpu.memory_space<vmem>>, %arg7: memref<256x128xf32, #tpu.memory_space<vmem>>) attributes {dimension_semantics = [#tpu.dimension_semantics<parallel>, #tpu.dimension_semantics<parallel>, #tpu.dimension_semantics<arbitrary>], iteration_bounds = array<i64: 1, 1, 1>, scalar_prefetch = 0 : i64, scratch_operands = 1 : i64, tpu.core_type = #tpu.core_type<tc>, window_params = [{transform_indices = @transform_0, window_bounds = array<i64: 256, 108>}, {transform_indices = @transform_1, window_bounds = array<i64: 108, 128>}, {transform_indices = @transform_2, window_bounds = array<i64: 1, 128>}, {transform_indices = @transform_3, window_bounds = array<i64: 256, 128>}]} {
    %c0_i32 = arith.constant 0 : i32
    %0 = arith.cmpi eq, %arg2, %c0_i32 : i32
    %1 = arith.extui %0 : i1 to i32
    %c0_i32_0 = arith.constant 0 : i32
    %2 = arith.cmpi ne, %1, %c0_i32_0 : i32
    scf.if %2 {
      %cst_10 = arith.constant 0.000000e+00 : f32
      %12 = vector.broadcast %cst_10 : f32 to vector<256x128xf32>
      %c0_11 = arith.constant 0 : index
      %c0_12 = arith.constant 0 : index
      %13 = vector.load %arg7[%c0_11, %c0_12] : memref<256x128xf32, #tpu.memory_space<vmem>>, vector<256x128xf32>
      tpu.vector_store %arg7[%c0_11, %c0_12], %12 {strides = array<i32>} : memref<256x128xf32, #tpu.memory_space<vmem>>, vector<256x128xf32>,
    } else {
    }
    %c0 = arith.constant 0 : index
    %c0_1 = arith.constant 0 : index
    %3 = vector.load %arg7[%c0, %c0_1] : memref<256x128xf32, #tpu.memory_space<vmem>>, vector<256x128xf32>
    %c0_2 = arith.constant 0 : index
    %c0_3 = arith.constant 0 : index
    %4 = vector.load %arg3[%c0_2, %c0_3] : memref<256x108xbf16, #tpu.memory_space<vmem>>, vector<256x108xbf16>
    %c0_4 = arith.constant 0 : index
    %c0_5 = arith.constant 0 : index
    %5 = vector.load %arg4[%c0_4, %c0_5] : memref<108x128xbf16, #tpu.memory_space<vmem>>, vector<108x128xbf16>
    %cst = arith.constant dense<0.000000e+00> : vector<256x128xf32>
    %6 = tpu.matmul %4, %5, %cst {dimension_numbers = #tpu.dot_dimension_numbers<[1], [0], [0], [1], [0, 0, 1, 1], [], []>} : vector<256x108xbf16>, vector<108x128xbf16>, vector<256x128xf32> -> vector<256x128xf32>
    %7 = arith.addf %3, %6 : vector<256x128xf32>
    %c0_6 = arith.constant 0 : index
    %c0_7 = arith.constant 0 : index
    %8 = vector.load %arg7[%c0_6, %c0_7] : memref<256x128xf32, #tpu.memory_space<vmem>>, vector<256x128xf32>
    tpu.vector_store %arg7[%c0_6, %c0_7], %7 {strides = array<i32>} : memref<256x128xf32, #tpu.memory_space<vmem>>, vector<256x128xf32>,
    %c0_i32_8 = arith.constant 0 : i32
    %9 = arith.cmpi eq, %arg2, %c0_i32_8 : i32
    %10 = arith.extui %9 : i1 to i32
    %c0_i32_9 = arith.constant 0 : i32
    %11 = arith.cmpi ne, %10, %c0_i32_9 : i32
    scf.if %11 {
      %c0_10 = arith.constant 0 : index
      %c0_11 = arith.constant 0 : index
      %12 = vector.load %arg7[%c0_10, %c0_11] : memref<256x128xf32, #tpu.memory_space<vmem>>, vector<256x128xf32>
      %c0_12 = arith.constant 0 : index
      %c0_13 = arith.constant 0 : index
      %13 = vector.load %arg5[%c0_12, %c0_13] : memref<1x128xf32, #tpu.memory_space<vmem>>, vector<1x128xf32>
      %14 = vector.broadcast %13 : vector<1x128xf32> to vector<256x128xf32>
      %15 = arith.addf %12, %14 : vector<256x128xf32>
      %cst_14 = arith.constant 0.000000e+00 : f32
      %16 = vector.broadcast %cst_14 : f32 to vector<256x128xf32>
      %17 = arith.maximumf %15, %16 : vector<256x128xf32>
      %18 = arith.truncf %17 : vector<256x128xf32> to vector<256x128xbf16>
      %c0_15 = arith.constant 0 : index
      %c0_16 = arith.constant 0 : index
      %19 = vector.load %arg6[%c0_15, %c0_16] : memref<256x128xbf16, #tpu.memory_space<vmem>>, vector<256x128xbf16>
      tpu.vector_store %arg6[%c0_15, %c0_16], %18 {strides = array<i32>} : memref<256x128xbf16, #tpu.memory_space<vmem>>, vector<256x128xbf16>,
    } else {
    }
    return
  }
  func.func @transform_0(%arg0: i32, %arg1: i32, %arg2: i32) -> (i32, i32) {
    %c0_i32 = arith.constant 0 : i32
    return %arg0, %arg2 : i32, i32
  }
  func.func @transform_1(%arg0: i32, %arg1: i32, %arg2: i32) -> (i32, i32) {
    %c0_i32 = arith.constant 0 : i32
    return %arg2, %arg1 : i32, i32
  }
  func.func @transform_2(%arg0: i32, %arg1: i32, %arg2: i32) -> (i32, i32) {
    %c0_i32 = arith.constant 0 : i32
    %c0_i32_0 = arith.constant 0 : i32
    return %c0_i32, %arg1 : i32, i32
  }
  func.func @transform_3(%arg0: i32, %arg1: i32, %arg2: i32) -> (i32, i32) {
    %c0_i32 = arith.constant 0 : i32
    return %arg0, %arg1 : i32, i32
  }
}

module attributes {stable_mosaic.version = 11 : i64} {
  func.func @_matmul_bias_kernel(%arg0: i32, %arg1: i32, %arg2: i32, %arg3: memref<64x1728xbf16, #tpu.memory_space<vmem>>, %arg4: memref<1728x128xbf16, #tpu.memory_space<vmem>>, %arg5: memref<1x128xf32, #tpu.memory_space<vmem>>, %arg6: memref<64x128xbf16, #tpu.memory_space<vmem>>, %arg7: memref<64x128xf32, #tpu.memory_space<vmem>>) attributes {dimension_semantics = [#tpu.dimension_semantics<parallel>, #tpu.dimension_semantics<parallel>, #tpu.dimension_semantics<arbitrary>], iteration_bounds = array<i64: 1, 1, 1>, scalar_prefetch = 0 : i64, scratch_operands = 1 : i64, tpu.core_type = #tpu.core_type<tc>, window_params = [{transform_indices = @transform_0, window_bounds = array<i64: 64, 1728>}, {transform_indices = @transform_1, window_bounds = array<i64: 1728, 128>}, {transform_indices = @transform_2, window_bounds = array<i64: 1, 128>}, {transform_indices = @transform_3, window_bounds = array<i64: 64, 128>}]} {
    %c0_i32 = arith.constant 0 : i32
    %0 = arith.cmpi eq, %arg2, %c0_i32 : i32
    %1 = arith.extui %0 : i1 to i32
    %c0_i32_0 = arith.constant 0 : i32
    %2 = arith.cmpi ne, %1, %c0_i32_0 : i32
    scf.if %2 {
      %cst_10 = arith.constant 0.000000e+00 : f32
      %12 = vector.broadcast %cst_10 : f32 to vector<64x128xf32>
      %c0_11 = arith.constant 0 : index
      %c0_12 = arith.constant 0 : index
      %13 = vector.load %arg7[%c0_11, %c0_12] : memref<64x128xf32, #tpu.memory_space<vmem>>, vector<64x128xf32>
      tpu.vector_store %arg7[%c0_11, %c0_12], %12 {strides = array<i32>} : memref<64x128xf32, #tpu.memory_space<vmem>>, vector<64x128xf32>,
    } else {
    }
    %c0 = arith.constant 0 : index
    %c0_1 = arith.constant 0 : index
    %3 = vector.load %arg7[%c0, %c0_1] : memref<64x128xf32, #tpu.memory_space<vmem>>, vector<64x128xf32>
    %c0_2 = arith.constant 0 : index
    %c0_3 = arith.constant 0 : index
    %4 = vector.load %arg3[%c0_2, %c0_3] : memref<64x1728xbf16, #tpu.memory_space<vmem>>, vector<64x1728xbf16>
    %c0_4 = arith.constant 0 : index
    %c0_5 = arith.constant 0 : index
    %5 = vector.load %arg4[%c0_4, %c0_5] : memref<1728x128xbf16, #tpu.memory_space<vmem>>, vector<1728x128xbf16>
    %cst = arith.constant dense<0.000000e+00> : vector<64x128xf32>
    %6 = tpu.matmul %4, %5, %cst {dimension_numbers = #tpu.dot_dimension_numbers<[1], [0], [0], [1], [0, 0, 1, 1], [], []>} : vector<64x1728xbf16>, vector<1728x128xbf16>, vector<64x128xf32> -> vector<64x128xf32>
    %7 = arith.addf %3, %6 : vector<64x128xf32>
    %c0_6 = arith.constant 0 : index
    %c0_7 = arith.constant 0 : index
    %8 = vector.load %arg7[%c0_6, %c0_7] : memref<64x128xf32, #tpu.memory_space<vmem>>, vector<64x128xf32>
    tpu.vector_store %arg7[%c0_6, %c0_7], %7 {strides = array<i32>} : memref<64x128xf32, #tpu.memory_space<vmem>>, vector<64x128xf32>,
    %c0_i32_8 = arith.constant 0 : i32
    %9 = arith.cmpi eq, %arg2, %c0_i32_8 : i32
    %10 = arith.extui %9 : i1 to i32
    %c0_i32_9 = arith.constant 0 : i32
    %11 = arith.cmpi ne, %10, %c0_i32_9 : i32
    scf.if %11 {
      %c0_10 = arith.constant 0 : index
      %c0_11 = arith.constant 0 : index
      %12 = vector.load %arg7[%c0_10, %c0_11] : memref<64x128xf32, #tpu.memory_space<vmem>>, vector<64x128xf32>
      %c0_12 = arith.constant 0 : index
      %c0_13 = arith.constant 0 : index
      %13 = vector.load %arg5[%c0_12, %c0_13] : memref<1x128xf32, #tpu.memory_space<vmem>>, vector<1x128xf32>
      %14 = vector.broadcast %13 : vector<1x128xf32> to vector<64x128xf32>
      %15 = arith.addf %12, %14 : vector<64x128xf32>
      %cst_14 = arith.constant 0.000000e+00 : f32
      %16 = vector.broadcast %cst_14 : f32 to vector<64x128xf32>
      %17 = arith.maximumf %15, %16 : vector<64x128xf32>
      %18 = arith.truncf %17 : vector<64x128xf32> to vector<64x128xbf16>
      %c0_15 = arith.constant 0 : index
      %c0_16 = arith.constant 0 : index
      %19 = vector.load %arg6[%c0_15, %c0_16] : memref<64x128xbf16, #tpu.memory_space<vmem>>, vector<64x128xbf16>
      tpu.vector_store %arg6[%c0_15, %c0_16], %18 {strides = array<i32>} : memref<64x128xbf16, #tpu.memory_space<vmem>>, vector<64x128xbf16>,
    } else {
    }
    return
  }
  func.func @transform_0(%arg0: i32, %arg1: i32, %arg2: i32) -> (i32, i32) {
    %c0_i32 = arith.constant 0 : i32
    return %arg0, %arg2 : i32, i32
  }
  func.func @transform_1(%arg0: i32, %arg1: i32, %arg2: i32) -> (i32, i32) {
    %c0_i32 = arith.constant 0 : i32
    return %arg2, %arg1 : i32, i32
  }
  func.func @transform_2(%arg0: i32, %arg1: i32, %arg2: i32) -> (i32, i32) {
    %c0_i32 = arith.constant 0 : i32
    %c0_i32_0 = arith.constant 0 : i32
    return %c0_i32, %arg1 : i32, i32
  }
  func.func @transform_3(%arg0: i32, %arg1: i32, %arg2: i32) -> (i32, i32) {
    %c0_i32 = arith.constant 0 : i32
    return %arg0, %arg1 : i32, i32
  }
}

module attributes {stable_mosaic.version = 11 : i64} {
  func.func @_matmul_bias_kernel(%arg0: i32, %arg1: i32, %arg2: i32, %arg3: memref<16x1728xbf16, #tpu.memory_space<vmem>>, %arg4: memref<1728x128xbf16, #tpu.memory_space<vmem>>, %arg5: memref<1x128xf32, #tpu.memory_space<vmem>>, %arg6: memref<16x128xbf16, #tpu.memory_space<vmem>>, %arg7: memref<16x128xf32, #tpu.memory_space<vmem>>) attributes {dimension_semantics = [#tpu.dimension_semantics<parallel>, #tpu.dimension_semantics<parallel>, #tpu.dimension_semantics<arbitrary>], iteration_bounds = array<i64: 1, 1, 1>, scalar_prefetch = 0 : i64, scratch_operands = 1 : i64, tpu.core_type = #tpu.core_type<tc>, window_params = [{transform_indices = @transform_0, window_bounds = array<i64: 16, 1728>}, {transform_indices = @transform_1, window_bounds = array<i64: 1728, 128>}, {transform_indices = @transform_2, window_bounds = array<i64: 1, 128>}, {transform_indices = @transform_3, window_bounds = array<i64: 16, 128>}]} {
    %c0_i32 = arith.constant 0 : i32
    %0 = arith.cmpi eq, %arg2, %c0_i32 : i32
    %1 = arith.extui %0 : i1 to i32
    %c0_i32_0 = arith.constant 0 : i32
    %2 = arith.cmpi ne, %1, %c0_i32_0 : i32
    scf.if %2 {
      %cst_10 = arith.constant 0.000000e+00 : f32
      %12 = vector.broadcast %cst_10 : f32 to vector<16x128xf32>
      %c0_11 = arith.constant 0 : index
      %c0_12 = arith.constant 0 : index
      %13 = vector.load %arg7[%c0_11, %c0_12] : memref<16x128xf32, #tpu.memory_space<vmem>>, vector<16x128xf32>
      tpu.vector_store %arg7[%c0_11, %c0_12], %12 {strides = array<i32>} : memref<16x128xf32, #tpu.memory_space<vmem>>, vector<16x128xf32>,
    } else {
    }
    %c0 = arith.constant 0 : index
    %c0_1 = arith.constant 0 : index
    %3 = vector.load %arg7[%c0, %c0_1] : memref<16x128xf32, #tpu.memory_space<vmem>>, vector<16x128xf32>
    %c0_2 = arith.constant 0 : index
    %c0_3 = arith.constant 0 : index
    %4 = vector.load %arg3[%c0_2, %c0_3] : memref<16x1728xbf16, #tpu.memory_space<vmem>>, vector<16x1728xbf16>
    %c0_4 = arith.constant 0 : index
    %c0_5 = arith.constant 0 : index
    %5 = vector.load %arg4[%c0_4, %c0_5] : memref<1728x128xbf16, #tpu.memory_space<vmem>>, vector<1728x128xbf16>
    %cst = arith.constant dense<0.000000e+00> : vector<16x128xf32>
    %6 = tpu.matmul %4, %5, %cst {dimension_numbers = #tpu.dot_dimension_numbers<[1], [0], [0], [1], [0, 0, 1, 1], [], []>} : vector<16x1728xbf16>, vector<1728x128xbf16>, vector<16x128xf32> -> vector<16x128xf32>
    %7 = arith.addf %3, %6 : vector<16x128xf32>
    %c0_6 = arith.constant 0 : index
    %c0_7 = arith.constant 0 : index
    %8 = vector.load %arg7[%c0_6, %c0_7] : memref<16x128xf32, #tpu.memory_space<vmem>>, vector<16x128xf32>
    tpu.vector_store %arg7[%c0_6, %c0_7], %7 {strides = array<i32>} : memref<16x128xf32, #tpu.memory_space<vmem>>, vector<16x128xf32>,
    %c0_i32_8 = arith.constant 0 : i32
    %9 = arith.cmpi eq, %arg2, %c0_i32_8 : i32
    %10 = arith.extui %9 : i1 to i32
    %c0_i32_9 = arith.constant 0 : i32
    %11 = arith.cmpi ne, %10, %c0_i32_9 : i32
    scf.if %11 {
      %c0_10 = arith.constant 0 : index
      %c0_11 = arith.constant 0 : index
      %12 = vector.load %arg7[%c0_10, %c0_11] : memref<16x128xf32, #tpu.memory_space<vmem>>, vector<16x128xf32>
      %c0_12 = arith.constant 0 : index
      %c0_13 = arith.constant 0 : index
      %13 = vector.load %arg5[%c0_12, %c0_13] : memref<1x128xf32, #tpu.memory_space<vmem>>, vector<1x128xf32>
      %14 = vector.broadcast %13 : vector<1x128xf32> to vector<16x128xf32>
      %15 = arith.addf %12, %14 : vector<16x128xf32>
      %cst_14 = arith.constant 0.000000e+00 : f32
      %16 = vector.broadcast %cst_14 : f32 to vector<16x128xf32>
      %17 = arith.maximumf %15, %16 : vector<16x128xf32>
      %18 = arith.truncf %17 : vector<16x128xf32> to vector<16x128xbf16>
      %c0_15 = arith.constant 0 : index
      %c0_16 = arith.constant 0 : index
      %19 = vector.load %arg6[%c0_15, %c0_16] : memref<16x128xbf16, #tpu.memory_space<vmem>>, vector<16x128xbf16>
      tpu.vector_store %arg6[%c0_15, %c0_16], %18 {strides = array<i32>} : memref<16x128xbf16, #tpu.memory_space<vmem>>, vector<16x128xbf16>,
    } else {
    }
    return
  }
  func.func @transform_0(%arg0: i32, %arg1: i32, %arg2: i32) -> (i32, i32) {
    %c0_i32 = arith.constant 0 : i32
    return %arg0, %arg2 : i32, i32
  }
  func.func @transform_1(%arg0: i32, %arg1: i32, %arg2: i32) -> (i32, i32) {
    %c0_i32 = arith.constant 0 : i32
    return %arg2, %arg1 : i32, i32
  }
  func.func @transform_2(%arg0: i32, %arg1: i32, %arg2: i32) -> (i32, i32) {
    %c0_i32 = arith.constant 0 : i32
    %c0_i32_0 = arith.constant 0 : i32
    return %c0_i32, %arg1 : i32, i32
  }
  func.func @transform_3(%arg0: i32, %arg1: i32, %arg2: i32) -> (i32, i32) {
    %c0_i32 = arith.constant 0 : i32
    return %arg0, %arg1 : i32, i32
  }
}

module attributes {stable_mosaic.version = 11 : i64} {
  func.func @_matmul_bias_kernel(%arg0: i32, %arg1: i32, %arg2: i32, %arg3: memref<2x1024xbf16, #tpu.memory_space<vmem>>, %arg4: memref<1024x256xbf16, #tpu.memory_space<vmem>>, %arg5: memref<1x256xf32, #tpu.memory_space<vmem>>, %arg6: memref<2x256xf32, #tpu.memory_space<vmem>>, %arg7: memref<2x256xf32, #tpu.memory_space<vmem>>) attributes {dimension_semantics = [#tpu.dimension_semantics<parallel>, #tpu.dimension_semantics<parallel>, #tpu.dimension_semantics<arbitrary>], iteration_bounds = array<i64: 1, 2, 1>, scalar_prefetch = 0 : i64, scratch_operands = 1 : i64, tpu.core_type = #tpu.core_type<tc>, window_params = [{transform_indices = @transform_0, window_bounds = array<i64: 2, 1024>}, {transform_indices = @transform_1, window_bounds = array<i64: 1024, 256>}, {transform_indices = @transform_2, window_bounds = array<i64: 1, 256>}, {transform_indices = @transform_3, window_bounds = array<i64: 2, 256>}]} {
    %c0_i32 = arith.constant 0 : i32
    %0 = arith.cmpi eq, %arg2, %c0_i32 : i32
    %1 = arith.extui %0 : i1 to i32
    %c0_i32_0 = arith.constant 0 : i32
    %2 = arith.cmpi ne, %1, %c0_i32_0 : i32
    scf.if %2 {
      %cst_10 = arith.constant 0.000000e+00 : f32
      %12 = vector.broadcast %cst_10 : f32 to vector<2x256xf32>
      %c0_11 = arith.constant 0 : index
      %c0_12 = arith.constant 0 : index
      %13 = vector.load %arg7[%c0_11, %c0_12] : memref<2x256xf32, #tpu.memory_space<vmem>>, vector<2x256xf32>
      tpu.vector_store %arg7[%c0_11, %c0_12], %12 {strides = array<i32>} : memref<2x256xf32, #tpu.memory_space<vmem>>, vector<2x256xf32>,
    } else {
    }
    %c0 = arith.constant 0 : index
    %c0_1 = arith.constant 0 : index
    %3 = vector.load %arg7[%c0, %c0_1] : memref<2x256xf32, #tpu.memory_space<vmem>>, vector<2x256xf32>
    %c0_2 = arith.constant 0 : index
    %c0_3 = arith.constant 0 : index
    %4 = vector.load %arg3[%c0_2, %c0_3] : memref<2x1024xbf16, #tpu.memory_space<vmem>>, vector<2x1024xbf16>
    %c0_4 = arith.constant 0 : index
    %c0_5 = arith.constant 0 : index
    %5 = vector.load %arg4[%c0_4, %c0_5] : memref<1024x256xbf16, #tpu.memory_space<vmem>>, vector<1024x256xbf16>
    %cst = arith.constant dense<0.000000e+00> : vector<2x256xf32>
    %6 = tpu.matmul %4, %5, %cst {dimension_numbers = #tpu.dot_dimension_numbers<[1], [0], [0], [1], [0, 0, 1, 1], [], []>} : vector<2x1024xbf16>, vector<1024x256xbf16>, vector<2x256xf32> -> vector<2x256xf32>
    %7 = arith.addf %3, %6 : vector<2x256xf32>
    %c0_6 = arith.constant 0 : index
    %c0_7 = arith.constant 0 : index
    %8 = vector.load %arg7[%c0_6, %c0_7] : memref<2x256xf32, #tpu.memory_space<vmem>>, vector<2x256xf32>
    tpu.vector_store %arg7[%c0_6, %c0_7], %7 {strides = array<i32>} : memref<2x256xf32, #tpu.memory_space<vmem>>, vector<2x256xf32>,
    %c0_i32_8 = arith.constant 0 : i32
    %9 = arith.cmpi eq, %arg2, %c0_i32_8 : i32
    %10 = arith.extui %9 : i1 to i32
    %c0_i32_9 = arith.constant 0 : i32
    %11 = arith.cmpi ne, %10, %c0_i32_9 : i32
    scf.if %11 {
      %c0_10 = arith.constant 0 : index
      %c0_11 = arith.constant 0 : index
      %12 = vector.load %arg7[%c0_10, %c0_11] : memref<2x256xf32, #tpu.memory_space<vmem>>, vector<2x256xf32>
      %c0_12 = arith.constant 0 : index
      %c0_13 = arith.constant 0 : index
      %13 = vector.load %arg5[%c0_12, %c0_13] : memref<1x256xf32, #tpu.memory_space<vmem>>, vector<1x256xf32>
      %14 = vector.broadcast %13 : vector<1x256xf32> to vector<2x256xf32>
      %15 = arith.addf %12, %14 : vector<2x256xf32>
      %c0_14 = arith.constant 0 : index
      %c0_15 = arith.constant 0 : index
      %16 = vector.load %arg6[%c0_14, %c0_15] : memref<2x256xf32, #tpu.memory_space<vmem>>, vector<2x256xf32>
      tpu.vector_store %arg6[%c0_14, %c0_15], %15 {strides = array<i32>} : memref<2x256xf32, #tpu.memory_space<vmem>>, vector<2x256xf32>,
    } else {
    }
    return
  }
  func.func @transform_0(%arg0: i32, %arg1: i32, %arg2: i32) -> (i32, i32) {
    %c0_i32 = arith.constant 0 : i32
    return %arg0, %arg2 : i32, i32
  }
  func.func @transform_1(%arg0: i32, %arg1: i32, %arg2: i32) -> (i32, i32) {
    %c0_i32 = arith.constant 0 : i32
    return %arg2, %arg1 : i32, i32
  }
  func.func @transform_2(%arg0: i32, %arg1: i32, %arg2: i32) -> (i32, i32) {
    %c0_i32 = arith.constant 0 : i32
    %c0_i32_0 = arith.constant 0 : i32
    return %c0_i32, %arg1 : i32, i32
  }
  func.func @transform_3(%arg0: i32, %arg1: i32, %arg2: i32) -> (i32, i32) {
    %c0_i32 = arith.constant 0 : i32
    return %arg0, %arg1 : i32, i32
  }
}

</mosaic_0001>

<llo_original>
// kernel: encoder_forward.4
$region0: #{encoder_forward.4}
  #allocation0 [shape = 'u32[]', space=smem, size = 0x4, offset = 0x4, fixed_abs, tag = 'smem constant byte address 0x4 - core index']
  #allocation1 [shape = 'u32[144,128]{1,0:T(1,128)}', space=vmem, size = 0x12000, scoped, tag = 'internal scratch']
  #allocation2 [shape = 'f32[256,128]{1,0:T(8,128)}', space=vmem, size = 0x20000, scoped, tag = 'scratch operand']
  %s0 = inlined_call_operand.vmem [shape: bf16[256,108], index: 0, kind: input, shape index: {}]
  %s1 = inlined_call_operand.vmem [shape: bf16[108,128], index: 1, kind: input, shape index: {}]
  %s2 = inlined_call_operand.vmem [shape: f32[1,128], index: 2, kind: input, shape index: {}]
  %s3 = inlined_call_operand.vmem [shape: bf16[256,128], index: 3, kind: output, shape index: {}]
  %s4 = sld [smem:[#allocation0]]
  $region30: #{encoder_forward.4} parent=0
    _
  %s6 = ssub.s32 1, %s4
  %s7 = scalar_select 0, %s6, %s4
  // Predicated region
  $region2: #{encoder_forward.4} parent=0 // pred_check
    _
  $region3: #{encoder_forward.4} parent=0 // pred_check_branch
    %9 = sbr.rel (0) target = $region5
  $region4: #{encoder_forward.4} parent=0 // pred_region
    _
  $region5: #{encoder_forward.4} parent=0 // pred_fallthru
    _
  // Predicated region
  $region6: #{encoder_forward.4} parent=0 // pred_check
    _
  $region7: #{encoder_forward.4} parent=0 // pred_check_branch
    %11 = sbr.rel (0) target = $region9
  $region8: #{encoder_forward.4} parent=0 // pred_region
    _
  $region9: #{encoder_forward.4} parent=0 // pred_fallthru
    _
  // Predicated region
  $region10: #{encoder_forward.4} parent=0 // pred_check
    _
  $region11: #{encoder_forward.4} parent=0 // pred_check_branch
    %13 = sbr.rel (0) target = $region13
  $region12: #{encoder_forward.4} parent=0 // pred_region
    _
  $region13: #{encoder_forward.4} parent=0 // pred_fallthru
    _
  %p15 = scmp.eq.s32.totalorder 0, 0
  // Predicated region
  $region14: #{encoder_forward.4} parent=0 // pred_check
    %p16 = pneg %p15
  $region15: #{encoder_forward.4} parent=0 // pred_check_branch
    %18 = sbr.rel (%p16) target = $region17
  $region16: #{encoder_forward.4} parent=0 // pred_region
    %19 = vst [vmem:[#allocation2] sm:$0xff] 0.0
    %20 = vst [vmem:[#allocation2 + $0x8] sm:$0xff] 0.0
    %21 = vst [vmem:[#allocation2 + $0x10] sm:$0xff] 0.0
    %22 = vst [vmem:[#allocation2 + $0x18] sm:$0xff] 0.0
    %23 = vst [vmem:[#allocation2 + $0x20] sm:$0xff] 0.0
    %24 = vst [vmem:[#allocation2 + $0x28] sm:$0xff] 0.0
    %25 = vst [vmem:[#allocation2 + $0x30] sm:$0xff] 0.0
    %26 = vst [vmem:[#allocation2 + $0x38] sm:$0xff] 0.0
    %27 = vst [vmem:[#allocation2 + $0x40] sm:$0xff] 0.0
    %28 = vst [vmem:[#allocation2 + $0x48] sm:$0xff] 0.0
    %29 = vst [vmem:[#allocation2 + $0x50] sm:$0xff] 0.0
    %30 = vst [vmem:[#allocation2 + $0x58] sm:$0xff] 0.0
    %31 = vst [vmem:[#allocation2 + $0x60] sm:$0xff] 0.0
    %32 = vst [vmem:[#allocation2 + $0x68] sm:$0xff] 0.0
    %33 = vst [vmem:[#allocation2 + $0x70] sm:$0xff] 0.0
    %34 = vst [vmem:[#allocation2 + $0x78] sm:$0xff] 0.0
    %35 = vst [vmem:[#allocation2 + $0x80] sm:$0xff] 0.0
    %36 = vst [vmem:[#allocation2 + $0x88] sm:$0xff] 0.0
    %37 = vst [vmem:[#allocation2 + $0x90] sm:$0xff] 0.0
    %38 = vst [vmem:[#allocation2 + $0x98] sm:$0xff] 0.0
    %39 = vst [vmem:[#allocation2 + $0xa0] sm:$0xff] 0.0
    %40 = vst [vmem:[#allocation2 + $0xa8] sm:$0xff] 0.0
    %41 = vst [vmem:[#allocation2 + $0xb0] sm:$0xff] 0.0
    %42 = vst [vmem:[#allocation2 + $0xb8] sm:$0xff] 0.0
    %43 = vst [vmem:[#allocation2 + $0xc0] sm:$0xff] 0.0
    %44 = vst [vmem:[#allocation2 + $0xc8] sm:$0xff] 0.0
    %45 = vst [vmem:[#allocation2 + $0xd0] sm:$0xff] 0.0
    %46 = vst [vmem:[#allocation2 + $0xd8] sm:$0xff] 0.0
    %47 = vst [vmem:[#allocation2 + $0xe0] sm:$0xff] 0.0
    %48 = vst [vmem:[#allocation2 + $0xe8] sm:$0xff] 0.0
    %49 = vst [vmem:[#allocation2 + $0xf0] sm:$0xff] 0.0
    %50 = vst [vmem:[#allocation2 + $0xf8] sm:$0xff] 0.0
  $region17: #{encoder_forward.4} parent=0 // pred_fallthru
    _
  %v51 = vld [vmem:[#allocation2] sm:$0xff]
  %v52 = vld [vmem:[#allocation2 + $0x8] sm:$0xff]
  %v53 = vld [vmem:[#allocation2 + $0x10] sm:$0xff]
  %v54 = vld [vmem:[#allocation2 + $0x18] sm:$0xff]
  %v55 = vld [vmem:[#allocation2 + $0x20] sm:$0xff]
  %v56 = vld [vmem:[#allocation2 + $0x28] sm:$0xff]
  %v57 = vld [vmem:[#allocation2 + $0x30] sm:$0xff]
  %v58 = vld [vmem:[#allocation2 + $0x38] sm:$0xff]
  %v59 = vld [vmem:[#allocation2 + $0x40] sm:$0xff]
  %v60 = vld [vmem:[#allocation2 + $0x48] sm:$0xff]
  %v61 = vld [vmem:[#allocation2 + $0x50] sm:$0xff]
  %v62 = vld [vmem:[#allocation2 + $0x58] sm:$0xff]
  %v63 = vld [vmem:[#allocation2 + $0x60] sm:$0xff]
  %v64 = vld [vmem:[#allocation2 + $0x68] sm:$0xff]
  %v65 = vld [vmem:[#allocation2 + $0x70] sm:$0xff]
  %v66 = vld [vmem:[#allocation2 + $0x78] sm:$0xff]
  %v67 = vld [vmem:[#allocation2 + $0x80] sm:$0xff]
  %v68 = vld [vmem:[#allocation2 + $0x88] sm:$0xff]
  %v69 = vld [vmem:[#allocation2 + $0x90] sm:$0xff]
  %v70 = vld [vmem:[#allocation2 + $0x98] sm:$0xff]
  %v71 = vld [vmem:[#allocation2 + $0xa0] sm:$0xff]
  %v72 = vld [vmem:[#allocation2 + $0xa8] sm:$0xff]
  %v73 = vld [vmem:[#allocation2 + $0xb0] sm:$0xff]
  %v74 = vld [vmem:[#allocation2 + $0xb8] sm:$0xff]
  %v75 = vld [vmem:[#allocation2 + $0xc0] sm:$0xff]
  %v76 = vld [vmem:[#allocation2 + $0xc8] sm:$0xff]
  %v77 = vld [vmem:[#allocation2 + $0xd0] sm:$0xff]
  %v78 = vld [vmem:[#allocation2 + $0xd8] sm:$0xff]
  %v79 = vld [vmem:[#allocation2 + $0xe0] sm:$0xff]
  %v80 = vld [vmem:[#allocation2 + $0xe8] sm:$0xff]
  %v81 = vld [vmem:[#allocation2 + $0xf0] sm:$0xff]
  %v82 = vld [vmem:[#allocation2 + $0xf8] sm:$0xff]
  %v83 = vld [vmem:[%s0] sm:$0xf]
  %v84 = vld [vmem:[%s0 + $0x4] sm:$0xf]
  %v85 = vld [vmem:[%s0 + $0x8] sm:$0xf]
  %v86 = vld [vmem:[%s0 + $0xc] sm:$0xf]
  %v87 = vld [vmem:[%s0 + $0x10] sm:$0xf]
  %v88 = vld [vmem:[%s0 + $0x14] sm:$0xf]
  %v89 = vld [vmem:[%s0 + $0x18] sm:$0xf]
  %v90 = vld [vmem:[%s0 + $0x1c] sm:$0xf]
  %v91 = vld [vmem:[%s0 + $0x20] sm:$0xf]
  %v92 = vld [vmem:[%s0 + $0x24] sm:$0xf]
  %v93 = vld [vmem:[%s0 + $0x28] sm:$0xf]
  %v94 = vld [vmem:[%s0 + $0x2c] sm:$0xf]
  %v95 = vld [vmem:[%s0 + $0x30] sm:$0xf]
  %v96 = vld [vmem:[%s0 + $0x34] sm:$0xf]
  %v97 = vld [vmem:[%s0 + $0x38] sm:$0xf]
  %v98 = vld [vmem:[%s0 + $0x3c] sm:$0xf]
  %v99 = vld [vmem:[%s0 + $0x40] sm:$0xf]
  %v100 = vld [vmem:[%s0 + $0x44] sm:$0xf]
  %v101 = vld [vmem:[%s0 + $0x48] sm:$0xf]
  %v102 = vld [vmem:[%s0 + $0x4c] sm:$0xf]
  %v103 = vld [vmem:[%s0 + $0x50] sm:$0xf]
  %v104 = vld [vmem:[%s0 + $0x54] sm:$0xf]
  %v105 = vld [vmem:[%s0 + $0x58] sm:$0xf]
  %v106 = vld [vmem:[%s0 + $0x5c] sm:$0xf]
  %v107 = vld [vmem:[%s0 + $0x60] sm:$0xf]
  %v108 = vld [vmem:[%s0 + $0x64] sm:$0xf]
  %v109 = vld [vmem:[%s0 + $0x68] sm:$0xf]
  %v110 = vld [vmem:[%s0 + $0x6c] sm:$0xf]
  %v111 = vld [vmem:[%s0 + $0x70] sm:$0xf]
  %v112 = vld [vmem:[%s0 + $0x74] sm:$0xf]
  %v113 = vld [vmem:[%s0 + $0x78] sm:$0xf]
  %v114 = vld [vmem:[%s0 + $0x7c] sm:$0xf]
  %v115 = vld [vmem:[%s1] sm:$0xf]
  %v116 = vld [vmem:[%s1 + $0x4] sm:$0xf]
  %v117 = vld [vmem:[%s1 + $0x8] sm:$0xf]
  %v118 = vld [vmem:[%s1 + $0xc] sm:$0xf]
  %v119 = vld [vmem:[%s1 + $0x10] sm:$0xf]
  %v120 = vld [vmem:[%s1 + $0x14] sm:$0xf]
  %v121 = vld [vmem:[%s1 + $0x18] sm:$0xf]
  %v122 = vld [vmem:[%s1 + $0x1c] sm:$0xf]
  %v123 = vld [vmem:[%s1 + $0x20] sm:$0xf]
  %v124 = vld [vmem:[%s1 + $0x24] sm:$0xf]
  %v125 = vld [vmem:[%s1 + $0x28] sm:$0xf]
  %v126 = vld [vmem:[%s1 + $0x2c] sm:$0xf]
  %v127 = vld [vmem:[%s1 + $0x30] sm:$0xf]
  %v128 = vld [vmem:[%s1 + $0x34] sm:$0x3]
  %v161 = vunpack.c.l.b16 %v83
  %v162 = vunpack.c.l.b16 %v84
  %v163 = vunpack.c.l.b16 %v85
  %v164 = vunpack.c.l.b16 %v86
  %v165 = vunpack.c.l.b16 %v87
  %v166 = vunpack.c.l.b16 %v88
  %v167 = vunpack.c.l.b16 %v89
  %v168 = vunpack.c.l.b16 %v90
  %v169 = vunpack.c.l.b16 %v91
  %v170 = vunpack.c.l.b16 %v92
  %v171 = vunpack.c.l.b16 %v93
  %v172 = vunpack.c.l.b16 %v94
  %v173 = vunpack.c.l.b16 %v95
  %v174 = vunpack.c.l.b16 %v96
  %v175 = vunpack.c.l.b16 %v97
  %v176 = vunpack.c.l.b16 %v98
  %v177 = vunpack.c.l.b16 %v99
  %v178 = vunpack.c.l.b16 %v100
  %v179 = vunpack.c.l.b16 %v101
  %v180 = vunpack.c.l.b16 %v102
  %v181 = vunpack.c.l.b16 %v103
  %v182 = vunpack.c.l.b16 %v104
  %v183 = vunpack.c.l.b16 %v105
  %v184 = vunpack.c.l.b16 %v106
  %v185 = vunpack.c.l.b16 %v107
  %v186 = vunpack.c.l.b16 %v108
  %v187 = vunpack.c.l.b16 %v109
  %v188 = vunpack.c.l.b16 %v110
  %v189 = vunpack.c.l.b16 %v111
  %v190 = vunpack.c.l.b16 %v112
  %v191 = vunpack.c.l.b16 %v113
  %v192 = vunpack.c.l.b16 %v114
  %v193 = vpack.c.b16 %v162, %v161
  %v194 = vpack.c.b16 %v164, %v163
  %v195 = vpack.c.b16 %v166, %v165
  %v196 = vpack.c.b16 %v168, %v167
  %v197 = vpack.c.b16 %v170, %v169
  %v198 = vpack.c.b16 %v172, %v171
  %v199 = vpack.c.b16 %v174, %v173
  %v200 = vpack.c.b16 %v176, %v175
  %v201 = vpack.c.b16 %v178, %v177
  %v202 = vpack.c.b16 %v180, %v179
  %v203 = vpack.c.b16 %v182, %v181
  %v204 = vpack.c.b16 %v184, %v183
  %v205 = vpack.c.b16 %v186, %v185
  %v206 = vpack.c.b16 %v188, %v187
  %v207 = vpack.c.b16 %v190, %v189
  %v208 = vpack.c.b16 %v192, %v191
  %v223 = vunpack.c.l.b16 %v115
  %v224 = vunpack.c.l.b16 %v116
  %v225 = vunpack.c.l.b16 %v117
  %v226 = vunpack.c.l.b16 %v118
  %v227 = vunpack.c.l.b16 %v119
  %v228 = vunpack.c.l.b16 %v120
  %v229 = vunpack.c.l.b16 %v121
  %v230 = vunpack.c.l.b16 %v122
  %v231 = vunpack.c.l.b16 %v123
  %v232 = vunpack.c.l.b16 %v124
  %v233 = vunpack.c.l.b16 %v125
  %v234 = vunpack.c.l.b16 %v126
  %v235 = vunpack.c.l.b16 %v127
  %v236 = vunpack.c.l.b16 %v128
  %v237 = vpack.c.b16 %v224, %v223
  %v238 = vpack.c.b16 %v226, %v225
  %v239 = vpack.c.b16 %v228, %v227
  %v240 = vpack.c.b16 %v230, %v229
  %v241 = vpack.c.b16 %v232, %v231
  %v242 = vpack.c.b16 %v234, %v233
  %v243 = vpack.c.b16 %v236, %v235
  %vm250 = vcmask 883712
  %v252 = vsel %vm250, %v193, 0
  %v255 = vsel %vm250, %v194, 0
  %v258 = vsel %vm250, %v195, 0
  %v261 = vsel %vm250, %v196, 0
  %v264 = vsel %vm250, %v197, 0
  %v267 = vsel %vm250, %v198, 0
  %v270 = vsel %vm250, %v199, 0
  %v273 = vsel %vm250, %v200, 0
  %v276 = vsel %vm250, %v201, 0
  %v279 = vsel %vm250, %v202, 0
  %v282 = vsel %vm250, %v203, 0
  %v285 = vsel %vm250, %v204, 0
  %v288 = vsel %vm250, %v205, 0
  %v291 = vsel %vm250, %v206, 0
  %v294 = vsel %vm250, %v207, 0
  %v297 = vsel %vm250, %v208, 0
  %vm299 = vcmask 1045504
  %v301 = vsel %vm299, %v243, 0
  %303 = vmatprep.subr.bf16.mxu0 0
  %304 = vmatpush1.bf16.msra.mxu0 0
  %305 = vmatprep.subr.bf16.mxu0 0
  %306 = vmatpush1.bf16.msra.mxu0 %v301
  %307 = vmatprep.subr.bf16.mxu0 0
  %308 = vmatpush1.bf16.msra.mxu0 %v242
  %309 = vmatprep.subr.bf16.mxu0 0
  %310 = vmatpush1.bf16.msra.mxu0 %v241
  %311 = vmatprep.subr.bf16.mxu0 0
  %312 = vmatpush1.bf16.msra.mxu0 %v240
  %313 = vmatprep.subr.bf16.mxu0 0
  %314 = vmatpush1.bf16.msra.mxu0 %v239
  %315 = vmatprep.subr.bf16.mxu0 0
  %316 = vmatpush1.bf16.msra.mxu0 %v238
  %317 = vmatprep.subr.bf16.mxu0 0
  %318 = vmatpush1.bf16.msra.mxu0 %v237
  %319 = vmatprep.subr.bf16.mxu0 0
  %320 = vmatpush2.bf16.msra.mxu0 0
  %321 = vmatprep.subr.bf16.mxu0 0
  %322 = vmatpush2.bf16.msra.mxu0 0
  %323 = vmatprep.subr.bf16.mxu0 0
  %324 = vmatpush2.bf16.msra.mxu0 0
  %325 = vmatprep.subr.bf16.mxu0 0
  %326 = vmatpush2.bf16.msra.mxu0 0
  %327 = vmatprep.subr.bf16.mxu0 0
  %328 = vmatpush2.bf16.msra.mxu0 0
  %329 = vmatprep.subr.bf16.mxu0 0
  %330 = vmatpush2.bf16.msra.mxu0 0
  %331 = vmatprep.subr.bf16.mxu0 0
  %332 = vmatpush2.bf16.msra.mxu0 0
  %333 = vmatprep.subr.bf16.mxu0 0
  %334 = vmatpush2.bf16.msra.mxu0 0
  %335 = vmatprep.mubr.bf16.mxu0 0
  %336 = vmatmul.mubr.bf16.gmra.mxu0 %v252
  %v337 = vpop.f32.mrf.mxu0
  %v338 = vadd.f32 0.0, %v337
  %v339 = vpop.f32.mrf.mxu0
  %v340 = vpop.f32.mrf.mxu0
  %v341 = vadd.f32 0.0, %v340
  %v342 = vpop.f32.mrf.mxu0
  %343 = vmatprep.mubr.bf16.mxu0 0
  %344 = vmatmul.mubr.bf16.gmra.mxu0 %v255
  %v345 = vpop.f32.mrf.mxu0
  %v346 = vadd.f32 0.0, %v345
  %v347 = vpop.f32.mrf.mxu0
  %v348 = vpop.f32.mrf.mxu0
  %v349 = vadd.f32 0.0, %v348
  %v350 = vpop.f32.mrf.mxu0
  %351 = vmatprep.mubr.bf16.mxu0 0
  %352 = vmatmul.mubr.bf16.gmra.mxu0 %v258
  %v353 = vpop.f32.mrf.mxu0
  %v354 = vadd.f32 0.0, %v353
  %v355 = vpop.f32.mrf.mxu0
  %v356 = vpop.f32.mrf.mxu0
  %v357 = vadd.f32 0.0, %v356
  %v358 = vpop.f32.mrf.mxu0
  %359 = vmatprep.mubr.bf16.mxu0 0
  %360 = vmatmul.mubr.bf16.gmra.mxu0 %v261
  %v361 = vpop.f32.mrf.mxu0
  %v362 = vadd.f32 0.0, %v361
  %v363 = vpop.f32.mrf.mxu0
  %v364 = vpop.f32.mrf.mxu0
  %v365 = vadd.f32 0.0, %v364
  %v366 = vpop.f32.mrf.mxu0
  %367 = vmatprep.mubr.bf16.mxu0 0
  %368 = vmatmul.mubr.bf16.gmra.mxu0 %v264
  %v369 = vpop.f32.mrf.mxu0
  %v370 = vadd.f32 0.0, %v369
  %v371 = vpop.f32.mrf.mxu0
  %v372 = vpop.f32.mrf.mxu0
  %v373 = vadd.f32 0.0, %v372
  %v374 = vpop.f32.mrf.mxu0
  %375 = vmatprep.mubr.bf16.mxu0 0
  %376 = vmatmul.mubr.bf16.gmra.mxu0 %v267
  %v377 = vpop.f32.mrf.mxu0
  %v378 = vadd.f32 0.0, %v377
  %v379 = vpop.f32.mrf.mxu0
  %v380 = vpop.f32.mrf.mxu0
  %v381 = vadd.f32 0.0, %v380
  %v382 = vpop.f32.mrf.mxu0
  %383 = vmatprep.mubr.bf16.mxu0 0
  %384 = vmatmul.mubr.bf16.gmra.mxu0 %v270
  %v385 = vpop.f32.mrf.mxu0
  %v386 = vadd.f32 0.0, %v385
  %v387 = vpop.f32.mrf.mxu0
  %v388 = vpop.f32.mrf.mxu0
  %v389 = vadd.f32 0.0, %v388
  %v390 = vpop.f32.mrf.mxu0
  %391 = vmatprep.mubr.bf16.mxu0 0
  %392 = vmatmul.mubr.bf16.gmra.mxu0 %v273
  %v393 = vpop.f32.mrf.mxu0
  %v394 = vadd.f32 0.0, %v393
  %v395 = vpop.f32.mrf.mxu0
  %v396 = vpop.f32.mrf.mxu0
  %v397 = vadd.f32 0.0, %v396
  %v398 = vpop.f32.mrf.mxu0
  %399 = vmatprep.mubr.bf16.mxu0 0
  %400 = vmatmul.mubr.bf16.gmra.mxu0 %v276
  %v401 = vpop.f32.mrf.mxu0
  %v402 = vadd.f32 0.0, %v401
  %v403 = vpop.f32.mrf.mxu0
  %v404 = vpop.f32.mrf.mxu0
  %v405 = vadd.f32 0.0, %v404
  %v406 = vpop.f32.mrf.mxu0
  %407 = vmatprep.mubr.bf16.mxu0 0
  %408 = vmatmul.mubr.bf16.gmra.mxu0 %v279
  %v409 = vpop.f32.mrf.mxu0
  %v410 = vadd.f32 0.0, %v409
  %v411 = vpop.f32.mrf.mxu0
  %v412 = vpop.f32.mrf.mxu0
  %v413 = vadd.f32 0.0, %v412
  %v414 = vpop.f32.mrf.mxu0
  %415 = vmatprep.mubr.bf16.mxu0 0
  %416 = vmatmul.mubr.bf16.gmra.mxu0 %v282
  %v417 = vpop.f32.mrf.mxu0
  %v418 = vadd.f32 0.0, %v417
  %v419 = vpop.f32.mrf.mxu0
  %v420 = vpop.f32.mrf.mxu0
  %v421 = vadd.f32 0.0, %v420
  %v422 = vpop.f32.mrf.mxu0
  %423 = vmatprep.mubr.bf16.mxu0 0
  %424 = vmatmul.mubr.bf16.gmra.mxu0 %v285
  %v425 = vpop.f32.mrf.mxu0
  %v426 = vadd.f32 0.0, %v425
  %v427 = vpop.f32.mrf.mxu0
  %v428 = vpop.f32.mrf.mxu0
  %v429 = vadd.f32 0.0, %v428
  %v430 = vpop.f32.mrf.mxu0
  %431 = vmatprep.mubr.bf16.mxu0 0
  %432 = vmatmul.mubr.bf16.gmra.mxu0 %v288
  %v433 = vpop.f32.mrf.mxu0
  %v434 = vadd.f32 0.0, %v433
  %v435 = vpop.f32.mrf.mxu0
  %v436 = vpop.f32.mrf.mxu0
  %v437 = vadd.f32 0.0, %v436
  %v438 = vpop.f32.mrf.mxu0
  %439 = vmatprep.mubr.bf16.mxu0 0
  %440 = vmatmul.mubr.bf16.gmra.mxu0 %v291
  %v441 = vpop.f32.mrf.mxu0
  %v442 = vadd.f32 0.0, %v441
  %v443 = vpop.f32.mrf.mxu0
  %v444 = vpop.f32.mrf.mxu0
  %v445 = vadd.f32 0.0, %v444
  %v446 = vpop.f32.mrf.mxu0
  %447 = vmatprep.mubr.bf16.mxu0 0
  %448 = vmatmul.mubr.bf16.gmra.mxu0 %v294
  %v449 = vpop.f32.mrf.mxu0
  %v450 = vadd.f32 0.0, %v449
  %v451 = vpop.f32.mrf.mxu0
  %v452 = vpop.f32.mrf.mxu0
  %v453 = vadd.f32 0.0, %v452
  %v454 = vpop.f32.mrf.mxu0
  %455 = vmatprep.mubr.bf16.mxu0 0
  %456 = vmatmul.mubr.bf16.gmra.mxu0 %v297
  %v457 = vpop.f32.mrf.mxu0
  %v458 = vadd.f32 0.0, %v457
  %v459 = vpop.f32.mrf.mxu0
  %v460 = vpop.f32.mrf.mxu0
  %v461 = vadd.f32 0.0, %v460
  %v462 = vpop.f32.mrf.mxu0
  %463 = vdwg.mxu0
  %v464 = vadd.f32 %v51, %v338
  %v465 = vadd.f32 %v52, %v341
  %v466 = vadd.f32 %v53, %v346
  %v467 = vadd.f32 %v54, %v349
  %v468 = vadd.f32 %v55, %v354
  %v469 = vadd.f32 %v56, %v357
  %v470 = vadd.f32 %v57, %v362
  %v471 = vadd.f32 %v58, %v365
  %v472 = vadd.f32 %v59, %v370
  %v473 = vadd.f32 %v60, %v373
  %v474 = vadd.f32 %v61, %v378
  %v475 = vadd.f32 %v62, %v381
  %v476 = vadd.f32 %v63, %v386
  %v477 = vadd.f32 %v64, %v389
  %v478 = vadd.f32 %v65, %v394
  %v479 = vadd.f32 %v66, %v397
  %v480 = vadd.f32 %v67, %v402
  %v481 = vadd.f32 %v68, %v405
  %v482 = vadd.f32 %v69, %v410
  %v483 = vadd.f32 %v70, %v413
  %v484 = vadd.f32 %v71, %v418
  %v485 = vadd.f32 %v72, %v421
  %v486 = vadd.f32 %v73, %v426
  %v487 = vadd.f32 %v74, %v429
  %v488 = vadd.f32 %v75, %v434
  %v489 = vadd.f32 %v76, %v437
  %v490 = vadd.f32 %v77, %v442
  %v491 = vadd.f32 %v78, %v445
  %v492 = vadd.f32 %v79, %v450
  %v493 = vadd.f32 %v80, %v453
  %v494 = vadd.f32 %v81, %v458
  %v495 = vadd.f32 %v82, %v461
  %496 = vst [vmem:[#allocation2] sm:$0xff] %v464
  %497 = vst [vmem:[#allocation2 + $0x8] sm:$0xff] %v465
  %498 = vst [vmem:[#allocation2 + $0x10] sm:$0xff] %v466
  %499 = vst [vmem:[#allocation2 + $0x18] sm:$0xff] %v467
  %500 = vst [vmem:[#allocation2 + $0x20] sm:$0xff] %v468
  %501 = vst [vmem:[#allocation2 + $0x28] sm:$0xff] %v469
  %502 = vst [vmem:[#allocation2 + $0x30] sm:$0xff] %v470
  %503 = vst [vmem:[#allocation2 + $0x38] sm:$0xff] %v471
  %504 = vst [vmem:[#allocation2 + $0x40] sm:$0xff] %v472
  %505 = vst [vmem:[#allocation2 + $0x48] sm:$0xff] %v473
  %506 = vst [vmem:[#allocation2 + $0x50] sm:$0xff] %v474
  %507 = vst [vmem:[#allocation2 + $0x58] sm:$0xff] %v475
  %508 = vst [vmem:[#allocation2 + $0x60] sm:$0xff] %v476
  %509 = vst [vmem:[#allocation2 + $0x68] sm:$0xff] %v477
  %510 = vst [vmem:[#allocation2 + $0x70] sm:$0xff] %v478
  %511 = vst [vmem:[#allocation2 + $0x78] sm:$0xff] %v479
  %512 = vst [vmem:[#allocation2 + $0x80] sm:$0xff] %v480
  %513 = vst [vmem:[#allocation2 + $0x88] sm:$0xff] %v481
  %514 = vst [vmem:[#allocation2 + $0x90] sm:$0xff] %v482
  %515 = vst [vmem:[#allocation2 + $0x98] sm:$0xff] %v483
  %516 = vst [vmem:[#allocation2 + $0xa0] sm:$0xff] %v484
  %517 = vst [vmem:[#allocation2 + $0xa8] sm:$0xff] %v485
  %518 = vst [vmem:[#allocation2 + $0xb0] sm:$0xff] %v486
  %519 = vst [vmem:[#allocation2 + $0xb8] sm:$0xff] %v487
  %520 = vst [vmem:[#allocation2 + $0xc0] sm:$0xff] %v488
  %521 = vst [vmem:[#allocation2 + $0xc8] sm:$0xff] %v489
  %522 = vst [vmem:[#allocation2 + $0xd0] sm:$0xff] %v490
  %523 = vst [vmem:[#allocation2 + $0xd8] sm:$0xff] %v491
  %524 = vst [vmem:[#allocation2 + $0xe0] sm:$0xff] %v492
  %525 = vst [vmem:[#allocation2 + $0xe8] sm:$0xff] %v493
  %526 = vst [vmem:[#allocation2 + $0xf0] sm:$0xff] %v494
  %527 = vst [vmem:[#allocation2 + $0xf8] sm:$0xff] %v495
  // Predicated region
  $region18: #{encoder_forward.4} parent=0 // pred_check
    %p528 = pneg %p15
  $region19: #{encoder_forward.4} parent=0 // pred_check_branch
    %530 = sbr.rel (%p528) target = $region21
  $region20: #{encoder_forward.4} parent=0 // pred_region
    %v531 = vld [vmem:[#allocation2] sm:$0xff]
    %v532 = vld [vmem:[#allocation2 + $0x8] sm:$0xff]
    %v533 = vld [vmem:[#allocation2 + $0x10] sm:$0xff]
    %v534 = vld [vmem:[#allocation2 + $0x18] sm:$0xff]
    %v535 = vld [vmem:[#allocation2 + $0x20] sm:$0xff]
    %v536 = vld [vmem:[#allocation2 + $0x28] sm:$0xff]
    %v537 = vld [vmem:[#allocation2 + $0x30] sm:$0xff]
    %v538 = vld [vmem:[#allocation2 + $0x38] sm:$0xff]
    %v539 = vld [vmem:[#allocation2 + $0x40] sm:$0xff]
    %v540 = vld [vmem:[#allocation2 + $0x48] sm:$0xff]
    %v541 = vld [vmem:[#allocation2 + $0x50] sm:$0xff]
    %v542 = vld [vmem:[#allocation2 + $0x58] sm:$0xff]
    %v543 = vld [vmem:[#allocation2 + $0x60] sm:$0xff]
    %v544 = vld [vmem:[#allocation2 + $0x68] sm:$0xff]
    %v545 = vld [vmem:[#allocation2 + $0x70] sm:$0xff]
    %v546 = vld [vmem:[#allocation2 + $0x78] sm:$0xff]
    %v547 = vld [vmem:[#allocation2 + $0x80] sm:$0xff]
    %v548 = vld [vmem:[#allocation2 + $0x88] sm:$0xff]
    %v549 = vld [vmem:[#allocation2 + $0x90] sm:$0xff]
    %v550 = vld [vmem:[#allocation2 + $0x98] sm:$0xff]
    %v551 = vld [vmem:[#allocation2 + $0xa0] sm:$0xff]
    %v552 = vld [vmem:[#allocation2 + $0xa8] sm:$0xff]
    %v553 = vld [vmem:[#allocation2 + $0xb0] sm:$0xff]
    %v554 = vld [vmem:[#allocation2 + $0xb8] sm:$0xff]
    %v555 = vld [vmem:[#allocation2 + $0xc0] sm:$0xff]
    %v556 = vld [vmem:[#allocation2 + $0xc8] sm:$0xff]
    %v557 = vld [vmem:[#allocation2 + $0xd0] sm:$0xff]
    %v558 = vld [vmem:[#allocation2 + $0xd8] sm:$0xff]
    %v559 = vld [vmem:[#allocation2 + $0xe0] sm:$0xff]
    %v560 = vld [vmem:[#allocation2 + $0xe8] sm:$0xff]
    %v561 = vld [vmem:[#allocation2 + $0xf0] sm:$0xff]
    %v562 = vld [vmem:[#allocation2 + $0xf8] sm:$0xff]
    %v563 = vld [vmem:[%s2] sm:$0x1]
    %v565 = vlaneseq
    %v566 = vshrl.u32 %v565, 7
    %v567 = vsub.s32 0, %v566
    %v568 = vrot.slane %v563, %v567
    %v570 = vadd.f32 %v531, %v568
    %v571 = vadd.f32 %v532, %v568
    %v572 = vadd.f32 %v533, %v568
    %v573 = vadd.f32 %v534, %v568
    %v574 = vadd.f32 %v535, %v568
    %v575 = vadd.f32 %v536, %v568
    %v576 = vadd.f32 %v537, %v568
    %v577 = vadd.f32 %v538, %v568
    %v578 = vadd.f32 %v539, %v568
    %v579 = vadd.f32 %v540, %v568
    %v580 = vadd.f32 %v541, %v568
    %v581 = vadd.f32 %v542, %v568
    %v582 = vadd.f32 %v543, %v568
    %v583 = vadd.f32 %v544, %v568
    %v584 = vadd.f32 %v545, %v568
    %v585 = vadd.f32 %v546, %v568
    %v586 = vadd.f32 %v547, %v568
    %v587 = vadd.f32 %v548, %v568
    %v588 = vadd.f32 %v549, %v568
    %v589 = vadd.f32 %v550, %v568
    %v590 = vadd.f32 %v551, %v568
    %v591 = vadd.f32 %v552, %v568
    %v592 = vadd.f32 %v553, %v568
    %v593 = vadd.f32 %v554, %v568
    %v594 = vadd.f32 %v555, %v568
    %v595 = vadd.f32 %v556, %v568
    %v596 = vadd.f32 %v557, %v568
    %v597 = vadd.f32 %v558, %v568
    %v598 = vadd.f32 %v559, %v568
    %v599 = vadd.f32 %v560, %v568
    %v600 = vadd.f32 %v561, %v568
    %v601 = vadd.f32 %v562, %v568
    %v602 = vmax.f32 %v570, 0.0
    %v603 = vmax.f32 %v571, 0.0
    %v604 = vmax.f32 %v572, 0.0
    %v605 = vmax.f32 %v573, 0.0
    %v606 = vmax.f32 %v574, 0.0
    %v607 = vmax.f32 %v575, 0.0
    %v608 = vmax.f32 %v576, 0.0
    %v609 = vmax.f32 %v577, 0.0
    %v610 = vmax.f32 %v578, 0.0
    %v611 = vmax.f32 %v579, 0.0
    %v612 = vmax.f32 %v580, 0.0
    %v613 = vmax.f32 %v581, 0.0
    %v614 = vmax.f32 %v582, 0.0
    %v615 = vmax.f32 %v583, 0.0
    %v616 = vmax.f32 %v584, 0.0
    %v617 = vmax.f32 %v585, 0.0
    %v618 = vmax.f32 %v586, 0.0
    %v619 = vmax.f32 %v587, 0.0
    %v620 = vmax.f32 %v588, 0.0
    %v621 = vmax.f32 %v589, 0.0
    %v622 = vmax.f32 %v590, 0.0
    %v623 = vmax.f32 %v591, 0.0
    %v624 = vmax.f32 %v592, 0.0
    %v625 = vmax.f32 %v593, 0.0
    %v626 = vmax.f32 %v594, 0.0
    %v627 = vmax.f32 %v595, 0.0
    %v628 = vmax.f32 %v596, 0.0
    %v629 = vmax.f32 %v597, 0.0
    %v630 = vmax.f32 %v598, 0.0
    %v631 = vmax.f32 %v599, 0.0
    %v632 = vmax.f32 %v600, 0.0
    %v633 = vmax.f32 %v601, 0.0
    %v634 = vpack.c.bf16 %v603, %v602
    %v635 = vpack.c.bf16 %v605, %v604
    %v636 = vpack.c.bf16 %v607, %v606
    %v637 = vpack.c.bf16 %v609, %v608
    %v638 = vpack.c.bf16 %v611, %v610
    %v639 = vpack.c.bf16 %v613, %v612
    %v640 = vpack.c.bf16 %v615, %v614
    %v641 = vpack.c.bf16 %v617, %v616
    %v642 = vpack.c.bf16 %v619, %v618
    %v643 = vpack.c.bf16 %v621, %v620
    %v644 = vpack.c.bf16 %v623, %v622
    %v645 = vpack.c.bf16 %v625, %v624
    %v646 = vpack.c.bf16 %v627, %v626
    %v647 = vpack.c.bf16 %v629, %v628
    %v648 = vpack.c.bf16 %v631, %v630
    %v649 = vpack.c.bf16 %v633, %v632
    %v666 = vunpack.c.l.b16 %v634
    %v667 = vunpack.c.h.b16 %v634
    %v668 = vunpack.c.l.b16 %v635
    %v669 = vunpack.c.h.b16 %v635
    %v670 = vunpack.c.l.b16 %v636
    %v671 = vunpack.c.h.b16 %v636
    %v672 = vunpack.c.l.b16 %v637
    %v673 = vunpack.c.h.b16 %v637
    %v674 = vunpack.c.l.b16 %v638
    %v675 = vunpack.c.h.b16 %v638
    %v676 = vunpack.c.l.b16 %v639
    %v677 = vunpack.c.h.b16 %v639
    %v678 = vunpack.c.l.b16 %v640
    %v679 = vunpack.c.h.b16 %v640
    %v680 = vunpack.c.l.b16 %v641
    %v681 = vunpack.c.h.b16 %v641
    %v682 = vunpack.c.l.b16 %v642
    %v683 = vunpack.c.h.b16 %v642
    %v684 = vunpack.c.l.b16 %v643
    %v685 = vunpack.c.h.b16 %v643
    %v686 = vunpack.c.l.b16 %v644
    %v687 = vunpack.c.h.b16 %v644
    %v688 = vunpack.c.l.b16 %v645
    %v689 = vunpack.c.h.b16 %v645
    %v690 = vunpack.c.l.b16 %v646
    %v691 = vunpack.c.h.b16 %v646
    %v692 = vunpack.c.l.b16 %v647
    %v693 = vunpack.c.h.b16 %v647
    %v694 = vunpack.c.l.b16 %v648
    %v695 = vunpack.c.h.b16 %v648
    %v696 = vunpack.c.l.b16 %v649
    %v697 = vunpack.c.h.b16 %v649
    %v698 = vpack.c.b16 %v666, %v666
    %v699 = vpack.c.b16 %v667, %v667
    %v700 = vpack.c.b16 %v668, %v668
    %v701 = vpack.c.b16 %v669, %v669
    %v702 = vpack.c.b16 %v670, %v670
    %v703 = vpack.c.b16 %v671, %v671
    %v704 = vpack.c.b16 %v672, %v672
    %v705 = vpack.c.b16 %v673, %v673
    %v706 = vpack.c.b16 %v674, %v674
    %v707 = vpack.c.b16 %v675, %v675
    %v708 = vpack.c.b16 %v676, %v676
    %v709 = vpack.c.b16 %v677, %v677
    %v710 = vpack.c.b16 %v678, %v678
    %v711 = vpack.c.b16 %v679, %v679
    %v712 = vpack.c.b16 %v680, %v680
    %v713 = vpack.c.b16 %v681, %v681
    %v714 = vpack.c.b16 %v682, %v682
    %v715 = vpack.c.b16 %v683, %v683
    %v716 = vpack.c.b16 %v684, %v684
    %v717 = vpack.c.b16 %v685, %v685
    %v718 = vpack.c.b16 %v686, %v686
    %v719 = vpack.c.b16 %v687, %v687
    %v720 = vpack.c.b16 %v688, %v688
    %v721 = vpack.c.b16 %v689, %v689
    %v722 = vpack.c.b16 %v690, %v690
    %v723 = vpack.c.b16 %v691, %v691
    %v724 = vpack.c.b16 %v692, %v692
    %v725 = vpack.c.b16 %v693, %v693
    %v726 = vpack.c.b16 %v694, %v694
    %v727 = vpack.c.b16 %v695, %v695
    %v728 = vpack.c.b16 %v696, %v696
    %v729 = vpack.c.b16 %v697, %v697
    %762 = vst [vmem:[%s3] sm:$0xf] %v698
    %763 = vst [vmem:[%s3 + $0x4] sm:$0xf] %v699
    %764 = vst [vmem:[%s3 + $0x8] sm:$0xf] %v700
    %765 = vst [vmem:[%s3 + $0xc] sm:$0xf] %v701
    %766 = vst [vmem:[%s3 + $0x10] sm:$0xf] %v702
    %767 = vst [vmem:[%s3 + $0x14] sm:$0xf] %v703
    %768 = vst [vmem:[%s3 + $0x18] sm:$0xf] %v704
    %769 = vst [vmem:[%s3 + $0x1c] sm:$0xf] %v705
    %770 = vst [vmem:[%s3 + $0x20] sm:$0xf] %v706
    %771 = vst [vmem:[%s3 + $0x24] sm:$0xf] %v707
    %772 = vst [vmem:[%s3 + $0x28] sm:$0xf] %v708
    %773 = vst [vmem:[%s3 + $0x2c] sm:$0xf] %v709
    %774 = vst [vmem:[%s3 + $0x30] sm:$0xf] %v710
    %775 = vst [vmem:[%s3 + $0x34] sm:$0xf] %v711
    %776 = vst [vmem:[%s3 + $0x38] sm:$0xf] %v712
    %777 = vst [vmem:[%s3 + $0x3c] sm:$0xf] %v713
    %778 = vst [vmem:[%s3 + $0x40] sm:$0xf] %v714
    %779 = vst [vmem:[%s3 + $0x44] sm:$0xf] %v715
    %780 = vst [vmem:[%s3 + $0x48] sm:$0xf] %v716
    %781 = vst [vmem:[%s3 + $0x4c] sm:$0xf] %v717
    %782 = vst [vmem:[%s3 + $0x50] sm:$0xf] %v718
    %783 = vst [vmem:[%s3 + $0x54] sm:$0xf] %v719
    %784 = vst [vmem:[%s3 + $0x58] sm:$0xf] %v720
    %785 = vst [vmem:[%s3 + $0x5c] sm:$0xf] %v721
    %786 = vst [vmem:[%s3 + $0x60] sm:$0xf] %v722
    %787 = vst [vmem:[%s3 + $0x64] sm:$0xf] %v723
    %788 = vst [vmem:[%s3 + $0x68] sm:$0xf] %v724
    %789 = vst [vmem:[%s3 + $0x6c] sm:$0xf] %v725
    %790 = vst [vmem:[%s3 + $0x70] sm:$0xf] %v726
    %791 = vst [vmem:[%s3 + $0x74] sm:$0xf] %v727
    %792 = vst [vmem:[%s3 + $0x78] sm:$0xf] %v728
    %793 = vst [vmem:[%s3 + $0x7c] sm:$0xf] %v729
  $region21: #{encoder_forward.4} parent=0 // pred_fallthru
    _
  // Predicated region
  $region22: #{encoder_forward.4} parent=0 // pred_check
    _
  $region23: #{encoder_forward.4} parent=0 // pred_check_branch
    %795 = sbr.rel (0) target = $region25
  $region24: #{encoder_forward.4} parent=0 // pred_region
    _
  $region25: #{encoder_forward.4} parent=0 // pred_fallthru
    _
  // Predicated region
  $region26: #{encoder_forward.4} parent=0 // pred_check
    _
  $region27: #{encoder_forward.4} parent=0 // pred_check_branch
    %797 = sbr.rel (0) target = $region29
  $region28: #{encoder_forward.4} parent=0 // pred_region
    _
  $region29: #{encoder_forward.4} parent=0 // pred_fallthru
    _

// kernel: encoder_forward.5
$region0: #{encoder_forward.5}
  #allocation0 [shape = 'u32[]', space=smem, size = 0x4, offset = 0x4, fixed_abs, tag = 'smem constant byte address 0x4 - core index']
  #allocation1 [shape = 'u32[144,128]{1,0:T(1,128)}', space=vmem, size = 0x12000, scoped, tag = 'internal scratch']
  #allocation2 [shape = 'f32[64,128]{1,0:T(8,128)}', space=vmem, size = 0x8000, scoped, tag = 'scratch operand']
  %s0 = inlined_call_operand.vmem [shape: bf16[64,1728], index: 0, kind: input, shape index: {}]
  %s1 = inlined_call_operand.vmem [shape: bf16[1728,128], index: 1, kind: input, shape index: {}]
  %s2 = inlined_call_operand.vmem [shape: f32[1,128], index: 2, kind: input, shape index: {}]
  %s3 = inlined_call_operand.vmem [shape: bf16[64,128], index: 3, kind: output, shape index: {}]
  %s4 = sld [smem:[#allocation0]]
  $region30: #{encoder_forward.5} parent=0
    _
  %s6 = ssub.s32 1, %s4
  %s7 = scalar_select 0, %s6, %s4
  // Predicated region
  $region2: #{encoder_forward.5} parent=0 // pred_check
    _
  $region3: #{encoder_forward.5} parent=0 // pred_check_branch
    %9 = sbr.rel (0) target = $region5
  $region4: #{encoder_forward.5} parent=0 // pred_region
    _
  $region5: #{encoder_forward.5} parent=0 // pred_fallthru
    _
  // Predicated region
  $region6: #{encoder_forward.5} parent=0 // pred_check
    _
  $region7: #{encoder_forward.5} parent=0 // pred_check_branch
    %11 = sbr.rel (0) target = $region9
  $region8: #{encoder_forward.5} parent=0 // pred_region
    _
  $region9: #{encoder_forward.5} parent=0 // pred_fallthru
    _
  // Predicated region
  $region10: #{encoder_forward.5} parent=0 // pred_check
    _
  $region11: #{encoder_forward.5} parent=0 // pred_check_branch
    %13 = sbr.rel (0) target = $region13
  $region12: #{encoder_forward.5} parent=0 // pred_region
    _
  $region13: #{encoder_forward.5} parent=0 // pred_fallthru
    _
  %p15 = scmp.eq.s32.totalorder 0, 0
  // Predicated region
  $region14: #{encoder_forward.5} parent=0 // pred_check
    %p16 = pneg %p15
  $region15: #{encoder_forward.5} parent=0 // pred_check_branch
    %18 = sbr.rel (%p16) target = $region17
  $region16: #{encoder_forward.5} parent=0 // pred_region
    %19 = vst [vmem:[#allocation2] sm:$0xff] 0.0
    %20 = vst [vmem:[#allocation2 + $0x8] sm:$0xff] 0.0
    %21 = vst [vmem:[#allocation2 + $0x10] sm:$0xff] 0.0
    %22 = vst [vmem:[#allocation2 + $0x18] sm:$0xff] 0.0
    %23 = vst [vmem:[#allocation2 + $0x20] sm:$0xff] 0.0
    %24 = vst [vmem:[#allocation2 + $0x28] sm:$0xff] 0.0
    %25 = vst [vmem:[#allocation2 + $0x30] sm:$0xff] 0.0
    %26 = vst [vmem:[#allocation2 + $0x38] sm:$0xff] 0.0
  $region17: #{encoder_forward.5} parent=0 // pred_fallthru
    _
  %v27 = vld [vmem:[#allocation2] sm:$0xff]
  %v28 = vld [vmem:[#allocation2 + $0x8] sm:$0xff]
  %v29 = vld [vmem:[#allocation2 + $0x10] sm:$0xff]
  %v30 = vld [vmem:[#allocation2 + $0x18] sm:$0xff]
  %v31 = vld [vmem:[#allocation2 + $0x20] sm:$0xff]
  %v32 = vld [vmem:[#allocation2 + $0x28] sm:$0xff]
  %v33 = vld [vmem:[#allocation2 + $0x30] sm:$0xff]
  %v34 = vld [vmem:[#allocation2 + $0x38] sm:$0xff]
  %v35 = vld [vmem:[%s0] sm:$0xff]
  %v36 = vld [vmem:[%s0 + $0x8] sm:$0xff]
  %v37 = vld [vmem:[%s0 + $0x10] sm:$0xff]
  %v38 = vld [vmem:[%s0 + $0x18] sm:$0xff]
  %v39 = vld [vmem:[%s0 + $0x20] sm:$0xff]
  %v40 = vld [vmem:[%s0 + $0x28] sm:$0xff]
  %v41 = vld [vmem:[%s0 + $0x30] sm:$0xff]
  %v42 = vld [vmem:[%s0 + $0x38] sm:$0xff]
  %v43 = vld [vmem:[%s0 + $0x40] sm:$0xff]
  %v44 = vld [vmem:[%s0 + $0x48] sm:$0xff]
  %v45 = vld [vmem:[%s0 + $0x50] sm:$0xff]
  %v46 = vld [vmem:[%s0 + $0x58] sm:$0xff]
  %v47 = vld [vmem:[%s0 + $0x60] sm:$0xff]
  %v48 = vld [vmem:[%s0 + $0x68] sm:$0xff]
  %v49 = vld [vmem:[%s0 + $0x70] sm:$0xff]
  %v50 = vld [vmem:[%s0 + $0x78] sm:$0xff]
  %v51 = vld [vmem:[%s0 + $0x80] sm:$0xff]
  %v52 = vld [vmem:[%s0 + $0x88] sm:$0xff]
  %v53 = vld [vmem:[%s0 + $0x90] sm:$0xff]
  %v54 = vld [vmem:[%s0 + $0x98] sm:$0xff]
  %v55 = vld [vmem:[%s0 + $0xa0] sm:$0xff]
  %v56 = vld [vmem:[%s0 + $0xa8] sm:$0xff]
  %v57 = vld [vmem:[%s0 + $0xb0] sm:$0xff]
  %v58 = vld [vmem:[%s0 + $0xb8] sm:$0xff]
  %v59 = vld [vmem:[%s0 + $0xc0] sm:$0xff]
  %v60 = vld [vmem:[%s0 + $0xc8] sm:$0xff]
  %v61 = vld [vmem:[%s0 + $0xd0] sm:$0xff]
  %v62 = vld [vmem:[%s0 + $0xd8] sm:$0xff]
  %v63 = vld [vmem:[%s0 + $0xe0] sm:$0xff]
  %v64 = vld [vmem:[%s0 + $0xe8] sm:$0xff]
  %v65 = vld [vmem:[%s0 + $0xf0] sm:$0xff]
  %v66 = vld [vmem:[%s0 + $0xf8] sm:$0xff]
  %v67 = vld [vmem:[%s0 + $0x100] sm:$0xff]
  %v68 = vld [vmem:[%s0 + $0x108] sm:$0xff]
  %v69 = vld [vmem:[%s0 + $0x110] sm:$0xff]
  %v70 = vld [vmem:[%s0 + $0x118] sm:$0xff]
  %v71 = vld [vmem:[%s0 + $0x120] sm:$0xff]
  %v72 = vld [vmem:[%s0 + $0x128] sm:$0xff]
  %v73 = vld [vmem:[%s0 + $0x130] sm:$0xff]
  %v74 = vld [vmem:[%s0 + $0x138] sm:$0xff]
  %v75 = vld [vmem:[%s0 + $0x140] sm:$0xff]
  %v76 = vld [vmem:[%s0 + $0x148] sm:$0xff]
  %v77 = vld [vmem:[%s0 + $0x150] sm:$0xff]
  %v78 = vld [vmem:[%s0 + $0x158] sm:$0xff]
  %v79 = vld [vmem:[%s0 + $0x160] sm:$0xff]
  %v80 = vld [vmem:[%s0 + $0x168] sm:$0xff]
  %v81 = vld [vmem:[%s0 + $0x170] sm:$0xff]
  %v82 = vld [vmem:[%s0 + $0x178] sm:$0xff]
  %v83 = vld [vmem:[%s0 + $0x180] sm:$0xff]
  %v84 = vld [vmem:[%s0 + $0x188] sm:$0xff]
  %v85 = vld [vmem:[%s0 + $0x190] sm:$0xff]
  %v86 = vld [vmem:[%s0 + $0x198] sm:$0xff]
  %v87 = vld [vmem:[%s0 + $0x1a0] sm:$0xff]
  %v88 = vld [vmem:[%s0 + $0x1a8] sm:$0xff]
  %v89 = vld [vmem:[%s0 + $0x1b0] sm:$0xff]
  %v90 = vld [vmem:[%s0 + $0x1b8] sm:$0xff]
  %v91 = vld [vmem:[%s1] sm:$0xf]
  %v92 = vld [vmem:[%s1 + $0x4] sm:$0xf]
  %v93 = vld [vmem:[%s1 + $0x8] sm:$0xf]
  %v94 = vld [vmem:[%s1 + $0xc] sm:$0xf]
  %v95 = vld [vmem:[%s1 + $0x10] sm:$0xf]
  %v96 = vld [vmem:[%s1 + $0x14] sm:$0xf]
  %v97 = vld [vmem:[%s1 + $0x18] sm:$0xf]
  %v98 = vld [vmem:[%s1 + $0x1c] sm:$0xf]
  %v99 = vld [vmem:[%s1 + $0x20] sm:$0xf]
  %v100 = vld [vmem:[%s1 + $0x24] sm:$0xf]
  %v101 = vld [vmem:[%s1 + $0x28] sm:$0xf]
  %v102 = vld [vmem:[%s1 + $0x2c] sm:$0xf]
  %v103 = vld [vmem:[%s1 + $0x30] sm:$0xf]
  %v104 = vld [vmem:[%s1 + $0x34] sm:$0xf]
  %v105 = vld [vmem:[%s1 + $0x38] sm:$0xf]
  %v106 = vld [vmem:[%s1 + $0x3c] sm:$0xf]
  %v107 = vld [vmem:[%s1 + $0x40] sm:$0xf]
  %v108 = vld [vmem:[%s1 + $0x44] sm:$0xf]
  %v109 = vld [vmem:[%s1 + $0x48] sm:$0xf]
  %v110 = vld [vmem:[%s1 + $0x4c] sm:$0xf]
  %v111 = vld [vmem:[%s1 + $0x50] sm:$0xf]
  %v112 = vld [vmem:[%s1 + $0x54] sm:$0xf]
  %v113 = vld [vmem:[%s1 + $0x58] sm:$0xf]
  %v114 = vld [vmem:[%s1 + $0x5c] sm:$0xf]
  %v115 = vld [vmem:[%s1 + $0x60] sm:$0xf]
  %v116 = vld [vmem:[%s1 + $0x64] sm:$0xf]
  %v117 = vld [vmem:[%s1 + $0x68] sm:$0xf]
  %v118 = vld [vmem:[%s1 + $0x6c] sm:$0xf]
  %v119 = vld [vmem:[%s1 + $0x70] sm:$0xf]
  %v120 = vld [vmem:[%s1 + $0x74] sm:$0xf]
  %v121 = vld [vmem:[%s1 + $0x78] sm:$0xf]
  %v122 = vld [vmem:[%s1 + $0x7c] sm:$0xf]
  %v123 = vld [vmem:[%s1 + $0x80] sm:$0xf]
  %v124 = vld [vmem:[%s1 + $0x84] sm:$0xf]
  %v125 = vld [vmem:[%s1 + $0x88] sm:$0xf]
  %v126 = vld [vmem:[%s1 + $0x8c] sm:$0xf]
  %v127 = vld [vmem:[%s1 + $0x90] sm:$0xf]
  %v128 = vld [vmem:[%s1 + $0x94] sm:$0xf]
  %v129 = vld [vmem:[%s1 + $0x98] sm:$0xf]
  %v130 = vld [vmem:[%s1 + $0x9c] sm:$0xf]
  %v131 = vld [vmem:[%s1 + $0xa0] sm:$0xf]
  %v132 = vld [vmem:[%s1 + $0xa4] sm:$0xf]
  %v133 = vld [vmem:[%s1 + $0xa8] sm:$0xf]
  %v134 = vld [vmem:[%s1 + $0xac] sm:$0xf]
  %v135 = vld [vmem:[%s1 + $0xb0] sm:$0xf]
  %v136 = vld [vmem:[%s1 + $0xb4] sm:$0xf]
  %v137 = vld [vmem:[%s1 + $0xb8] sm:$0xf]
  %v138 = vld [vmem:[%s1 + $0xbc] sm:$0xf]
  %v139 = vld [vmem:[%s1 + $0xc0] sm:$0xf]
  %v140 = vld [vmem:[%s1 + $0xc4] sm:$0xf]
  %v141 = vld [vmem:[%s1 + $0xc8] sm:$0xf]
  %v142 = vld [vmem:[%s1 + $0xcc] sm:$0xf]
  %v143 = vld [vmem:[%s1 + $0xd0] sm:$0xf]
  %v144 = vld [vmem:[%s1 + $0xd4] sm:$0xf]
  %v145 = vld [vmem:[%s1 + $0xd8] sm:$0xf]
  %v146 = vld [vmem:[%s1 + $0xdc] sm:$0xf]
  %v147 = vld [vmem:[%s1 + $0xe0] sm:$0xf]
  %v148 = vld [vmem:[%s1 + $0xe4] sm:$0xf]
  %v149 = vld [vmem:[%s1 + $0xe8] sm:$0xf]
  %v150 = vld [vmem:[%s1 + $0xec] sm:$0xf]
  %v151 = vld [vmem:[%s1 + $0xf0] sm:$0xf]
  %v152 = vld [vmem:[%s1 + $0xf4] sm:$0xf]
  %v153 = vld [vmem:[%s1 + $0xf8] sm:$0xf]
  %v154 = vld [vmem:[%s1 + $0xfc] sm:$0xf]
  %v155 = vld [vmem:[%s1 + $0x100] sm:$0xf]
  %v156 = vld [vmem:[%s1 + $0x104] sm:$0xf]
  %v157 = vld [vmem:[%s1 + $0x108] sm:$0xf]
  %v158 = vld [vmem:[%s1 + $0x10c] sm:$0xf]
  %v159 = vld [vmem:[%s1 + $0x110] sm:$0xf]
  %v160 = vld [vmem:[%s1 + $0x114] sm:$0xf]
  %v161 = vld [vmem:[%s1 + $0x118] sm:$0xf]
  %v162 = vld [vmem:[%s1 + $0x11c] sm:$0xf]
  %v163 = vld [vmem:[%s1 + $0x120] sm:$0xf]
  %v164 = vld [vmem:[%s1 + $0x124] sm:$0xf]
  %v165 = vld [vmem:[%s1 + $0x128] sm:$0xf]
  %v166 = vld [vmem:[%s1 + $0x12c] sm:$0xf]
  %v167 = vld [vmem:[%s1 + $0x130] sm:$0xf]
  %v168 = vld [vmem:[%s1 + $0x134] sm:$0xf]
  %v169 = vld [vmem:[%s1 + $0x138] sm:$0xf]
  %v170 = vld [vmem:[%s1 + $0x13c] sm:$0xf]
  %v171 = vld [vmem:[%s1 + $0x140] sm:$0xf]
  %v172 = vld [vmem:[%s1 + $0x144] sm:$0xf]
  %v173 = vld [vmem:[%s1 + $0x148] sm:$0xf]
  %v174 = vld [vmem:[%s1 + $0x14c] sm:$0xf]
  %v175 = vld [vmem:[%s1 + $0x150] sm:$0xf]
  %v176 = vld [vmem:[%s1 + $0x154] sm:$0xf]
  %v177 = vld [vmem:[%s1 + $0x158] sm:$0xf]
  %v178 = vld [vmem:[%s1 + $0x15c] sm:$0xf]
  %v179 = vld [vmem:[%s1 + $0x160] sm:$0xf]
  %v180 = vld [vmem:[%s1 + $0x164] sm:$0xf]
  %v181 = vld [vmem:[%s1 + $0x168] sm:$0xf]
  %v182 = vld [vmem:[%s1 + $0x16c] sm:$0xf]
  %v183 = vld [vmem:[%s1 + $0x170] sm:$0xf]
  %v184 = vld [vmem:[%s1 + $0x174] sm:$0xf]
  %v185 = vld [vmem:[%s1 + $0x178] sm:$0xf]
  %v186 = vld [vmem:[%s1 + $0x17c] sm:$0xf]
  %v187 = vld [vmem:[%s1 + $0x180] sm:$0xf]
  %v188 = vld [vmem:[%s1 + $0x184] sm:$0xf]
  %v189 = vld [vmem:[%s1 + $0x188] sm:$0xf]
  %v190 = vld [vmem:[%s1 + $0x18c] sm:$0xf]
  %v191 = vld [vmem:[%s1 + $0x190] sm:$0xf]
  %v192 = vld [vmem:[%s1 + $0x194] sm:$0xf]
  %v193 = vld [vmem:[%s1 + $0x198] sm:$0xf]
  %v194 = vld [vmem:[%s1 + $0x19c] sm:$0xf]
  %v195 = vld [vmem:[%s1 + $0x1a0] sm:$0xf]
  %v196 = vld [vmem:[%s1 + $0x1a4] sm:$0xf]
  %v197 = vld [vmem:[%s1 + $0x1a8] sm:$0xf]
  %v198 = vld [vmem:[%s1 + $0x1ac] sm:$0xf]
  %v199 = vld [vmem:[%s1 + $0x1b0] sm:$0xf]
  %v200 = vld [vmem:[%s1 + $0x1b4] sm:$0xf]
  %v201 = vld [vmem:[%s1 + $0x1b8] sm:$0xf]
  %v202 = vld [vmem:[%s1 + $0x1bc] sm:$0xf]
  %v203 = vld [vmem:[%s1 + $0x1c0] sm:$0xf]
  %v204 = vld [vmem:[%s1 + $0x1c4] sm:$0xf]
  %v205 = vld [vmem:[%s1 + $0x1c8] sm:$0xf]
  %v206 = vld [vmem:[%s1 + $0x1cc] sm:$0xf]
  %v207 = vld [vmem:[%s1 + $0x1d0] sm:$0xf]
  %v208 = vld [vmem:[%s1 + $0x1d4] sm:$0xf]
  %v209 = vld [vmem:[%s1 + $0x1d8] sm:$0xf]
  %v210 = vld [vmem:[%s1 + $0x1dc] sm:$0xf]
  %v211 = vld [vmem:[%s1 + $0x1e0] sm:$0xf]
  %v212 = vld [vmem:[%s1 + $0x1e4] sm:$0xf]
  %v213 = vld [vmem:[%s1 + $0x1e8] sm:$0xf]
  %v214 = vld [vmem:[%s1 + $0x1ec] sm:$0xf]
  %v215 = vld [vmem:[%s1 + $0x1f0] sm:$0xf]
  %v216 = vld [vmem:[%s1 + $0x1f4] sm:$0xf]
  %v217 = vld [vmem:[%s1 + $0x1f8] sm:$0xf]
  %v218 = vld [vmem:[%s1 + $0x1fc] sm:$0xf]
  %v219 = vld [vmem:[%s1 + $0x200] sm:$0xf]
  %v220 = vld [vmem:[%s1 + $0x204] sm:$0xf]
  %v221 = vld [vmem:[%s1 + $0x208] sm:$0xf]
  %v222 = vld [vmem:[%s1 + $0x20c] sm:$0xf]
  %v223 = vld [vmem:[%s1 + $0x210] sm:$0xf]
  %v224 = vld [vmem:[%s1 + $0x214] sm:$0xf]
  %v225 = vld [vmem:[%s1 + $0x218] sm:$0xf]
  %v226 = vld [vmem:[%s1 + $0x21c] sm:$0xf]
  %v227 = vld [vmem:[%s1 + $0x220] sm:$0xf]
  %v228 = vld [vmem:[%s1 + $0x224] sm:$0xf]
  %v229 = vld [vmem:[%s1 + $0x228] sm:$0xf]
  %v230 = vld [vmem:[%s1 + $0x22c] sm:$0xf]
  %v231 = vld [vmem:[%s1 + $0x230] sm:$0xf]
  %v232 = vld [vmem:[%s1 + $0x234] sm:$0xf]
  %v233 = vld [vmem:[%s1 + $0x238] sm:$0xf]
  %v234 = vld [vmem:[%s1 + $0x23c] sm:$0xf]
  %v235 = vld [vmem:[%s1 + $0x240] sm:$0xf]
  %v236 = vld [vmem:[%s1 + $0x244] sm:$0xf]
  %v237 = vld [vmem:[%s1 + $0x248] sm:$0xf]
  %v238 = vld [vmem:[%s1 + $0x24c] sm:$0xf]
  %v239 = vld [vmem:[%s1 + $0x250] sm:$0xf]
  %v240 = vld [vmem:[%s1 + $0x254] sm:$0xf]
  %v241 = vld [vmem:[%s1 + $0x258] sm:$0xf]
  %v242 = vld [vmem:[%s1 + $0x25c] sm:$0xf]
  %v243 = vld [vmem:[%s1 + $0x260] sm:$0xf]
  %v244 = vld [vmem:[%s1 + $0x264] sm:$0xf]
  %v245 = vld [vmem:[%s1 + $0x268] sm:$0xf]
  %v246 = vld [vmem:[%s1 + $0x26c] sm:$0xf]
  %v247 = vld [vmem:[%s1 + $0x270] sm:$0xf]
  %v248 = vld [vmem:[%s1 + $0x274] sm:$0xf]
  %v249 = vld [vmem:[%s1 + $0x278] sm:$0xf]
  %v250 = vld [vmem:[%s1 + $0x27c] sm:$0xf]
  %v251 = vld [vmem:[%s1 + $0x280] sm:$0xf]
  %v252 = vld [vmem:[%s1 + $0x284] sm:$0xf]
  %v253 = vld [vmem:[%s1 + $0x288] sm:$0xf]
  %v254 = vld [vmem:[%s1 + $0x28c] sm:$0xf]
  %v255 = vld [vmem:[%s1 + $0x290] sm:$0xf]
  %v256 = vld [vmem:[%s1 + $0x294] sm:$0xf]
  %v257 = vld [vmem:[%s1 + $0x298] sm:$0xf]
  %v258 = vld [vmem:[%s1 + $0x29c] sm:$0xf]
  %v259 = vld [vmem:[%s1 + $0x2a0] sm:$0xf]
  %v260 = vld [vmem:[%s1 + $0x2a4] sm:$0xf]
  %v261 = vld [vmem:[%s1 + $0x2a8] sm:$0xf]
  %v262 = vld [vmem:[%s1 + $0x2ac] sm:$0xf]
  %v263 = vld [vmem:[%s1 + $0x2b0] sm:$0xf]
  %v264 = vld [vmem:[%s1 + $0x2b4] sm:$0xf]
  %v265 = vld [vmem:[%s1 + $0x2b8] sm:$0xf]
  %v266 = vld [vmem:[%s1 + $0x2bc] sm:$0xf]
  %v267 = vld [vmem:[%s1 + $0x2c0] sm:$0xf]
  %v268 = vld [vmem:[%s1 + $0x2c4] sm:$0xf]
  %v269 = vld [vmem:[%s1 + $0x2c8] sm:$0xf]
  %v270 = vld [vmem:[%s1 + $0x2cc] sm:$0xf]
  %v271 = vld [vmem:[%s1 + $0x2d0] sm:$0xf]
  %v272 = vld [vmem:[%s1 + $0x2d4] sm:$0xf]
  %v273 = vld [vmem:[%s1 + $0x2d8] sm:$0xf]
  %v274 = vld [vmem:[%s1 + $0x2dc] sm:$0xf]
  %v275 = vld [vmem:[%s1 + $0x2e0] sm:$0xf]
  %v276 = vld [vmem:[%s1 + $0x2e4] sm:$0xf]
  %v277 = vld [vmem:[%s1 + $0x2e8] sm:$0xf]
  %v278 = vld [vmem:[%s1 + $0x2ec] sm:$0xf]
  %v279 = vld [vmem:[%s1 + $0x2f0] sm:$0xf]
  %v280 = vld [vmem:[%s1 + $0x2f4] sm:$0xf]
  %v281 = vld [vmem:[%s1 + $0x2f8] sm:$0xf]
  %v282 = vld [vmem:[%s1 + $0x2fc] sm:$0xf]
  %v283 = vld [vmem:[%s1 + $0x300] sm:$0xf]
  %v284 = vld [vmem:[%s1 + $0x304] sm:$0xf]
  %v285 = vld [vmem:[%s1 + $0x308] sm:$0xf]
  %v286 = vld [vmem:[%s1 + $0x30c] sm:$0xf]
  %v287 = vld [vmem:[%s1 + $0x310] sm:$0xf]
  %v288 = vld [vmem:[%s1 + $0x314] sm:$0xf]
  %v289 = vld [vmem:[%s1 + $0x318] sm:$0xf]
  %v290 = vld [vmem:[%s1 + $0x31c] sm:$0xf]
  %v291 = vld [vmem:[%s1 + $0x320] sm:$0xf]
  %v292 = vld [vmem:[%s1 + $0x324] sm:$0xf]
  %v293 = vld [vmem:[%s1 + $0x328] sm:$0xf]
  %v294 = vld [vmem:[%s1 + $0x32c] sm:$0xf]
  %v295 = vld [vmem:[%s1 + $0x330] sm:$0xf]
  %v296 = vld [vmem:[%s1 + $0x334] sm:$0xf]
  %v297 = vld [vmem:[%s1 + $0x338] sm:$0xf]
  %v298 = vld [vmem:[%s1 + $0x33c] sm:$0xf]
  %v299 = vld [vmem:[%s1 + $0x340] sm:$0xf]
  %v300 = vld [vmem:[%s1 + $0x344] sm:$0xf]
  %v301 = vld [vmem:[%s1 + $0x348] sm:$0xf]
  %v302 = vld [vmem:[%s1 + $0x34c] sm:$0xf]
  %v303 = vld [vmem:[%s1 + $0x350] sm:$0xf]
  %v304 = vld [vmem:[%s1 + $0x354] sm:$0xf]
  %v305 = vld [vmem:[%s1 + $0x358] sm:$0xf]
  %v306 = vld [vmem:[%s1 + $0x35c] sm:$0xf]
  %v363 = vunpack.c.l.b16 %v35
  %v364 = vunpack.c.h.b16 %v35
  %v365 = vunpack.c.l.b16 %v36
  %v366 = vunpack.c.h.b16 %v36
  %v367 = vunpack.c.l.b16 %v37
  %v368 = vunpack.c.h.b16 %v37
  %v369 = vunpack.c.l.b16 %v38
  %v370 = vunpack.c.h.b16 %v38
  %v371 = vunpack.c.l.b16 %v39
  %v372 = vunpack.c.h.b16 %v39
  %v373 = vunpack.c.l.b16 %v40
  %v374 = vunpack.c.h.b16 %v40
  %v375 = vunpack.c.l.b16 %v41
  %v376 = vunpack.c.h.b16 %v41
  %v377 = vunpack.c.l.b16 %v42
  %v378 = vunpack.c.h.b16 %v42
  %v379 = vunpack.c.l.b16 %v43
  %v380 = vunpack.c.h.b16 %v43
  %v381 = vunpack.c.l.b16 %v44
  %v382 = vunpack.c.h.b16 %v44
  %v383 = vunpack.c.l.b16 %v45
  %v384 = vunpack.c.h.b16 %v45
  %v385 = vunpack.c.l.b16 %v46
  %v386 = vunpack.c.h.b16 %v46
  %v387 = vunpack.c.l.b16 %v47
  %v388 = vunpack.c.h.b16 %v47
  %v389 = vunpack.c.l.b16 %v48
  %v390 = vunpack.c.h.b16 %v48
  %v391 = vunpack.c.l.b16 %v49
  %v392 = vunpack.c.h.b16 %v49
  %v393 = vunpack.c.l.b16 %v50
  %v394 = vunpack.c.h.b16 %v50
  %v395 = vunpack.c.l.b16 %v51
  %v396 = vunpack.c.h.b16 %v51
  %v397 = vunpack.c.l.b16 %v52
  %v398 = vunpack.c.h.b16 %v52
  %v399 = vunpack.c.l.b16 %v53
  %v400 = vunpack.c.h.b16 %v53
  %v401 = vunpack.c.l.b16 %v54
  %v402 = vunpack.c.h.b16 %v54
  %v403 = vunpack.c.l.b16 %v55
  %v404 = vunpack.c.h.b16 %v55
  %v405 = vunpack.c.l.b16 %v56
  %v406 = vunpack.c.h.b16 %v56
  %v407 = vunpack.c.l.b16 %v57
  %v408 = vunpack.c.h.b16 %v57
  %v409 = vunpack.c.l.b16 %v58
  %v410 = vunpack.c.h.b16 %v58
  %v411 = vunpack.c.l.b16 %v59
  %v412 = vunpack.c.h.b16 %v59
  %v413 = vunpack.c.l.b16 %v60
  %v414 = vunpack.c.h.b16 %v60
  %v415 = vunpack.c.l.b16 %v61
  %v416 = vunpack.c.h.b16 %v61
  %v417 = vunpack.c.l.b16 %v62
  %v418 = vunpack.c.h.b16 %v62
  %v419 = vunpack.c.l.b16 %v63
  %v420 = vunpack.c.h.b16 %v63
  %v421 = vunpack.c.l.b16 %v64
  %v422 = vunpack.c.h.b16 %v64
  %v423 = vunpack.c.l.b16 %v65
  %v424 = vunpack.c.h.b16 %v65
  %v425 = vunpack.c.l.b16 %v66
  %v426 = vunpack.c.h.b16 %v66
  %v427 = vunpack.c.l.b16 %v67
  %v428 = vunpack.c.h.b16 %v67
  %v429 = vunpack.c.l.b16 %v68
  %v430 = vunpack.c.h.b16 %v68
  %v431 = vunpack.c.l.b16 %v69
  %v432 = vunpack.c.h.b16 %v69
  %v433 = vunpack.c.l.b16 %v70
  %v434 = vunpack.c.h.b16 %v70
  %v435 = vunpack.c.l.b16 %v71
  %v436 = vunpack.c.h.b16 %v71
  %v437 = vunpack.c.l.b16 %v72
  %v438 = vunpack.c.h.b16 %v72
  %v439 = vunpack.c.l.b16 %v73
  %v440 = vunpack.c.h.b16 %v73
  %v441 = vunpack.c.l.b16 %v74
  %v442 = vunpack.c.h.b16 %v74
  %v443 = vunpack.c.l.b16 %v75
  %v444 = vunpack.c.h.b16 %v75
  %v445 = vunpack.c.l.b16 %v76
  %v446 = vunpack.c.h.b16 %v76
  %v447 = vunpack.c.l.b16 %v77
  %v448 = vunpack.c.h.b16 %v77
  %v449 = vunpack.c.l.b16 %v78
  %v450 = vunpack.c.h.b16 %v78
  %v451 = vunpack.c.l.b16 %v79
  %v452 = vunpack.c.h.b16 %v79
  %v453 = vunpack.c.l.b16 %v80
  %v454 = vunpack.c.h.b16 %v80
  %v455 = vunpack.c.l.b16 %v81
  %v456 = vunpack.c.h.b16 %v81
  %v457 = vunpack.c.l.b16 %v82
  %v458 = vunpack.c.h.b16 %v82
  %v459 = vunpack.c.l.b16 %v83
  %v460 = vunpack.c.h.b16 %v83
  %v461 = vunpack.c.l.b16 %v84
  %v462 = vunpack.c.h.b16 %v84
  %v463 = vunpack.c.l.b16 %v85
  %v464 = vunpack.c.h.b16 %v85
  %v465 = vunpack.c.l.b16 %v86
  %v466 = vunpack.c.h.b16 %v86
  %v467 = vunpack.c.l.b16 %v87
  %v468 = vunpack.c.h.b16 %v87
  %v469 = vunpack.c.l.b16 %v88
  %v470 = vunpack.c.h.b16 %v88
  %v471 = vunpack.c.l.b16 %v89
  %v472 = vunpack.c.h.b16 %v89
  %v473 = vunpack.c.l.b16 %v90
  %v474 = vunpack.c.h.b16 %v90
  %v475 = vpack.c.b16 %v377, %v363
  %v476 = vpack.c.b16 %v378, %v364
  %v477 = vpack.c.b16 %v379, %v365
  %v478 = vpack.c.b16 %v380, %v366
  %v479 = vpack.c.b16 %v381, %v367
  %v480 = vpack.c.b16 %v382, %v368
  %v481 = vpack.c.b16 %v383, %v369
  %v482 = vpack.c.b16 %v384, %v370
  %v483 = vpack.c.b16 %v385, %v371
  %v484 = vpack.c.b16 %v386, %v372
  %v485 = vpack.c.b16 %v387, %v373
  %v486 = vpack.c.b16 %v388, %v374
  %v487 = vpack.c.b16 %v389, %v375
  %v488 = vpack.c.b16 %v390, %v376
  %v489 = vpack.c.b16 %v405, %v391
  %v490 = vpack.c.b16 %v406, %v392
  %v491 = vpack.c.b16 %v407, %v393
  %v492 = vpack.c.b16 %v408, %v394
  %v493 = vpack.c.b16 %v409, %v395
  %v494 = vpack.c.b16 %v410, %v396
  %v495 = vpack.c.b16 %v411, %v397
  %v496 = vpack.c.b16 %v412, %v398
  %v497 = vpack.c.b16 %v413, %v399
  %v498 = vpack.c.b16 %v414, %v400
  %v499 = vpack.c.b16 %v415, %v401
  %v500 = vpack.c.b16 %v416, %v402
  %v501 = vpack.c.b16 %v417, %v403
  %v502 = vpack.c.b16 %v418, %v404
  %v503 = vpack.c.b16 %v433, %v419
  %v504 = vpack.c.b16 %v434, %v420
  %v505 = vpack.c.b16 %v435, %v421
  %v506 = vpack.c.b16 %v436, %v422
  %v507 = vpack.c.b16 %v437, %v423
  %v508 = vpack.c.b16 %v438, %v424
  %v509 = vpack.c.b16 %v439, %v425
  %v510 = vpack.c.b16 %v440, %v426
  %v511 = vpack.c.b16 %v441, %v427
  %v512 = vpack.c.b16 %v442, %v428
  %v513 = vpack.c.b16 %v443, %v429
  %v514 = vpack.c.b16 %v444, %v430
  %v515 = vpack.c.b16 %v445, %v431
  %v516 = vpack.c.b16 %v446, %v432
  %v517 = vpack.c.b16 %v461, %v447
  %v518 = vpack.c.b16 %v462, %v448
  %v519 = vpack.c.b16 %v463, %v449
  %v520 = vpack.c.b16 %v464, %v450
  %v521 = vpack.c.b16 %v465, %v451
  %v522 = vpack.c.b16 %v466, %v452
  %v523 = vpack.c.b16 %v467, %v453
  %v524 = vpack.c.b16 %v468, %v454
  %v525 = vpack.c.b16 %v469, %v455
  %v526 = vpack.c.b16 %v470, %v456
  %v527 = vpack.c.b16 %v471, %v457
  %v528 = vpack.c.b16 %v472, %v458
  %v529 = vpack.c.b16 %v473, %v459
  %v530 = vpack.c.b16 %v474, %v460
  %v799 = vunpack.c.l.b16 %v91
  %v800 = vunpack.c.l.b16 %v92
  %v801 = vunpack.c.l.b16 %v93
  %v802 = vunpack.c.l.b16 %v94
  %v803 = vunpack.c.l.b16 %v95
  %v804 = vunpack.c.l.b16 %v96
  %v805 = vunpack.c.l.b16 %v97
  %v806 = vunpack.c.l.b16 %v98
  %v807 = vunpack.c.l.b16 %v99
  %v808 = vunpack.c.l.b16 %v100
  %v809 = vunpack.c.l.b16 %v101
  %v810 = vunpack.c.l.b16 %v102
  %v811 = vunpack.c.l.b16 %v103
  %v812 = vunpack.c.l.b16 %v104
  %v813 = vunpack.c.l.b16 %v105
  %v814 = vunpack.c.l.b16 %v106
  %v815 = vunpack.c.l.b16 %v107
  %v816 = vunpack.c.l.b16 %v108
  %v817 = vunpack.c.l.b16 %v109
  %v818 = vunpack.c.l.b16 %v110
  %v819 = vunpack.c.l.b16 %v111
  %v820 = vunpack.c.l.b16 %v112
  %v821 = vunpack.c.l.b16 %v113
  %v822 = vunpack.c.l.b16 %v114
  %v823 = vunpack.c.l.b16 %v115
  %v824 = vunpack.c.l.b16 %v116
  %v825 = vunpack.c.l.b16 %v117
  %v826 = vunpack.c.l.b16 %v118
  %v827 = vunpack.c.l.b16 %v119
  %v828 = vunpack.c.l.b16 %v120
  %v829 = vunpack.c.l.b16 %v121
  %v830 = vunpack.c.l.b16 %v122
  %v831 = vunpack.c.l.b16 %v123
  %v832 = vunpack.c.l.b16 %v124
  %v833 = vunpack.c.l.b16 %v125
  %v834 = vunpack.c.l.b16 %v126
  %v835 = vunpack.c.l.b16 %v127
  %v836 = vunpack.c.l.b16 %v128
  %v837 = vunpack.c.l.b16 %v129
  %v838 = vunpack.c.l.b16 %v130
  %v839 = vunpack.c.l.b16 %v131
  %v840 = vunpack.c.l.b16 %v132
  %v841 = vunpack.c.l.b16 %v133
  %v842 = vunpack.c.l.b16 %v134
  %v843 = vunpack.c.l.b16 %v135
  %v844 = vunpack.c.l.b16 %v136
  %v845 = vunpack.c.l.b16 %v137
  %v846 = vunpack.c.l.b16 %v138
  %v847 = vunpack.c.l.b16 %v139
  %v848 = vunpack.c.l.b16 %v140
  %v849 = vunpack.c.l.b16 %v141
  %v850 = vunpack.c.l.b16 %v142
  %v851 = vunpack.c.l.b16 %v143
  %v852 = vunpack.c.l.b16 %v144
  %v853 = vunpack.c.l.b16 %v145
  %v854 = vunpack.c.l.b16 %v146
  %v855 = vunpack.c.l.b16 %v147
  %v856 = vunpack.c.l.b16 %v148
  %v857 = vunpack.c.l.b16 %v149
  %v858 = vunpack.c.l.b16 %v150
  %v859 = vunpack.c.l.b16 %v151
  %v860 = vunpack.c.l.b16 %v152
  %v861 = vunpack.c.l.b16 %v153
  %v862 = vunpack.c.l.b16 %v154
  %v863 = vunpack.c.l.b16 %v155
  %v864 = vunpack.c.l.b16 %v156
  %v865 = vunpack.c.l.b16 %v157
  %v866 = vunpack.c.l.b16 %v158
  %v867 = vunpack.c.l.b16 %v159
  %v868 = vunpack.c.l.b16 %v160
  %v869 = vunpack.c.l.b16 %v161
  %v870 = vunpack.c.l.b16 %v162
  %v871 = vunpack.c.l.b16 %v163
  %v872 = vunpack.c.l.b16 %v164
  %v873 = vunpack.c.l.b16 %v165
  %v874 = vunpack.c.l.b16 %v166
  %v875 = vunpack.c.l.b16 %v167
  %v876 = vunpack.c.l.b16 %v168
  %v877 = vunpack.c.l.b16 %v169
  %v878 = vunpack.c.l.b16 %v170
  %v879 = vunpack.c.l.b16 %v171
  %v880 = vunpack.c.l.b16 %v172
  %v881 = vunpack.c.l.b16 %v173
  %v882 = vunpack.c.l.b16 %v174
  %v883 = vunpack.c.l.b16 %v175
  %v884 = vunpack.c.l.b16 %v176
  %v885 = vunpack.c.l.b16 %v177
  %v886 = vunpack.c.l.b16 %v178
  %v887 = vunpack.c.l.b16 %v179
  %v888 = vunpack.c.l.b16 %v180
  %v889 = vunpack.c.l.b16 %v181
  %v890 = vunpack.c.l.b16 %v182
  %v891 = vunpack.c.l.b16 %v183
  %v892 = vunpack.c.l.b16 %v184
  %v893 = vunpack.c.l.b16 %v185
  %v894 = vunpack.c.l.b16 %v186
  %v895 = vunpack.c.l.b16 %v187
  %v896 = vunpack.c.l.b16 %v188
  %v897 = vunpack.c.l.b16 %v189
  %v898 = vunpack.c.l.b16 %v190
  %v899 = vunpack.c.l.b16 %v191
  %v900 = vunpack.c.l.b16 %v192
  %v901 = vunpack.c.l.b16 %v193
  %v902 = vunpack.c.l.b16 %v194
  %v903 = vunpack.c.l.b16 %v195
  %v904 = vunpack.c.l.b16 %v196
  %v905 = vunpack.c.l.b16 %v197
  %v906 = vunpack.c.l.b16 %v198
  %v907 = vunpack.c.l.b16 %v199
  %v908 = vunpack.c.l.b16 %v200
  %v909 = vunpack.c.l.b16 %v201
  %v910 = vunpack.c.l.b16 %v202
  %v911 = vunpack.c.l.b16 %v203
  %v912 = vunpack.c.l.b16 %v204
  %v913 = vunpack.c.l.b16 %v205
  %v914 = vunpack.c.l.b16 %v206
  %v915 = vunpack.c.l.b16 %v207
  %v916 = vunpack.c.l.b16 %v208
  %v917 = vunpack.c.l.b16 %v209
  %v918 = vunpack.c.l.b16 %v210
  %v919 = vunpack.c.l.b16 %v211
  %v920 = vunpack.c.l.b16 %v212
  %v921 = vunpack.c.l.b16 %v213
  %v922 = vunpack.c.l.b16 %v214
  %v923 = vunpack.c.l.b16 %v215
  %v924 = vunpack.c.l.b16 %v216
  %v925 = vunpack.c.l.b16 %v217
  %v926 = vunpack.c.l.b16 %v218
  %v927 = vunpack.c.l.b16 %v219
  %v928 = vunpack.c.l.b16 %v220
  %v929 = vunpack.c.l.b16 %v221
  %v930 = vunpack.c.l.b16 %v222
  %v931 = vunpack.c.l.b16 %v223
  %v932 = vunpack.c.l.b16 %v224
  %v933 = vunpack.c.l.b16 %v225
  %v934 = vunpack.c.l.b16 %v226
  %v935 = vunpack.c.l.b16 %v227
  %v936 = vunpack.c.l.b16 %v228
  %v937 = vunpack.c.l.b16 %v229
  %v938 = vunpack.c.l.b16 %v230
  %v939 = vunpack.c.l.b16 %v231
  %v940 = vunpack.c.l.b16 %v232
  %v941 = vunpack.c.l.b16 %v233
  %v942 = vunpack.c.l.b16 %v234
  %v943 = vunpack.c.l.b16 %v235
  %v944 = vunpack.c.l.b16 %v236
  %v945 = vunpack.c.l.b16 %v237
  %v946 = vunpack.c.l.b16 %v238
  %v947 = vunpack.c.l.b16 %v239
  %v948 = vunpack.c.l.b16 %v240
  %v949 = vunpack.c.l.b16 %v241
  %v950 = vunpack.c.l.b16 %v242
  %v951 = vunpack.c.l.b16 %v243
  %v952 = vunpack.c.l.b16 %v244
  %v953 = vunpack.c.l.b16 %v245
  %v954 = vunpack.c.l.b16 %v246
  %v955 = vunpack.c.l.b16 %v247
  %v956 = vunpack.c.l.b16 %v248
  %v957 = vunpack.c.l.b16 %v249
  %v958 = vunpack.c.l.b16 %v250
  %v959 = vunpack.c.l.b16 %v251
  %v960 = vunpack.c.l.b16 %v252
  %v961 = vunpack.c.l.b16 %v253
  %v962 = vunpack.c.l.b16 %v254
  %v963 = vunpack.c.l.b16 %v255
  %v964 = vunpack.c.l.b16 %v256
  %v965 = vunpack.c.l.b16 %v257
  %v966 = vunpack.c.l.b16 %v258
  %v967 = vunpack.c.l.b16 %v259
  %v968 = vunpack.c.l.b16 %v260
  %v969 = vunpack.c.l.b16 %v261
  %v970 = vunpack.c.l.b16 %v262
  %v971 = vunpack.c.l.b16 %v263
  %v972 = vunpack.c.l.b16 %v264
  %v973 = vunpack.c.l.b16 %v265
  %v974 = vunpack.c.l.b16 %v266
  %v975 = vunpack.c.l.b16 %v267
  %v976 = vunpack.c.l.b16 %v268
  %v977 = vunpack.c.l.b16 %v269
  %v978 = vunpack.c.l.b16 %v270
  %v979 = vunpack.c.l.b16 %v271
  %v980 = vunpack.c.l.b16 %v272
  %v981 = vunpack.c.l.b16 %v273
  %v982 = vunpack.c.l.b16 %v274
  %v983 = vunpack.c.l.b16 %v275
  %v984 = vunpack.c.l.b16 %v276
  %v985 = vunpack.c.l.b16 %v277
  %v986 = vunpack.c.l.b16 %v278
  %v987 = vunpack.c.l.b16 %v279
  %v988 = vunpack.c.l.b16 %v280
  %v989 = vunpack.c.l.b16 %v281
  %v990 = vunpack.c.l.b16 %v282
  %v991 = vunpack.c.l.b16 %v283
  %v992 = vunpack.c.l.b16 %v284
  %v993 = vunpack.c.l.b16 %v285
  %v994 = vunpack.c.l.b16 %v286
  %v995 = vunpack.c.l.b16 %v287
  %v996 = vunpack.c.l.b16 %v288
  %v997 = vunpack.c.l.b16 %v289
  %v998 = vunpack.c.l.b16 %v290
  %v999 = vunpack.c.l.b16 %v291
  %v1000 = vunpack.c.l.b16 %v292
  %v1001 = vunpack.c.l.b16 %v293
  %v1002 = vunpack.c.l.b16 %v294
  %v1003 = vunpack.c.l.b16 %v295
  %v1004 = vunpack.c.l.b16 %v296
  %v1005 = vunpack.c.l.b16 %v297
  %v1006 = vunpack.c.l.b16 %v298
  %v1007 = vunpack.c.l.b16 %v299
  %v1008 = vunpack.c.l.b16 %v300
  %v1009 = vunpack.c.l.b16 %v301
  %v1010 = vunpack.c.l.b16 %v302
  %v1011 = vunpack.c.l.b16 %v303
  %v1012 = vunpack.c.l.b16 %v304
  %v1013 = vunpack.c.l.b16 %v305
  %v1014 = vunpack.c.l.b16 %v306
  %v1015 = vpack.c.b16 %v800, %v799
  %v1016 = vpack.c.b16 %v802, %v801
  %v1017 = vpack.c.b16 %v804, %v803
  %v1018 = vpack.c.b16 %v806, %v805
  %v1019 = vpack.c.b16 %v808, %v807
  %v1020 = vpack.c.b16 %v810, %v809
  %v1021 = vpack.c.b16 %v812, %v811
  %v1022 = vpack.c.b16 %v814, %v813
  %v1023 = vpack.c.b16 %v816, %v815
  %v1024 = vpack.c.b16 %v818, %v817
  %v1025 = vpack.c.b16 %v820, %v819
  %v1026 = vpack.c.b16 %v822, %v821
  %v1027 = vpack.c.b16 %v824, %v823
  %v1028 = vpack.c.b16 %v826, %v825
  %v1029 = vpack.c.b16 %v828, %v827
  %v1030 = vpack.c.b16 %v830, %v829
  %v1031 = vpack.c.b16 %v832, %v831
  %v1032 = vpack.c.b16 %v834, %v833
  %v1033 = vpack.c.b16 %v836, %v835
  %v1034 = vpack.c.b16 %v838, %v837
  %v1035 = vpack.c.b16 %v840, %v839
  %v1036 = vpack.c.b16 %v842, %v841
  %v1037 = vpack.c.b16 %v844, %v843
  %v1038 = vpack.c.b16 %v846, %v845
  %v1039 = vpack.c.b16 %v848, %v847
  %v1040 = vpack.c.b16 %v850, %v849
  %v1041 = vpack.c.b16 %v852, %v851
  %v1042 = vpack.c.b16 %v854, %v853
  %v1043 = vpack.c.b16 %v856, %v855
  %v1044 = vpack.c.b16 %v858, %v857
  %v1045 = vpack.c.b16 %v860, %v859
  %v1046 = vpack.c.b16 %v862, %v861
  %v1047 = vpack.c.b16 %v864, %v863
  %v1048 = vpack.c.b16 %v866, %v865
  %v1049 = vpack.c.b16 %v868, %v867
  %v1050 = vpack.c.b16 %v870, %v869
  %v1051 = vpack.c.b16 %v872, %v871
  %v1052 = vpack.c.b16 %v874, %v873
  %v1053 = vpack.c.b16 %v876, %v875
  %v1054 = vpack.c.b16 %v878, %v877
  %v1055 = vpack.c.b16 %v880, %v879
  %v1056 = vpack.c.b16 %v882, %v881
  %v1057 = vpack.c.b16 %v884, %v883
  %v1058 = vpack.c.b16 %v886, %v885
  %v1059 = vpack.c.b16 %v888, %v887
  %v1060 = vpack.c.b16 %v890, %v889
  %v1061 = vpack.c.b16 %v892, %v891
  %v1062 = vpack.c.b16 %v894, %v893
  %v1063 = vpack.c.b16 %v896, %v895
  %v1064 = vpack.c.b16 %v898, %v897
  %v1065 = vpack.c.b16 %v900, %v899
  %v1066 = vpack.c.b16 %v902, %v901
  %v1067 = vpack.c.b16 %v904, %v903
  %v1068 = vpack.c.b16 %v906, %v905
  %v1069 = vpack.c.b16 %v908, %v907
  %v1070 = vpack.c.b16 %v910, %v909
  %v1071 = vpack.c.b16 %v912, %v911
  %v1072 = vpack.c.b16 %v914, %v913
  %v1073 = vpack.c.b16 %v916, %v915
  %v1074 = vpack.c.b16 %v918, %v917
  %v1075 = vpack.c.b16 %v920, %v919
  %v1076 = vpack.c.b16 %v922, %v921
  %v1077 = vpack.c.b16 %v924, %v923
  %v1078 = vpack.c.b16 %v926, %v925
  %v1079 = vpack.c.b16 %v928, %v927
  %v1080 = vpack.c.b16 %v930, %v929
  %v1081 = vpack.c.b16 %v932, %v931
  %v1082 = vpack.c.b16 %v934, %v933
  %v1083 = vpack.c.b16 %v936, %v935
  %v1084 = vpack.c.b16 %v938, %v937
  %v1085 = vpack.c.b16 %v940, %v939
  %v1086 = vpack.c.b16 %v942, %v941
  %v1087 = vpack.c.b16 %v944, %v943
  %v1088 = vpack.c.b16 %v946, %v945
  %v1089 = vpack.c.b16 %v948, %v947
  %v1090 = vpack.c.b16 %v950, %v949
  %v1091 = vpack.c.b16 %v952, %v951
  %v1092 = vpack.c.b16 %v954, %v953
  %v1093 = vpack.c.b16 %v956, %v955
  %v1094 = vpack.c.b16 %v958, %v957
  %v1095 = vpack.c.b16 %v960, %v959
  %v1096 = vpack.c.b16 %v962, %v961
  %v1097 = vpack.c.b16 %v964, %v963
  %v1098 = vpack.c.b16 %v966, %v965
  %v1099 = vpack.c.b16 %v968, %v967
  %v1100 = vpack.c.b16 %v970, %v969
  %v1101 = vpack.c.b16 %v972, %v971
  %v1102 = vpack.c.b16 %v974, %v973
  %v1103 = vpack.c.b16 %v976, %v975
  %v1104 = vpack.c.b16 %v978, %v977
  %v1105 = vpack.c.b16 %v980, %v979
  %v1106 = vpack.c.b16 %v982, %v981
  %v1107 = vpack.c.b16 %v984, %v983
  %v1108 = vpack.c.b16 %v986, %v985
  %v1109 = vpack.c.b16 %v988, %v987
  %v1110 = vpack.c.b16 %v990, %v989
  %v1111 = vpack.c.b16 %v992, %v991
  %v1112 = vpack.c.b16 %v994, %v993
  %v1113 = vpack.c.b16 %v996, %v995
  %v1114 = vpack.c.b16 %v998, %v997
  %v1115 = vpack.c.b16 %v1000, %v999
  %v1116 = vpack.c.b16 %v1002, %v1001
  %v1117 = vpack.c.b16 %v1004, %v1003
  %v1118 = vpack.c.b16 %v1006, %v1005
  %v1119 = vpack.c.b16 %v1008, %v1007
  %v1120 = vpack.c.b16 %v1010, %v1009
  %v1121 = vpack.c.b16 %v1012, %v1011
  %v1122 = vpack.c.b16 %v1014, %v1013
  %vm1231 = vcmask 523264
  %v1233 = vsel %vm1231, %v488, 0
  %v1236 = vsel %vm1231, %v502, 0
  %v1239 = vsel %vm1231, %v516, 0
  %v1242 = vsel %vm1231, %v530, 0
  %1244 = vmatprep.subr.bf16.mxu0 0
  %1245 = vmatpush1.bf16.msra.mxu0 %v1022
  %1246 = vmatprep.subr.bf16.mxu0 0
  %1247 = vmatpush1.bf16.msra.mxu0 %v1021
  %1248 = vmatprep.subr.bf16.mxu0 0
  %1249 = vmatpush1.bf16.msra.mxu0 %v1020
  %1250 = vmatprep.subr.bf16.mxu0 0
  %1251 = vmatpush1.bf16.msra.mxu0 %v1019
  %1252 = vmatprep.subr.bf16.mxu0 0
  %1253 = vmatpush1.bf16.msra.mxu0 %v1018
  %1254 = vmatprep.subr.bf16.mxu0 0
  %1255 = vmatpush1.bf16.msra.mxu0 %v1017
  %1256 = vmatprep.subr.bf16.mxu0 0
  %1257 = vmatpush1.bf16.msra.mxu0 %v1016
  %1258 = vmatprep.subr.bf16.mxu0 0
  %1259 = vmatpush1.bf16.msra.mxu0 %v1015
  %1260 = vmatprep.subr.bf16.mxu0 0
  %1261 = vmatpush2.bf16.msra.mxu0 %v1030
  %1262 = vmatprep.subr.bf16.mxu0 0
  %1263 = vmatpush2.bf16.msra.mxu0 %v1029
  %1264 = vmatprep.subr.bf16.mxu0 0
  %1265 = vmatpush2.bf16.msra.mxu0 %v1028
  %1266 = vmatprep.subr.bf16.mxu0 0
  %1267 = vmatpush2.bf16.msra.mxu0 %v1027
  %1268 = vmatprep.subr.bf16.mxu0 0
  %1269 = vmatpush2.bf16.msra.mxu0 %v1026
  %1270 = vmatprep.subr.bf16.mxu0 0
  %1271 = vmatpush2.bf16.msra.mxu0 %v1025
  %1272 = vmatprep.subr.bf16.mxu0 0
  %1273 = vmatpush2.bf16.msra.mxu0 %v1024
  %1274 = vmatprep.subr.bf16.mxu0 0
  %1275 = vmatpush2.bf16.msra.mxu0 %v1023
  %1276 = vmatprep.mubr.bf16.mxu0 %v476
  %1277 = vmatmul.mubr.bf16.gmra.mxu0 %v475
  %v1278 = vpop.f32.mrf.mxu0
  %v1279 = vadd.f32 0.0, %v1278
  %v1280 = vpop.f32.mrf.mxu0
  %v1281 = vpop.f32.mrf.mxu0
  %v1282 = vadd.f32 0.0, %v1281
  %v1283 = vpop.f32.mrf.mxu0
  %1284 = vmatprep.mubr.bf16.mxu0 %v490
  %1285 = vmatmul.mubr.bf16.gmra.mxu0 %v489
  %v1286 = vpop.f32.mrf.mxu0
  %v1287 = vadd.f32 0.0, %v1286
  %v1288 = vpop.f32.mrf.mxu0
  %v1289 = vpop.f32.mrf.mxu0
  %v1290 = vadd.f32 0.0, %v1289
  %v1291 = vpop.f32.mrf.mxu0
  %1292 = vmatprep.mubr.bf16.mxu0 %v504
  %1293 = vmatmul.mubr.bf16.gmra.mxu0 %v503
  %v1294 = vpop.f32.mrf.mxu0
  %v1295 = vadd.f32 0.0, %v1294
  %v1296 = vpop.f32.mrf.mxu0
  %v1297 = vpop.f32.mrf.mxu0
  %v1298 = vadd.f32 0.0, %v1297
  %v1299 = vpop.f32.mrf.mxu0
  %1300 = vmatprep.mubr.bf16.mxu0 %v518
  %1301 = vmatmul.mubr.bf16.gmra.mxu0 %v517
  %v1302 = vpop.f32.mrf.mxu0
  %v1303 = vadd.f32 0.0, %v1302
  %v1304 = vpop.f32.mrf.mxu0
  %v1305 = vpop.f32.mrf.mxu0
  %v1306 = vadd.f32 0.0, %v1305
  %v1307 = vpop.f32.mrf.mxu0
  %1308 = vdwg.mxu0
  %1309 = vmatprep.subr.bf16.mxu0 0
  %1310 = vmatpush1.bf16.msra.mxu0 %v1038
  %1311 = vmatprep.subr.bf16.mxu0 0
  %1312 = vmatpush1.bf16.msra.mxu0 %v1037
  %1313 = vmatprep.subr.bf16.mxu0 0
  %1314 = vmatpush1.bf16.msra.mxu0 %v1036
  %1315 = vmatprep.subr.bf16.mxu0 0
  %1316 = vmatpush1.bf16.msra.mxu0 %v1035
  %1317 = vmatprep.subr.bf16.mxu0 0
  %1318 = vmatpush1.bf16.msra.mxu0 %v1034
  %1319 = vmatprep.subr.bf16.mxu0 0
  %1320 = vmatpush1.bf16.msra.mxu0 %v1033
  %1321 = vmatprep.subr.bf16.mxu0 0
  %1322 = vmatpush1.bf16.msra.mxu0 %v1032
  %1323 = vmatprep.subr.bf16.mxu0 0
  %1324 = vmatpush1.bf16.msra.mxu0 %v1031
  %1325 = vmatprep.subr.bf16.mxu0 0
  %1326 = vmatpush2.bf16.msra.mxu0 %v1046
  %1327 = vmatprep.subr.bf16.mxu0 0
  %1328 = vmatpush2.bf16.msra.mxu0 %v1045
  %1329 = vmatprep.subr.bf16.mxu0 0
  %1330 = vmatpush2.bf16.msra.mxu0 %v1044
  %1331 = vmatprep.subr.bf16.mxu0 0
  %1332 = vmatpush2.bf16.msra.mxu0 %v1043
  %1333 = vmatprep.subr.bf16.mxu0 0
  %1334 = vmatpush2.bf16.msra.mxu0 %v1042
  %1335 = vmatprep.subr.bf16.mxu0 0
  %1336 = vmatpush2.bf16.msra.mxu0 %v1041
  %1337 = vmatprep.subr.bf16.mxu0 0
  %1338 = vmatpush2.bf16.msra.mxu0 %v1040
  %1339 = vmatprep.subr.bf16.mxu0 0
  %1340 = vmatpush2.bf16.msra.mxu0 %v1039
  %1341 = vmatprep.mubr.bf16.mxu0 %v478
  %1342 = vmatmul.mubr.bf16.gmra.mxu0 %v477
  %v1343 = vpop.f32.mrf.mxu0
  %v1344 = vadd.f32 %v1279, %v1343
  %v1345 = vpop.f32.mrf.mxu0
  %v1346 = vpop.f32.mrf.mxu0
  %v1347 = vadd.f32 %v1282, %v1346
  %v1348 = vpop.f32.mrf.mxu0
  %1349 = vmatprep.mubr.bf16.mxu0 %v492
  %1350 = vmatmul.mubr.bf16.gmra.mxu0 %v491
  %v1351 = vpop.f32.mrf.mxu0
  %v1352 = vadd.f32 %v1287, %v1351
  %v1353 = vpop.f32.mrf.mxu0
  %v1354 = vpop.f32.mrf.mxu0
  %v1355 = vadd.f32 %v1290, %v1354
  %v1356 = vpop.f32.mrf.mxu0
  %1357 = vmatprep.mubr.bf16.mxu0 %v506
  %1358 = vmatmul.mubr.bf16.gmra.mxu0 %v505
  %v1359 = vpop.f32.mrf.mxu0
  %v1360 = vadd.f32 %v1295, %v1359
  %v1361 = vpop.f32.mrf.mxu0
  %v1362 = vpop.f32.mrf.mxu0
  %v1363 = vadd.f32 %v1298, %v1362
  %v1364 = vpop.f32.mrf.mxu0
  %1365 = vmatprep.mubr.bf16.mxu0 %v520
  %1366 = vmatmul.mubr.bf16.gmra.mxu0 %v519
  %v1367 = vpop.f32.mrf.mxu0
  %v1368 = vadd.f32 %v1303, %v1367
  %v1369 = vpop.f32.mrf.mxu0
  %v1370 = vpop.f32.mrf.mxu0
  %v1371 = vadd.f32 %v1306, %v1370
  %v1372 = vpop.f32.mrf.mxu0
  %1373 = vdwg.mxu0
  %1374 = vmatprep.subr.bf16.mxu0 0
  %1375 = vmatpush1.bf16.msra.mxu0 %v1054
  %1376 = vmatprep.subr.bf16.mxu0 0
  %1377 = vmatpush1.bf16.msra.mxu0 %v1053
  %1378 = vmatprep.subr.bf16.mxu0 0
  %1379 = vmatpush1.bf16.msra.mxu0 %v1052
  %1380 = vmatprep.subr.bf16.mxu0 0
  %1381 = vmatpush1.bf16.msra.mxu0 %v1051
  %1382 = vmatprep.subr.bf16.mxu0 0
  %1383 = vmatpush1.bf16.msra.mxu0 %v1050
  %1384 = vmatprep.subr.bf16.mxu0 0
  %1385 = vmatpush1.bf16.msra.mxu0 %v1049
  %1386 = vmatprep.subr.bf16.mxu0 0
  %1387 = vmatpush1.bf16.msra.mxu0 %v1048
  %1388 = vmatprep.subr.bf16.mxu0 0
  %1389 = vmatpush1.bf16.msra.mxu0 %v1047
  %1390 = vmatprep.subr.bf16.mxu0 0
  %1391 = vmatpush2.bf16.msra.mxu0 %v1062
  %1392 = vmatprep.subr.bf16.mxu0 0
  %1393 = vmatpush2.bf16.msra.mxu0 %v1061
  %1394 = vmatprep.subr.bf16.mxu0 0
  %1395 = vmatpush2.bf16.msra.mxu0 %v1060
  %1396 = vmatprep.subr.bf16.mxu0 0
  %1397 = vmatpush2.bf16.msra.mxu0 %v1059
  %1398 = vmatprep.subr.bf16.mxu0 0
  %1399 = vmatpush2.bf16.msra.mxu0 %v1058
  %1400 = vmatprep.subr.bf16.mxu0 0
  %1401 = vmatpush2.bf16.msra.mxu0 %v1057
  %1402 = vmatprep.subr.bf16.mxu0 0
  %1403 = vmatpush2.bf16.msra.mxu0 %v1056
  %1404 = vmatprep.subr.bf16.mxu0 0
  %1405 = vmatpush2.bf16.msra.mxu0 %v1055
  %1406 = vmatprep.mubr.bf16.mxu0 %v480
  %1407 = vmatmul.mubr.bf16.gmra.mxu0 %v479
  %v1408 = vpop.f32.mrf.mxu0
  %v1409 = vadd.f32 %v1344, %v1408
  %v1410 = vpop.f32.mrf.mxu0
  %v1411 = vpop.f32.mrf.mxu0
  %v1412 = vadd.f32 %v1347, %v1411
  %v1413 = vpop.f32.mrf.mxu0
  %1414 = vmatprep.mubr.bf16.mxu0 %v494
  %1415 = vmatmul.mubr.bf16.gmra.mxu0 %v493
  %v1416 = vpop.f32.mrf.mxu0
  %v1417 = vadd.f32 %v1352, %v1416
  %v1418 = vpop.f32.mrf.mxu0
  %v1419 = vpop.f32.mrf.mxu0
  %v1420 = vadd.f32 %v1355, %v1419
  %v1421 = vpop.f32.mrf.mxu0
  %1422 = vmatprep.mubr.bf16.mxu0 %v508
  %1423 = vmatmul.mubr.bf16.gmra.mxu0 %v507
  %v1424 = vpop.f32.mrf.mxu0
  %v1425 = vadd.f32 %v1360, %v1424
  %v1426 = vpop.f32.mrf.mxu0
  %v1427 = vpop.f32.mrf.mxu0
  %v1428 = vadd.f32 %v1363, %v1427
  %v1429 = vpop.f32.mrf.mxu0
  %1430 = vmatprep.mubr.bf16.mxu0 %v522
  %1431 = vmatmul.mubr.bf16.gmra.mxu0 %v521
  %v1432 = vpop.f32.mrf.mxu0
  %v1433 = vadd.f32 %v1368, %v1432
  %v1434 = vpop.f32.mrf.mxu0
  %v1435 = vpop.f32.mrf.mxu0
  %v1436 = vadd.f32 %v1371, %v1435
  %v1437 = vpop.f32.mrf.mxu0
  %1438 = vdwg.mxu0
  %1439 = vmatprep.subr.bf16.mxu0 0
  %1440 = vmatpush1.bf16.msra.mxu0 %v1070
  %1441 = vmatprep.subr.bf16.mxu0 0
  %1442 = vmatpush1.bf16.msra.mxu0 %v1069
  %1443 = vmatprep.subr.bf16.mxu0 0
  %1444 = vmatpush1.bf16.msra.mxu0 %v1068
  %1445 = vmatprep.subr.bf16.mxu0 0
  %1446 = vmatpush1.bf16.msra.mxu0 %v1067
  %1447 = vmatprep.subr.bf16.mxu0 0
  %1448 = vmatpush1.bf16.msra.mxu0 %v1066
  %1449 = vmatprep.subr.bf16.mxu0 0
  %1450 = vmatpush1.bf16.msra.mxu0 %v1065
  %1451 = vmatprep.subr.bf16.mxu0 0
  %1452 = vmatpush1.bf16.msra.mxu0 %v1064
  %1453 = vmatprep.subr.bf16.mxu0 0
  %1454 = vmatpush1.bf16.msra.mxu0 %v1063
  %1455 = vmatprep.subr.bf16.mxu0 0
  %1456 = vmatpush2.bf16.msra.mxu0 %v1078
  %1457 = vmatprep.subr.bf16.mxu0 0
  %1458 = vmatpush2.bf16.msra.mxu0 %v1077
  %1459 = vmatprep.subr.bf16.mxu0 0
  %1460 = vmatpush2.bf16.msra.mxu0 %v1076
  %1461 = vmatprep.subr.bf16.mxu0 0
  %1462 = vmatpush2.bf16.msra.mxu0 %v1075
  %1463 = vmatprep.subr.bf16.mxu0 0
  %1464 = vmatpush2.bf16.msra.mxu0 %v1074
  %1465 = vmatprep.subr.bf16.mxu0 0
  %1466 = vmatpush2.bf16.msra.mxu0 %v1073
  %1467 = vmatprep.subr.bf16.mxu0 0
  %1468 = vmatpush2.bf16.msra.mxu0 %v1072
  %1469 = vmatprep.subr.bf16.mxu0 0
  %1470 = vmatpush2.bf16.msra.mxu0 %v1071
  %1471 = vmatprep.mubr.bf16.mxu0 %v482
  %1472 = vmatmul.mubr.bf16.gmra.mxu0 %v481
  %v1473 = vpop.f32.mrf.mxu0
  %v1474 = vadd.f32 %v1409, %v1473
  %v1475 = vpop.f32.mrf.mxu0
  %v1476 = vpop.f32.mrf.mxu0
  %v1477 = vadd.f32 %v1412, %v1476
  %v1478 = vpop.f32.mrf.mxu0
  %1479 = vmatprep.mubr.bf16.mxu0 %v496
  %1480 = vmatmul.mubr.bf16.gmra.mxu0 %v495
  %v1481 = vpop.f32.mrf.mxu0
  %v1482 = vadd.f32 %v1417, %v1481
  %v1483 = vpop.f32.mrf.mxu0
  %v1484 = vpop.f32.mrf.mxu0
  %v1485 = vadd.f32 %v1420, %v1484
  %v1486 = vpop.f32.mrf.mxu0
  %1487 = vmatprep.mubr.bf16.mxu0 %v510
  %1488 = vmatmul.mubr.bf16.gmra.mxu0 %v509
  %v1489 = vpop.f32.mrf.mxu0
  %v1490 = vadd.f32 %v1425, %v1489
  %v1491 = vpop.f32.mrf.mxu0
  %v1492 = vpop.f32.mrf.mxu0
  %v1493 = vadd.f32 %v1428, %v1492
  %v1494 = vpop.f32.mrf.mxu0
  %1495 = vmatprep.mubr.bf16.mxu0 %v524
  %1496 = vmatmul.mubr.bf16.gmra.mxu0 %v523
  %v1497 = vpop.f32.mrf.mxu0
  %v1498 = vadd.f32 %v1433, %v1497
  %v1499 = vpop.f32.mrf.mxu0
  %v1500 = vpop.f32.mrf.mxu0
  %v1501 = vadd.f32 %v1436, %v1500
  %v1502 = vpop.f32.mrf.mxu0
  %1503 = vdwg.mxu0
  %1504 = vmatprep.subr.bf16.mxu0 0
  %1505 = vmatpush1.bf16.msra.mxu0 %v1086
  %1506 = vmatprep.subr.bf16.mxu0 0
  %1507 = vmatpush1.bf16.msra.mxu0 %v1085
  %1508 = vmatprep.subr.bf16.mxu0 0
  %1509 = vmatpush1.bf16.msra.mxu0 %v1084
  %1510 = vmatprep.subr.bf16.mxu0 0
  %1511 = vmatpush1.bf16.msra.mxu0 %v1083
  %1512 = vmatprep.subr.bf16.mxu0 0
  %1513 = vmatpush1.bf16.msra.mxu0 %v1082
  %1514 = vmatprep.subr.bf16.mxu0 0
  %1515 = vmatpush1.bf16.msra.mxu0 %v1081
  %1516 = vmatprep.subr.bf16.mxu0 0
  %1517 = vmatpush1.bf16.msra.mxu0 %v1080
  %1518 = vmatprep.subr.bf16.mxu0 0
  %1519 = vmatpush1.bf16.msra.mxu0 %v1079
  %1520 = vmatprep.subr.bf16.mxu0 0
  %1521 = vmatpush2.bf16.msra.mxu0 %v1094
  %1522 = vmatprep.subr.bf16.mxu0 0
  %1523 = vmatpush2.bf16.msra.mxu0 %v1093
  %1524 = vmatprep.subr.bf16.mxu0 0
  %1525 = vmatpush2.bf16.msra.mxu0 %v1092
  %1526 = vmatprep.subr.bf16.mxu0 0
  %1527 = vmatpush2.bf16.msra.mxu0 %v1091
  %1528 = vmatprep.subr.bf16.mxu0 0
  %1529 = vmatpush2.bf16.msra.mxu0 %v1090
  %1530 = vmatprep.subr.bf16.mxu0 0
  %1531 = vmatpush2.bf16.msra.mxu0 %v1089
  %1532 = vmatprep.subr.bf16.mxu0 0
  %1533 = vmatpush2.bf16.msra.mxu0 %v1088
  %1534 = vmatprep.subr.bf16.mxu0 0
  %1535 = vmatpush2.bf16.msra.mxu0 %v1087
  %1536 = vmatprep.mubr.bf16.mxu0 %v484
  %1537 = vmatmul.mubr.bf16.gmra.mxu0 %v483
  %v1538 = vpop.f32.mrf.mxu0
  %v1539 = vadd.f32 %v1474, %v1538
  %v1540 = vpop.f32.mrf.mxu0
  %v1541 = vpop.f32.mrf.mxu0
  %v1542 = vadd.f32 %v1477, %v1541
  %v1543 = vpop.f32.mrf.mxu0
  %1544 = vmatprep.mubr.bf16.mxu0 %v498
  %1545 = vmatmul.mubr.bf16.gmra.mxu0 %v497
  %v1546 = vpop.f32.mrf.mxu0
  %v1547 = vadd.f32 %v1482, %v1546
  %v1548 = vpop.f32.mrf.mxu0
  %v1549 = vpop.f32.mrf.mxu0
  %v1550 = vadd.f32 %v1485, %v1549
  %v1551 = vpop.f32.mrf.mxu0
  %1552 = vmatprep.mubr.bf16.mxu0 %v512
  %1553 = vmatmul.mubr.bf16.gmra.mxu0 %v511
  %v1554 = vpop.f32.mrf.mxu0
  %v1555 = vadd.f32 %v1490, %v1554
  %v1556 = vpop.f32.mrf.mxu0
  %v1557 = vpop.f32.mrf.mxu0
  %v1558 = vadd.f32 %v1493, %v1557
  %v1559 = vpop.f32.mrf.mxu0
  %1560 = vmatprep.mubr.bf16.mxu0 %v526
  %1561 = vmatmul.mubr.bf16.gmra.mxu0 %v525
  %v1562 = vpop.f32.mrf.mxu0
  %v1563 = vadd.f32 %v1498, %v1562
  %v1564 = vpop.f32.mrf.mxu0
  %v1565 = vpop.f32.mrf.mxu0
  %v1566 = vadd.f32 %v1501, %v1565
  %v1567 = vpop.f32.mrf.mxu0
  %1568 = vdwg.mxu0
  %1569 = vmatprep.subr.bf16.mxu0 0
  %1570 = vmatpush1.bf16.msra.mxu0 %v1102
  %1571 = vmatprep.subr.bf16.mxu0 0
  %1572 = vmatpush1.bf16.msra.mxu0 %v1101
  %1573 = vmatprep.subr.bf16.mxu0 0
  %1574 = vmatpush1.bf16.msra.mxu0 %v1100
  %1575 = vmatprep.subr.bf16.mxu0 0
  %1576 = vmatpush1.bf16.msra.mxu0 %v1099
  %1577 = vmatprep.subr.bf16.mxu0 0
  %1578 = vmatpush1.bf16.msra.mxu0 %v1098
  %1579 = vmatprep.subr.bf16.mxu0 0
  %1580 = vmatpush1.bf16.msra.mxu0 %v1097
  %1581 = vmatprep.subr.bf16.mxu0 0
  %1582 = vmatpush1.bf16.msra.mxu0 %v1096
  %1583 = vmatprep.subr.bf16.mxu0 0
  %1584 = vmatpush1.bf16.msra.mxu0 %v1095
  %1585 = vmatprep.subr.bf16.mxu0 0
  %1586 = vmatpush2.bf16.msra.mxu0 %v1110
  %1587 = vmatprep.subr.bf16.mxu0 0
  %1588 = vmatpush2.bf16.msra.mxu0 %v1109
  %1589 = vmatprep.subr.bf16.mxu0 0
  %1590 = vmatpush2.bf16.msra.mxu0 %v1108
  %1591 = vmatprep.subr.bf16.mxu0 0
  %1592 = vmatpush2.bf16.msra.mxu0 %v1107
  %1593 = vmatprep.subr.bf16.mxu0 0
  %1594 = vmatpush2.bf16.msra.mxu0 %v1106
  %1595 = vmatprep.subr.bf16.mxu0 0
  %1596 = vmatpush2.bf16.msra.mxu0 %v1105
  %1597 = vmatprep.subr.bf16.mxu0 0
  %1598 = vmatpush2.bf16.msra.mxu0 %v1104
  %1599 = vmatprep.subr.bf16.mxu0 0
  %1600 = vmatpush2.bf16.msra.mxu0 %v1103
  %1601 = vmatprep.mubr.bf16.mxu0 %v486
  %1602 = vmatmul.mubr.bf16.gmra.mxu0 %v485
  %v1603 = vpop.f32.mrf.mxu0
  %v1604 = vadd.f32 %v1539, %v1603
  %v1605 = vpop.f32.mrf.mxu0
  %v1606 = vpop.f32.mrf.mxu0
  %v1607 = vadd.f32 %v1542, %v1606
  %v1608 = vpop.f32.mrf.mxu0
  %1609 = vmatprep.mubr.bf16.mxu0 %v500
  %1610 = vmatmul.mubr.bf16.gmra.mxu0 %v499
  %v1611 = vpop.f32.mrf.mxu0
  %v1612 = vadd.f32 %v1547, %v1611
  %v1613 = vpop.f32.mrf.mxu0
  %v1614 = vpop.f32.mrf.mxu0
  %v1615 = vadd.f32 %v1550, %v1614
  %v1616 = vpop.f32.mrf.mxu0
  %1617 = vmatprep.mubr.bf16.mxu0 %v514
  %1618 = vmatmul.mubr.bf16.gmra.mxu0 %v513
  %v1619 = vpop.f32.mrf.mxu0
  %v1620 = vadd.f32 %v1555, %v1619
  %v1621 = vpop.f32.mrf.mxu0
  %v1622 = vpop.f32.mrf.mxu0
  %v1623 = vadd.f32 %v1558, %v1622
  %v1624 = vpop.f32.mrf.mxu0
  %1625 = vmatprep.mubr.bf16.mxu0 %v528
  %1626 = vmatmul.mubr.bf16.gmra.mxu0 %v527
  %v1627 = vpop.f32.mrf.mxu0
  %v1628 = vadd.f32 %v1563, %v1627
  %v1629 = vpop.f32.mrf.mxu0
  %v1630 = vpop.f32.mrf.mxu0
  %v1631 = vadd.f32 %v1566, %v1630
  %v1632 = vpop.f32.mrf.mxu0
  %1633 = vdwg.mxu0
  %1634 = vmatprep.subr.bf16.mxu0 0
  %1635 = vmatpush1.bf16.msra.mxu0 %v1118
  %1636 = vmatprep.subr.bf16.mxu0 0
  %1637 = vmatpush1.bf16.msra.mxu0 %v1117
  %1638 = vmatprep.subr.bf16.mxu0 0
  %1639 = vmatpush1.bf16.msra.mxu0 %v1116
  %1640 = vmatprep.subr.bf16.mxu0 0
  %1641 = vmatpush1.bf16.msra.mxu0 %v1115
  %1642 = vmatprep.subr.bf16.mxu0 0
  %1643 = vmatpush1.bf16.msra.mxu0 %v1114
  %1644 = vmatprep.subr.bf16.mxu0 0
  %1645 = vmatpush1.bf16.msra.mxu0 %v1113
  %1646 = vmatprep.subr.bf16.mxu0 0
  %1647 = vmatpush1.bf16.msra.mxu0 %v1112
  %1648 = vmatprep.subr.bf16.mxu0 0
  %1649 = vmatpush1.bf16.msra.mxu0 %v1111
  %1650 = vmatprep.subr.bf16.mxu0 0
  %1651 = vmatpush2.bf16.msra.mxu0 0
  %1652 = vmatprep.subr.bf16.mxu0 0
  %1653 = vmatpush2.bf16.msra.mxu0 0
  %1654 = vmatprep.subr.bf16.mxu0 0
  %1655 = vmatpush2.bf16.msra.mxu0 0
  %1656 = vmatprep.subr.bf16.mxu0 0
  %1657 = vmatpush2.bf16.msra.mxu0 0
  %1658 = vmatprep.subr.bf16.mxu0 0
  %1659 = vmatpush2.bf16.msra.mxu0 %v1122
  %1660 = vmatprep.subr.bf16.mxu0 0
  %1661 = vmatpush2.bf16.msra.mxu0 %v1121
  %1662 = vmatprep.subr.bf16.mxu0 0
  %1663 = vmatpush2.bf16.msra.mxu0 %v1120
  %1664 = vmatprep.subr.bf16.mxu0 0
  %1665 = vmatpush2.bf16.msra.mxu0 %v1119
  %1666 = vmatprep.mubr.bf16.mxu0 %v1233
  %1667 = vmatmul.mubr.bf16.gmra.mxu0 %v487
  %v1668 = vpop.f32.mrf.mxu0
  %v1669 = vadd.f32 %v1604, %v1668
  %v1670 = vpop.f32.mrf.mxu0
  %v1671 = vpop.f32.mrf.mxu0
  %v1672 = vadd.f32 %v1607, %v1671
  %v1673 = vpop.f32.mrf.mxu0
  %1674 = vmatprep.mubr.bf16.mxu0 %v1236
  %1675 = vmatmul.mubr.bf16.gmra.mxu0 %v501
  %v1676 = vpop.f32.mrf.mxu0
  %v1677 = vadd.f32 %v1612, %v1676
  %v1678 = vpop.f32.mrf.mxu0
  %v1679 = vpop.f32.mrf.mxu0
  %v1680 = vadd.f32 %v1615, %v1679
  %v1681 = vpop.f32.mrf.mxu0
  %1682 = vmatprep.mubr.bf16.mxu0 %v1239
  %1683 = vmatmul.mubr.bf16.gmra.mxu0 %v515
  %v1684 = vpop.f32.mrf.mxu0
  %v1685 = vadd.f32 %v1620, %v1684
  %v1686 = vpop.f32.mrf.mxu0
  %v1687 = vpop.f32.mrf.mxu0
  %v1688 = vadd.f32 %v1623, %v1687
  %v1689 = vpop.f32.mrf.mxu0
  %1690 = vmatprep.mubr.bf16.mxu0 %v1242
  %1691 = vmatmul.mubr.bf16.gmra.mxu0 %v529
  %v1692 = vpop.f32.mrf.mxu0
  %v1693 = vadd.f32 %v1628, %v1692
  %v1694 = vpop.f32.mrf.mxu0
  %v1695 = vpop.f32.mrf.mxu0
  %v1696 = vadd.f32 %v1631, %v1695
  %v1697 = vpop.f32.mrf.mxu0
  %1698 = vdwg.mxu0
  %v1699 = vadd.f32 %v27, %v1669
  %v1700 = vadd.f32 %v28, %v1672
  %v1701 = vadd.f32 %v29, %v1677
  %v1702 = vadd.f32 %v30, %v1680
  %v1703 = vadd.f32 %v31, %v1685
  %v1704 = vadd.f32 %v32, %v1688
  %v1705 = vadd.f32 %v33, %v1693
  %v1706 = vadd.f32 %v34, %v1696
  %1707 = vst [vmem:[#allocation2] sm:$0xff] %v1699
  %1708 = vst [vmem:[#allocation2 + $0x8] sm:$0xff] %v1700
  %1709 = vst [vmem:[#allocation2 + $0x10] sm:$0xff] %v1701
  %1710 = vst [vmem:[#allocation2 + $0x18] sm:$0xff] %v1702
  %1711 = vst [vmem:[#allocation2 + $0x20] sm:$0xff] %v1703
  %1712 = vst [vmem:[#allocation2 + $0x28] sm:$0xff] %v1704
  %1713 = vst [vmem:[#allocation2 + $0x30] sm:$0xff] %v1705
  %1714 = vst [vmem:[#allocation2 + $0x38] sm:$0xff] %v1706
  // Predicated region
  $region18: #{encoder_forward.5} parent=0 // pred_check
    %p1715 = pneg %p15
  $region19: #{encoder_forward.5} parent=0 // pred_check_branch
    %1717 = sbr.rel (%p1715) target = $region21
  $region20: #{encoder_forward.5} parent=0 // pred_region
    %v1718 = vld [vmem:[#allocation2] sm:$0xff]
    %v1719 = vld [vmem:[#allocation2 + $0x8] sm:$0xff]
    %v1720 = vld [vmem:[#allocation2 + $0x10] sm:$0xff]
    %v1721 = vld [vmem:[#allocation2 + $0x18] sm:$0xff]
    %v1722 = vld [vmem:[#allocation2 + $0x20] sm:$0xff]
    %v1723 = vld [vmem:[#allocation2 + $0x28] sm:$0xff]
    %v1724 = vld [vmem:[#allocation2 + $0x30] sm:$0xff]
    %v1725 = vld [vmem:[#allocation2 + $0x38] sm:$0xff]
    %v1726 = vld [vmem:[%s2] sm:$0x1]
    %v1728 = vlaneseq
    %v1729 = vshrl.u32 %v1728, 7
    %v1730 = vsub.s32 0, %v1729
    %v1731 = vrot.slane %v1726, %v1730
    %v1733 = vadd.f32 %v1718, %v1731
    %v1734 = vadd.f32 %v1719, %v1731
    %v1735 = vadd.f32 %v1720, %v1731
    %v1736 = vadd.f32 %v1721, %v1731
    %v1737 = vadd.f32 %v1722, %v1731
    %v1738 = vadd.f32 %v1723, %v1731
    %v1739 = vadd.f32 %v1724, %v1731
    %v1740 = vadd.f32 %v1725, %v1731
    %v1741 = vmax.f32 %v1733, 0.0
    %v1742 = vmax.f32 %v1734, 0.0
    %v1743 = vmax.f32 %v1735, 0.0
    %v1744 = vmax.f32 %v1736, 0.0
    %v1745 = vmax.f32 %v1737, 0.0
    %v1746 = vmax.f32 %v1738, 0.0
    %v1747 = vmax.f32 %v1739, 0.0
    %v1748 = vmax.f32 %v1740, 0.0
    %v1749 = vpack.c.bf16 %v1742, %v1741
    %v1750 = vpack.c.bf16 %v1744, %v1743
    %v1751 = vpack.c.bf16 %v1746, %v1745
    %v1752 = vpack.c.bf16 %v1748, %v1747
    %v1757 = vunpack.c.l.b16 %v1749
    %v1758 = vunpack.c.h.b16 %v1749
    %v1759 = vunpack.c.l.b16 %v1750
    %v1760 = vunpack.c.h.b16 %v1750
    %v1761 = vunpack.c.l.b16 %v1751
    %v1762 = vunpack.c.h.b16 %v1751
    %v1763 = vunpack.c.l.b16 %v1752
    %v1764 = vunpack.c.h.b16 %v1752
    %v1765 = vpack.c.b16 %v1757, %v1757
    %v1766 = vpack.c.b16 %v1758, %v1758
    %v1767 = vpack.c.b16 %v1759, %v1759
    %v1768 = vpack.c.b16 %v1760, %v1760
    %v1769 = vpack.c.b16 %v1761, %v1761
    %v1770 = vpack.c.b16 %v1762, %v1762
    %v1771 = vpack.c.b16 %v1763, %v1763
    %v1772 = vpack.c.b16 %v1764, %v1764
    %1781 = vst [vmem:[%s3] sm:$0xf] %v1765
    %1782 = vst [vmem:[%s3 + $0x4] sm:$0xf] %v1766
    %1783 = vst [vmem:[%s3 + $0x8] sm:$0xf] %v1767
    %1784 = vst [vmem:[%s3 + $0xc] sm:$0xf] %v1768
    %1785 = vst [vmem:[%s3 + $0x10] sm:$0xf] %v1769
    %1786 = vst [vmem:[%s3 + $0x14] sm:$0xf] %v1770
    %1787 = vst [vmem:[%s3 + $0x18] sm:$0xf] %v1771
    %1788 = vst [vmem:[%s3 + $0x1c] sm:$0xf] %v1772
  $region21: #{encoder_forward.5} parent=0 // pred_fallthru
    _
  // Predicated region
  $region22: #{encoder_forward.5} parent=0 // pred_check
    _
  $region23: #{encoder_forward.5} parent=0 // pred_check_branch
    %1790 = sbr.rel (0) target = $region25
  $region24: #{encoder_forward.5} parent=0 // pred_region
    _
  $region25: #{encoder_forward.5} parent=0 // pred_fallthru
    _
  // Predicated region
  $region26: #{encoder_forward.5} parent=0 // pred_check
    _
  $region27: #{encoder_forward.5} parent=0 // pred_check_branch
    %1792 = sbr.rel (0) target = $region29
  $region28: #{encoder_forward.5} parent=0 // pred_region
    _
  $region29: #{encoder_forward.5} parent=0 // pred_fallthru
    _

// kernel: encoder_forward.7
$region0: #{encoder_forward.7}
  #allocation0 [shape = 'u32[]', space=smem, size = 0x4, offset = 0x4, fixed_abs, tag = 'smem constant byte address 0x4 - core index']
  #allocation1 [shape = 'u32[144,128]{1,0:T(1,128)}', space=vmem, size = 0x12000, scoped, tag = 'internal scratch']
  #allocation2 [shape = 'f32[2,256]{1,0:T(2,128)}', space=vmem, size = 0x800, scoped, tag = 'scratch operand']
  %s0 = inlined_call_operand.vmem [shape: bf16[2,1024], index: 0, kind: input, shape index: {}]
  %s1 = inlined_call_operand.vmem [shape: bf16[1024,512], index: 1, kind: input, shape index: {}]
  %s2 = inlined_call_operand.vmem [shape: f32[1,512], index: 2, kind: input, shape index: {}]
  %s3 = inlined_call_operand.hbm [shape: f32[2,512], index: 3, kind: output, shape index: {}]
  %s4 = sld [smem:[#allocation0]]
  $region91: #{encoder_forward.7} parent=0
    _
  %s6 = ssub.s32 1, %s4
  %s7 = scalar_select 0, %s6, %s4
  $region1: #{encoder_forward.7} parent=0
    #allocation3 [shape = 'u8[1048576]{0}', space=vmem, size = 0x100000, scoped, tag = 'input window, operand 1']
    #allocation4 [shape = 'u8[4096]{0}', space=vmem, size = 0x1000, scoped, tag = 'output window, operand 0']
    #allocation5 [shape = 's32[2]{0}', space=sflag, size = 0x8, scoped, tag = 'scoped memory for encoder_forward.7']
    %8 = vsyncpa [#allocation5], 0
    %s9 = scalar_lea.sflag [#allocation5], 1
    %10 = vsyncpa %s9, 0
    loop: start=0, step=1, limit=4
    $region2: #{encoder_forward.7} parent=1 // loop_pre_header
      _
    $region3: #{encoder_forward.7} parent=1 // loop_header
      %s12 = sphi 0, %s16
      %p13 = scmp.ge.s32.totalorder %s12, 4
      %s19 = sphi 0, %s38
      %s20 = sphi 0, %s34
      %s21 = sphi 0, %s30
      %s22 = sphi 0, %s19
      %s23 = sphi 0, %s20
      %s24 = sphi 0, %s21
      %s25 = sphi 0, %s22
      %s26 = sphi 0, %s23
      %s27 = sphi 0, %s24
      %s43 = sphi 0, %s45
      %s46 = sphi 0, %s43
      %s47 = sphi 0, %s46
      %s63 = sphi 0, %s47
      %s71 = sphi 0, %s73
      %s74 = sphi 0, %s71
      %s75 = sphi 0, %s74
      %s91 = sphi 0, %s75
      %s97 = sphi 0, %s99
      %s100 = sphi 0, %s97
      %s101 = sphi 0, %s100
      %s117 = sphi 0, %s101
      %s125 = sphi 0, %s127
      %s128 = sphi 0, %s125
      %s129 = sphi 0, %s128
      %s145 = sphi 0, %s129
    $region4: #{encoder_forward.7} parent=1 // loop_header_branch
      %15 = sbr.rel (%p13) target = $region8
    $region5: #{encoder_forward.7} parent=1 // loop_body
      %s17 = ssub.s32 %s12, 1
      %s18 = ssub.s32 %s12, 2
      %s28 = sadd.s32 1, %s21
      %p29 = scmp.ge.s32.totalorder %s28, 1
      %s30 = scalar_select %p29, 0, %s28
      %s31 = sadd.s32 1, %s20
      %s32 = scalar_select %p29, %s31, %s20
      %p33 = scmp.ge.s32.totalorder %s32, 2
      %s34 = scalar_select %p33, 0, %s32
      %s35 = sadd.s32 1, %s19
      %s36 = scalar_select %p33, %s35, %s19
      %p37 = scmp.ge.s32.totalorder %s36, 1
      %s38 = scalar_select %p37, 0, %s36
      %s39 = ssub.s32 %s19, %s38
      %s40 = ssub.s32 %s21, %s30
      %s41 = sor.u32 %s39, %s40
      %p42 = scmp.eq.s32.totalorder %s41, 0
      %s44 = sadd.s32 %s43, 1
      %s45 = scalar_select %p42, %s43, %s44
      %p48 = pneg %p42
      %p49 = scmp.eq.s32.totalorder %s12, 1
      %p50 = por %p48, %p49
      %p51 = scmp.ne.s32.totalorder %s43, %s46
      %p52 = scmp.eq.s32.totalorder %s12, 0
      %p53 = por %p51, %p52
      %p54 = scmp.ne.s32.totalorder %s43, %s46
      %p55 = scmp.eq.s32.totalorder %s17, 1
      %p56 = por %p54, %p55
      %p57 = scmp.ne.s32.totalorder %s46, %s47
      %p58 = scmp.eq.s32.totalorder %s17, 0
      %p59 = por %p57, %p58
      %p60 = scmp.ne.s32.totalorder %s46, %s47
      %p61 = scmp.eq.s32.totalorder %s18, 1
      %p62 = por %p60, %p61
      %p64 = scmp.ne.s32.totalorder %s47, %s63
      %p65 = scmp.eq.s32.totalorder %s18, 0
      %p66 = por %p64, %p65
      %s67 = ssub.s32 %s21, %s30
      %s68 = ssub.s32 %s20, %s34
      %s69 = sor.u32 %s67, %s68
      %p70 = scmp.eq.s32.totalorder %s69, 0
      %s72 = sadd.s32 %s71, 1
      %s73 = scalar_select %p70, %s71, %s72
      %p76 = pneg %p70
      %p77 = scmp.eq.s32.totalorder %s12, 1
      %p78 = por %p76, %p77
      %p79 = scmp.ne.s32.totalorder %s71, %s74
      %p80 = scmp.eq.s32.totalorder %s12, 0
      %p81 = por %p79, %p80
      %p82 = scmp.ne.s32.totalorder %s71, %s74
      %p83 = scmp.eq.s32.totalorder %s17, 1
      %p84 = por %p82, %p83
      %p85 = scmp.ne.s32.totalorder %s74, %s75
      %p86 = scmp.eq.s32.totalorder %s17, 0
      %p87 = por %p85, %p86
      %p88 = scmp.ne.s32.totalorder %s74, %s75
      %p89 = scmp.eq.s32.totalorder %s18, 1
      %p90 = por %p88, %p89
      %p92 = scmp.ne.s32.totalorder %s75, %s91
      %p93 = scmp.eq.s32.totalorder %s18, 0
      %p94 = por %p92, %p93
      %s95 = ssub.s32 %s20, %s34
      %p96 = scmp.eq.s32.totalorder %s95, 0
      %s98 = sadd.s32 %s97, 1
      %s99 = scalar_select %p96, %s97, %s98
      %p102 = pneg %p96
      %p103 = scmp.eq.s32.totalorder %s12, 1
      %p104 = por %p102, %p103
      %p105 = scmp.ne.s32.totalorder %s97, %s100
      %p106 = scmp.eq.s32.totalorder %s12, 0
      %p107 = por %p105, %p106
      %p108 = scmp.ne.s32.totalorder %s97, %s100
      %p109 = scmp.eq.s32.totalorder %s17, 1
      %p110 = por %p108, %p109
      %p111 = scmp.ne.s32.totalorder %s100, %s101
      %p112 = scmp.eq.s32.totalorder %s17, 0
      %p113 = por %p111, %p112
      %p114 = scmp.ne.s32.totalorder %s100, %s101
      %p115 = scmp.eq.s32.totalorder %s18, 1
      %p116 = por %p114, %p115
      %p118 = scmp.ne.s32.totalorder %s101, %s117
      %p119 = scmp.eq.s32.totalorder %s18, 0
      %p120 = por %p118, %p119
      %s121 = ssub.s32 %s19, %s38
      %s122 = ssub.s32 %s20, %s34
      %s123 = sor.u32 %s121, %s122
      %p124 = scmp.eq.s32.totalorder %s123, 0
      %s126 = sadd.s32 %s125, 1
      %s127 = scalar_select %p124, %s125, %s126
      %p130 = pneg %p124
      %p131 = scmp.eq.s32.totalorder %s12, 1
      %p132 = por %p130, %p131
      %p133 = scmp.ne.s32.totalorder %s125, %s128
      %p134 = scmp.eq.s32.totalorder %s12, 0
      %p135 = por %p133, %p134
      %p136 = scmp.ne.s32.totalorder %s125, %s128
      %p137 = scmp.eq.s32.totalorder %s17, 1
      %p138 = por %p136, %p137
      %p139 = scmp.ne.s32.totalorder %s128, %s129
      %p140 = scmp.eq.s32.totalorder %s17, 0
      %p141 = por %p139, %p140
      %p142 = scmp.ne.s32.totalorder %s128, %s129
      %p143 = scmp.eq.s32.totalorder %s18, 1
      %p144 = por %p142, %p143
      %p146 = scmp.ne.s32.totalorder %s129, %s145
      %p147 = scmp.eq.s32.totalorder %s18, 0
      %p148 = por %p146, %p147
      %p149 = scmp.le.s32.totalorder 1, %s12
      %p150 = scmp.lt.s32.totalorder %s12, 3
      %p151 = pnand %p149, %p150
      %p152 = pneg %p151
      // Predicated region
      $region9: #{encoder_forward.7} parent=5 // pred_check
        _
      $region10: #{encoder_forward.7} parent=5 // pred_check_branch
        %154 = sbr.rel (%p151) target = $region12
      $region11: #{encoder_forward.7} parent=5 // pred_region
        %s155 = ssub.s32 %s12, 1
        // Predicated region
        $region13: #{encoder_forward.7} parent=11 // pred_check
          %p156 = pneg %p59
        $region14: #{encoder_forward.7} parent=11 // pred_check_branch
          %158 = sbr.rel (%p156) target = $region16
        $region15: #{encoder_forward.7} parent=11 // pred_region
          %s159 = smul.u32 8, %s24
          %p160 = scmp.lt.s32.totalorder %s22, 0
          %s161 = scalar_select %p160, %s22, 0
          %p162 = scmp.lt.s32.totalorder %s159, 7
          %s163 = scalar_select %p162, %s159, 7
          %s164 = smul.addr %s161, 8
          %s165 = sadd.s32 %s163, %s164
          %s166 = scalar_lea.vmem %s0, %s165
          %s167 = smul.u32 8, %s24
        $region16: #{encoder_forward.7} parent=11 // pred_fallthru
          _
      $region12: #{encoder_forward.7} parent=5 // pred_fallthru
        _
      %p168 = scmp.lt.s32.totalorder %s12, 2
      // Predicated region
      $region17: #{encoder_forward.7} parent=5 // pred_check
        %p169 = pneg %p168
      $region18: #{encoder_forward.7} parent=5 // pred_check_branch
        %171 = sbr.rel (%p169) target = $region20
      $region19: #{encoder_forward.7} parent=5 // pred_region
        // Predicated region
        $region21: #{encoder_forward.7} parent=19 // pred_check
          %p172 = pneg %p81
        $region22: #{encoder_forward.7} parent=19 // pred_check_branch
          %174 = sbr.rel (%p172) target = $region24
        $region23: #{encoder_forward.7} parent=19 // pred_region
          %s175 = sand.u32 %s71, 1
          %s176 = sand.u32 %s71, 1
          %s177 = smul.addr %s176, 1024
          %s178 = scalar_lea.vmem [#allocation3], %s177
          %s179 = smul.u32 128, %s21
          %s180 = smul.u32 2, %s20
          %s181 = smul.addr %s179, 4
          %s182 = sadd.s32 %s180, %s181
          %s183 = smul.addr %s182, 4
          %s184 = scalar_lea.vmem %s1, %s183
          // Predicated region
          $region25: #{encoder_forward.7} parent=23 // pred_check
            _
          $region26: #{encoder_forward.7} parent=23 // pred_check_branch
            %186 = sbr.rel (0) target = $region28
          $region27: #{encoder_forward.7} parent=23 // pred_region
            // Predicated region
            $region29: #{encoder_forward.7} parent=27 // pred_check
              _
            $region30: #{encoder_forward.7} parent=27 // pred_check_branch
              %188 = sbr.rel (0) target = $region32
            $region31: #{encoder_forward.7} parent=27 // pred_region
              // Predicated region
              $region44: #{encoder_forward.7} parent=31 // pred_check
                _
              $region45: #{encoder_forward.7} parent=31 // pred_check_branch
                %458 = sbr.rel (0) target = $region47
              $region46: #{encoder_forward.7} parent=31 // pred_region
                loop: start=0, step=1, limit=1
                $region48: #{encoder_forward.7} parent=46 // loop_pre_header
                  _
                $region49: #{encoder_forward.7} parent=46 // loop_header
                  %s460 = sphi 0, %s464
                  %p461 = scmp.ge.s32.totalorder %s460, 1
                  %s465 = sphi %s184, %s184
                  %s466 = sphi %s178, %s178
                $region50: #{encoder_forward.7} parent=46 // loop_header_branch
                  %463 = sbr.rel (%p461) target = $region54
                $region51: #{encoder_forward.7} parent=46 // loop_body
                  %v467 = vld [vmem:[%s465] sm:$0xff]
                  %468 = vst [vmem:[%s466] sm:$0xff] %v467
                  %v469 = vld [vmem:[%s465 + $0x10] sm:$0xff]
                  %470 = vst [vmem:[%s466 + $0x8] sm:$0xff] %v469
                  %v471 = vld [vmem:[%s465 + $0x20] sm:$0xff]
                  %472 = vst [vmem:[%s466 + $0x10] sm:$0xff] %v471
                  %v473 = vld [vmem:[%s465 + $0x30] sm:$0xff]
                  %474 = vst [vmem:[%s466 + $0x18] sm:$0xff] %v473
                  %v475 = vld [vmem:[%s465 + $0x40] sm:$0xff]
                  %476 = vst [vmem:[%s466 + $0x20] sm:$0xff] %v475
                  %v477 = vld [vmem:[%s465 + $0x50] sm:$0xff]
                  %478 = vst [vmem:[%s466 + $0x28] sm:$0xff] %v477
                  %v479 = vld [vmem:[%s465 + $0x60] sm:$0xff]
                  %480 = vst [vmem:[%s466 + $0x30] sm:$0xff] %v479
                  %v481 = vld [vmem:[%s465 + $0x70] sm:$0xff]
                  %482 = vst [vmem:[%s466 + $0x38] sm:$0xff] %v481
                  %v483 = vld [vmem:[%s465 + $0x80] sm:$0xff]
                  %484 = vst [vmem:[%s466 + $0x40] sm:$0xff] %v483
                  %v485 = vld [vmem:[%s465 + $0x90] sm:$0xff]
                  %486 = vst [vmem:[%s466 + $0x48] sm:$0xff] %v485
                  %v487 = vld [vmem:[%s465 + $0xa0] sm:$0xff]
                  %488 = vst [vmem:[%s466 + $0x50] sm:$0xff] %v487
                  %v489 = vld [vmem:[%s465 + $0xb0] sm:$0xff]
                  %490 = vst [vmem:[%s466 + $0x58] sm:$0xff] %v489
                  %v491 = vld [vmem:[%s465 + $0xc0] sm:$0xff]
                  %492 = vst [vmem:[%s466 + $0x60] sm:$0xff] %v491
                  %v493 = vld [vmem:[%s465 + $0xd0] sm:$0xff]
                  %494 = vst [vmem:[%s466 + $0x68] sm:$0xff] %v493
                  %v495 = vld [vmem:[%s465 + $0xe0] sm:$0xff]
                  %496 = vst [vmem:[%s466 + $0x70] sm:$0xff] %v495
                  %v497 = vld [vmem:[%s465 + $0xf0] sm:$0xff]
                  %498 = vst [vmem:[%s466 + $0x78] sm:$0xff] %v497
                  %v499 = vld [vmem:[%s465 + $0x100] sm:$0xff]
                  %500 = vst [vmem:[%s466 + $0x80] sm:$0xff] %v499
                  %v501 = vld [vmem:[%s465 + $0x110] sm:$0xff]
                  %502 = vst [vmem:[%s466 + $0x88] sm:$0xff] %v501
                  %v503 = vld [vmem:[%s465 + $0x120] sm:$0xff]
                  %504 = vst [vmem:[%s466 + $0x90] sm:$0xff] %v503
                  %v505 = vld [vmem:[%s465 + $0x130] sm:$0xff]
                  %506 = vst [vmem:[%s466 + $0x98] sm:$0xff] %v505
                  %v507 = vld [vmem:[%s465 + $0x140] sm:$0xff]
                  %508 = vst [vmem:[%s466 + $0xa0] sm:$0xff] %v507
                  %v509 = vld [vmem:[%s465 + $0x150] sm:$0xff]
                  %510 = vst [vmem:[%s466 + $0xa8] sm:$0xff] %v509
                  %v511 = vld [vmem:[%s465 + $0x160] sm:$0xff]
                  %512 = vst [vmem:[%s466 + $0xb0] sm:$0xff] %v511
                  %v513 = vld [vmem:[%s465 + $0x170] sm:$0xff]
                  %514 = vst [vmem:[%s466 + $0xb8] sm:$0xff] %v513
                  %v515 = vld [vmem:[%s465 + $0x180] sm:$0xff]
                  %516 = vst [vmem:[%s466 + $0xc0] sm:$0xff] %v515
                  %v517 = vld [vmem:[%s465 + $0x190] sm:$0xff]
                  %518 = vst [vmem:[%s466 + $0xc8] sm:$0xff] %v517
                  %v519 = vld [vmem:[%s465 + $0x1a0] sm:$0xff]
                  %520 = vst [vmem:[%s466 + $0xd0] sm:$0xff] %v519
                  %v521 = vld [vmem:[%s465 + $0x1b0] sm:$0xff]
                  %522 = vst [vmem:[%s466 + $0xd8] sm:$0xff] %v521
                  %v523 = vld [vmem:[%s465 + $0x1c0] sm:$0xff]
                  %524 = vst [vmem:[%s466 + $0xe0] sm:$0xff] %v523
                  %v525 = vld [vmem:[%s465 + $0x1d0] sm:$0xff]
                  %526 = vst [vmem:[%s466 + $0xe8] sm:$0xff] %v525
                  %v527 = vld [vmem:[%s465 + $0x1e0] sm:$0xff]
                  %528 = vst [vmem:[%s466 + $0xf0] sm:$0xff] %v527
                  %v529 = vld [vmem:[%s465 + $0x1f0] sm:$0xff]
                  %530 = vst [vmem:[%s466 + $0xf8] sm:$0xff] %v529
                  %v531 = vld [vmem:[%s465 + $0x200] sm:$0xff]
                  %532 = vst [vmem:[%s466 + $0x100] sm:$0xff] %v531
                  %v533 = vld [vmem:[%s465 + $0x210] sm:$0xff]
                  %534 = vst [vmem:[%s466 + $0x108] sm:$0xff] %v533
                  %v535 = vld [vmem:[%s465 + $0x220] sm:$0xff]
                  %536 = vst [vmem:[%s466 + $0x110] sm:$0xff] %v535
                  %v537 = vld [vmem:[%s465 + $0x230] sm:$0xff]
                  %538 = vst [vmem:[%s466 + $0x118] sm:$0xff] %v537
                  %v539 = vld [vmem:[%s465 + $0x240] sm:$0xff]
                  %540 = vst [vmem:[%s466 + $0x120] sm:$0xff] %v539
                  %v541 = vld [vmem:[%s465 + $0x250] sm:$0xff]
                  %542 = vst [vmem:[%s466 + $0x128] sm:$0xff] %v541
                  %v543 = vld [vmem:[%s465 + $0x260] sm:$0xff]
                  %544 = vst [vmem:[%s466 + $0x130] sm:$0xff] %v543
                  %v545 = vld [vmem:[%s465 + $0x270] sm:$0xff]
                  %546 = vst [vmem:[%s466 + $0x138] sm:$0xff] %v545
                  %v547 = vld [vmem:[%s465 + $0x280] sm:$0xff]
                  %548 = vst [vmem:[%s466 + $0x140] sm:$0xff] %v547
                  %v549 = vld [vmem:[%s465 + $0x290] sm:$0xff]
                  %550 = vst [vmem:[%s466 + $0x148] sm:$0xff] %v549
                  %v551 = vld [vmem:[%s465 + $0x2a0] sm:$0xff]
                  %552 = vst [vmem:[%s466 + $0x150] sm:$0xff] %v551
                  %v553 = vld [vmem:[%s465 + $0x2b0] sm:$0xff]
                  %554 = vst [vmem:[%s466 + $0x158] sm:$0xff] %v553
                  %v555 = vld [vmem:[%s465 + $0x2c0] sm:$0xff]
                  %556 = vst [vmem:[%s466 + $0x160] sm:$0xff] %v555
                  %v557 = vld [vmem:[%s465 + $0x2d0] sm:$0xff]
                  %558 = vst [vmem:[%s466 + $0x168] sm:$0xff] %v557
                  %v559 = vld [vmem:[%s465 + $0x2e0] sm:$0xff]
                  %560 = vst [vmem:[%s466 + $0x170] sm:$0xff] %v559
                  %v561 = vld [vmem:[%s465 + $0x2f0] sm:$0xff]
                  %562 = vst [vmem:[%s466 + $0x178] sm:$0xff] %v561
                  %v563 = vld [vmem:[%s465 + $0x300] sm:$0xff]
                  %564 = vst [vmem:[%s466 + $0x180] sm:$0xff] %v563
                  %v565 = vld [vmem:[%s465 + $0x310] sm:$0xff]
                  %566 = vst [vmem:[%s466 + $0x188] sm:$0xff] %v565
                  %v567 = vld [vmem:[%s465 + $0x320] sm:$0xff]
                  %568 = vst [vmem:[%s466 + $0x190] sm:$0xff] %v567
                  %v569 = vld [vmem:[%s465 + $0x330] sm:$0xff]
                  %570 = vst [vmem:[%s466 + $0x198] sm:$0xff] %v569
                  %v571 = vld [vmem:[%s465 + $0x340] sm:$0xff]
                  %572 = vst [vmem:[%s466 + $0x1a0] sm:$0xff] %v571
                  %v573 = vld [vmem:[%s465 + $0x350] sm:$0xff]
                  %574 = vst [vmem:[%s466 + $0x1a8] sm:$0xff] %v573
                  %v575 = vld [vmem:[%s465 + $0x360] sm:$0xff]
                  %576 = vst [vmem:[%s466 + $0x1b0] sm:$0xff] %v575
                  %v577 = vld [vmem:[%s465 + $0x370] sm:$0xff]
                  %578 = vst [vmem:[%s466 + $0x1b8] sm:$0xff] %v577
                  %v579 = vld [vmem:[%s465 + $0x380] sm:$0xff]
                  %580 = vst [vmem:[%s466 + $0x1c0] sm:$0xff] %v579
                  %v581 = vld [vmem:[%s465 + $0x390] sm:$0xff]
                  %582 = vst [vmem:[%s466 + $0x1c8] sm:$0xff] %v581
                  %v583 = vld [vmem:[%s465 + $0x3a0] sm:$0xff]
                  %584 = vst [vmem:[%s466 + $0x1d0] sm:$0xff] %v583
                  %v585 = vld [vmem:[%s465 + $0x3b0] sm:$0xff]
                  %586 = vst [vmem:[%s466 + $0x1d8] sm:$0xff] %v585
                  %v587 = vld [vmem:[%s465 + $0x3c0] sm:$0xff]
                  %588 = vst [vmem:[%s466 + $0x1e0] sm:$0xff] %v587
                  %v589 = vld [vmem:[%s465 + $0x3d0] sm:$0xff]
                  %590 = vst [vmem:[%s466 + $0x1e8] sm:$0xff] %v589
                  %v591 = vld [vmem:[%s465 + $0x3e0] sm:$0xff]
                  %592 = vst [vmem:[%s466 + $0x1f0] sm:$0xff] %v591
                  %v593 = vld [vmem:[%s465 + $0x3f0] sm:$0xff]
                  %594 = vst [vmem:[%s466 + $0x1f8] sm:$0xff] %v593
                  %v595 = vld [vmem:[%s465 + $0x400] sm:$0xff]
                  %596 = vst [vmem:[%s466 + $0x200] sm:$0xff] %v595
                  %v597 = vld [vmem:[%s465 + $0x410] sm:$0xff]
                  %598 = vst [vmem:[%s466 + $0x208] sm:$0xff] %v597
                  %v599 = vld [vmem:[%s465 + $0x420] sm:$0xff]
                  %600 = vst [vmem:[%s466 + $0x210] sm:$0xff] %v599
                  %v601 = vld [vmem:[%s465 + $0x430] sm:$0xff]
                  %602 = vst [vmem:[%s466 + $0x218] sm:$0xff] %v601
                  %v603 = vld [vmem:[%s465 + $0x440] sm:$0xff]
                  %604 = vst [vmem:[%s466 + $0x220] sm:$0xff] %v603
                  %v605 = vld [vmem:[%s465 + $0x450] sm:$0xff]
                  %606 = vst [vmem:[%s466 + $0x228] sm:$0xff] %v605
                  %v607 = vld [vmem:[%s465 + $0x460] sm:$0xff]
                  %608 = vst [vmem:[%s466 + $0x230] sm:$0xff] %v607
                  %v609 = vld [vmem:[%s465 + $0x470] sm:$0xff]
                  %610 = vst [vmem:[%s466 + $0x238] sm:$0xff] %v609
                  %v611 = vld [vmem:[%s465 + $0x480] sm:$0xff]
                  %612 = vst [vmem:[%s466 + $0x240] sm:$0xff] %v611
                  %v613 = vld [vmem:[%s465 + $0x490] sm:$0xff]
                  %614 = vst [vmem:[%s466 + $0x248] sm:$0xff] %v613
                  %v615 = vld [vmem:[%s465 + $0x4a0] sm:$0xff]
                  %616 = vst [vmem:[%s466 + $0x250] sm:$0xff] %v615
                  %v617 = vld [vmem:[%s465 + $0x4b0] sm:$0xff]
                  %618 = vst [vmem:[%s466 + $0x258] sm:$0xff] %v617
                  %v619 = vld [vmem:[%s465 + $0x4c0] sm:$0xff]
                  %620 = vst [vmem:[%s466 + $0x260] sm:$0xff] %v619
                  %v621 = vld [vmem:[%s465 + $0x4d0] sm:$0xff]
                  %622 = vst [vmem:[%s466 + $0x268] sm:$0xff] %v621
                  %v623 = vld [vmem:[%s465 + $0x4e0] sm:$0xff]
                  %624 = vst [vmem:[%s466 + $0x270] sm:$0xff] %v623
                  %v625 = vld [vmem:[%s465 + $0x4f0] sm:$0xff]
                  %626 = vst [vmem:[%s466 + $0x278] sm:$0xff] %v625
                  %v627 = vld [vmem:[%s465 + $0x500] sm:$0xff]
                  %628 = vst [vmem:[%s466 + $0x280] sm:$0xff] %v627
                  %v629 = vld [vmem:[%s465 + $0x510] sm:$0xff]
                  %630 = vst [vmem:[%s466 + $0x288] sm:$0xff] %v629
                  %v631 = vld [vmem:[%s465 + $0x520] sm:$0xff]
                  %632 = vst [vmem:[%s466 + $0x290] sm:$0xff] %v631
                  %v633 = vld [vmem:[%s465 + $0x530] sm:$0xff]
                  %634 = vst [vmem:[%s466 + $0x298] sm:$0xff] %v633
                  %v635 = vld [vmem:[%s465 + $0x540] sm:$0xff]
                  %636 = vst [vmem:[%s466 + $0x2a0] sm:$0xff] %v635
                  %v637 = vld [vmem:[%s465 + $0x550] sm:$0xff]
                  %638 = vst [vmem:[%s466 + $0x2a8] sm:$0xff] %v637
                  %v639 = vld [vmem:[%s465 + $0x560] sm:$0xff]
                  %640 = vst [vmem:[%s466 + $0x2b0] sm:$0xff] %v639
                  %v641 = vld [vmem:[%s465 + $0x570] sm:$0xff]
                  %642 = vst [vmem:[%s466 + $0x2b8] sm:$0xff] %v641
                  %v643 = vld [vmem:[%s465 + $0x580] sm:$0xff]
                  %644 = vst [vmem:[%s466 + $0x2c0] sm:$0xff] %v643
                  %v645 = vld [vmem:[%s465 + $0x590] sm:$0xff]
                  %646 = vst [vmem:[%s466 + $0x2c8] sm:$0xff] %v645
                  %v647 = vld [vmem:[%s465 + $0x5a0] sm:$0xff]
                  %648 = vst [vmem:[%s466 + $0x2d0] sm:$0xff] %v647
                  %v649 = vld [vmem:[%s465 + $0x5b0] sm:$0xff]
                  %650 = vst [vmem:[%s466 + $0x2d8] sm:$0xff] %v649
                  %v651 = vld [vmem:[%s465 + $0x5c0] sm:$0xff]
                  %652 = vst [vmem:[%s466 + $0x2e0] sm:$0xff] %v651
                  %v653 = vld [vmem:[%s465 + $0x5d0] sm:$0xff]
                  %654 = vst [vmem:[%s466 + $0x2e8] sm:$0xff] %v653
                  %v655 = vld [vmem:[%s465 + $0x5e0] sm:$0xff]
                  %656 = vst [vmem:[%s466 + $0x2f0] sm:$0xff] %v655
                  %v657 = vld [vmem:[%s465 + $0x5f0] sm:$0xff]
                  %658 = vst [vmem:[%s466 + $0x2f8] sm:$0xff] %v657
                  %v659 = vld [vmem:[%s465 + $0x600] sm:$0xff]
                  %660 = vst [vmem:[%s466 + $0x300] sm:$0xff] %v659
                  %v661 = vld [vmem:[%s465 + $0x610] sm:$0xff]
                  %662 = vst [vmem:[%s466 + $0x308] sm:$0xff] %v661
                  %v663 = vld [vmem:[%s465 + $0x620] sm:$0xff]
                  %664 = vst [vmem:[%s466 + $0x310] sm:$0xff] %v663
                  %v665 = vld [vmem:[%s465 + $0x630] sm:$0xff]
                  %666 = vst [vmem:[%s466 + $0x318] sm:$0xff] %v665
                  %v667 = vld [vmem:[%s465 + $0x640] sm:$0xff]
                  %668 = vst [vmem:[%s466 + $0x320] sm:$0xff] %v667
                  %v669 = vld [vmem:[%s465 + $0x650] sm:$0xff]
                  %670 = vst [vmem:[%s466 + $0x328] sm:$0xff] %v669
                  %v671 = vld [vmem:[%s465 + $0x660] sm:$0xff]
                  %672 = vst [vmem:[%s466 + $0x330] sm:$0xff] %v671
                  %v673 = vld [vmem:[%s465 + $0x670] sm:$0xff]
                  %674 = vst [vmem:[%s466 + $0x338] sm:$0xff] %v673
                  %v675 = vld [vmem:[%s465 + $0x680] sm:$0xff]
                  %676 = vst [vmem:[%s466 + $0x340] sm:$0xff] %v675
                  %v677 = vld [vmem:[%s465 + $0x690] sm:$0xff]
                  %678 = vst [vmem:[%s466 + $0x348] sm:$0xff] %v677
                  %v679 = vld [vmem:[%s465 + $0x6a0] sm:$0xff]
                  %680 = vst [vmem:[%s466 + $0x350] sm:$0xff] %v679
                  %v681 = vld [vmem:[%s465 + $0x6b0] sm:$0xff]
                  %682 = vst [vmem:[%s466 + $0x358] sm:$0xff] %v681
                  %v683 = vld [vmem:[%s465 + $0x6c0] sm:$0xff]
                  %684 = vst [vmem:[%s466 + $0x360] sm:$0xff] %v683
                  %v685 = vld [vmem:[%s465 + $0x6d0] sm:$0xff]
                  %686 = vst [vmem:[%s466 + $0x368] sm:$0xff] %v685
                  %v687 = vld [vmem:[%s465 + $0x6e0] sm:$0xff]
                  %688 = vst [vmem:[%s466 + $0x370] sm:$0xff] %v687
                  %v689 = vld [vmem:[%s465 + $0x6f0] sm:$0xff]
                  %690 = vst [vmem:[%s466 + $0x378] sm:$0xff] %v689
                  %v691 = vld [vmem:[%s465 + $0x700] sm:$0xff]
                  %692 = vst [vmem:[%s466 + $0x380] sm:$0xff] %v691
                  %v693 = vld [vmem:[%s465 + $0x710] sm:$0xff]
                  %694 = vst [vmem:[%s466 + $0x388] sm:$0xff] %v693
                  %v695 = vld [vmem:[%s465 + $0x720] sm:$0xff]
                  %696 = vst [vmem:[%s466 + $0x390] sm:$0xff] %v695
                  %v697 = vld [vmem:[%s465 + $0x730] sm:$0xff]
                  %698 = vst [vmem:[%s466 + $0x398] sm:$0xff] %v697
                  %v699 = vld [vmem:[%s465 + $0x740] sm:$0xff]
                  %700 = vst [vmem:[%s466 + $0x3a0] sm:$0xff] %v699
                  %v701 = vld [vmem:[%s465 + $0x750] sm:$0xff]
                  %702 = vst [vmem:[%s466 + $0x3a8] sm:$0xff] %v701
                  %v703 = vld [vmem:[%s465 + $0x760] sm:$0xff]
                  %704 = vst [vmem:[%s466 + $0x3b0] sm:$0xff] %v703
                  %v705 = vld [vmem:[%s465 + $0x770] sm:$0xff]
                  %706 = vst [vmem:[%s466 + $0x3b8] sm:$0xff] %v705
                  %v707 = vld [vmem:[%s465 + $0x780] sm:$0xff]
                  %708 = vst [vmem:[%s466 + $0x3c0] sm:$0xff] %v707
                  %v709 = vld [vmem:[%s465 + $0x790] sm:$0xff]
                  %710 = vst [vmem:[%s466 + $0x3c8] sm:$0xff] %v709
                  %v711 = vld [vmem:[%s465 + $0x7a0] sm:$0xff]
                  %712 = vst [vmem:[%s466 + $0x3d0] sm:$0xff] %v711
                  %v713 = vld [vmem:[%s465 + $0x7b0] sm:$0xff]
                  %714 = vst [vmem:[%s466 + $0x3d8] sm:$0xff] %v713
                  %v715 = vld [vmem:[%s465 + $0x7c0] sm:$0xff]
                  %716 = vst [vmem:[%s466 + $0x3e0] sm:$0xff] %v715
                  %v717 = vld [vmem:[%s465 + $0x7d0] sm:$0xff]
                  %718 = vst [vmem:[%s466 + $0x3e8] sm:$0xff] %v717
                  %v719 = vld [vmem:[%s465 + $0x7e0] sm:$0xff]
                  %720 = vst [vmem:[%s466 + $0x3f0] sm:$0xff] %v719
                  %v721 = vld [vmem:[%s465 + $0x7f0] sm:$0xff]
                  %722 = vst [vmem:[%s466 + $0x3f8] sm:$0xff] %v721
                $region52: #{encoder_forward.7} parent=46 // loop_footer
                  %s464 = sadd.s32 1, %s460
                $region53: #{encoder_forward.7} parent=46 // loop_footer_branch
                  %459 = sbr.rel target = $region49
                $region54: #{encoder_forward.7} parent=46 // loop_exit
                  _
              $region47: #{encoder_forward.7} parent=31 // pred_fallthru
                _
              // Predicated region
              $region55: #{encoder_forward.7} parent=31 // pred_check
                _
              $region56: #{encoder_forward.7} parent=31 // pred_check_branch
                %724 = sbr.rel target = $region58
              $region57: #{encoder_forward.7} parent=31 // pred_region
                _
              $region58: #{encoder_forward.7} parent=31 // pred_fallthru
                _
            $region32: #{encoder_forward.7} parent=27 // pred_fallthru
              _
            // Predicated region
            $region33: #{encoder_forward.7} parent=27 // pred_check
              _
            $region34: #{encoder_forward.7} parent=27 // pred_check_branch
              %190 = sbr.rel target = $region36
            $region35: #{encoder_forward.7} parent=27 // pred_region
              %s192 = ssub.s32 256, 1
              loop: start=0, step=1, limit=1
              $region37: #{encoder_forward.7} parent=35 // loop_pre_header
                _
              $region38: #{encoder_forward.7} parent=35 // loop_header
                %s194 = sphi 0, %s198
                %p195 = scmp.ge.s32.totalorder %s194, 1
                %s199 = sphi %s184, %s184
                %s200 = sphi %s178, %s178
              $region39: #{encoder_forward.7} parent=35 // loop_header_branch
                %197 = sbr.rel (%p195) target = $region43
              $region40: #{encoder_forward.7} parent=35 // loop_body
                %v201 = vld [vmem:[%s199] sm:%s192]
                %202 = vst [vmem:[%s200] sm:%s192] %v201
                %v203 = vld [vmem:[%s199 + $0x10] sm:%s192]
                %204 = vst [vmem:[%s200 + $0x8] sm:%s192] %v203
                %v205 = vld [vmem:[%s199 + $0x20] sm:%s192]
                %206 = vst [vmem:[%s200 + $0x10] sm:%s192] %v205
                %v207 = vld [vmem:[%s199 + $0x30] sm:%s192]
                %208 = vst [vmem:[%s200 + $0x18] sm:%s192] %v207
                %v209 = vld [vmem:[%s199 + $0x40] sm:%s192]
                %210 = vst [vmem:[%s200 + $0x20] sm:%s192] %v209
                %v211 = vld [vmem:[%s199 + $0x50] sm:%s192]
                %212 = vst [vmem:[%s200 + $0x28] sm:%s192] %v211
                %v213 = vld [vmem:[%s199 + $0x60] sm:%s192]
                %214 = vst [vmem:[%s200 + $0x30] sm:%s192] %v213
                %v215 = vld [vmem:[%s199 + $0x70] sm:%s192]
                %216 = vst [vmem:[%s200 + $0x38] sm:%s192] %v215
                %v217 = vld [vmem:[%s199 + $0x80] sm:%s192]
                %218 = vst [vmem:[%s200 + $0x40] sm:%s192] %v217
                %v219 = vld [vmem:[%s199 + $0x90] sm:%s192]
                %220 = vst [vmem:[%s200 + $0x48] sm:%s192] %v219
                %v221 = vld [vmem:[%s199 + $0xa0] sm:%s192]
                %222 = vst [vmem:[%s200 + $0x50] sm:%s192] %v221
                %v223 = vld [vmem:[%s199 + $0xb0] sm:%s192]
                %224 = vst [vmem:[%s200 + $0x58] sm:%s192] %v223
                %v225 = vld [vmem:[%s199 + $0xc0] sm:%s192]
                %226 = vst [vmem:[%s200 + $0x60] sm:%s192] %v225
                %v227 = vld [vmem:[%s199 + $0xd0] sm:%s192]
                %228 = vst [vmem:[%s200 + $0x68] sm:%s192] %v227
                %v229 = vld [vmem:[%s199 + $0xe0] sm:%s192]
                %230 = vst [vmem:[%s200 + $0x70] sm:%s192] %v229
                %v231 = vld [vmem:[%s199 + $0xf0] sm:%s192]
                %232 = vst [vmem:[%s200 + $0x78] sm:%s192] %v231
                %v233 = vld [vmem:[%s199 + $0x100] sm:%s192]
                %234 = vst [vmem:[%s200 + $0x80] sm:%s192] %v233
                %v235 = vld [vmem:[%s199 + $0x110] sm:%s192]
                %236 = vst [vmem:[%s200 + $0x88] sm:%s192] %v235
                %v237 = vld [vmem:[%s199 + $0x120] sm:%s192]
                %238 = vst [vmem:[%s200 + $0x90] sm:%s192] %v237
                %v239 = vld [vmem:[%s199 + $0x130] sm:%s192]
                %240 = vst [vmem:[%s200 + $0x98] sm:%s192] %v239
                %v241 = vld [vmem:[%s199 + $0x140] sm:%s192]
                %242 = vst [vmem:[%s200 + $0xa0] sm:%s192] %v241
                %v243 = vld [vmem:[%s199 + $0x150] sm:%s192]
                %244 = vst [vmem:[%s200 + $0xa8] sm:%s192] %v243
                %v245 = vld [vmem:[%s199 + $0x160] sm:%s192]
                %246 = vst [vmem:[%s200 + $0xb0] sm:%s192] %v245
                %v247 = vld [vmem:[%s199 + $0x170] sm:%s192]
                %248 = vst [vmem:[%s200 + $0xb8] sm:%s192] %v247
                %v249 = vld [vmem:[%s199 + $0x180] sm:%s192]
                %250 = vst [vmem:[%s200 + $0xc0] sm:%s192] %v249
                %v251 = vld [vmem:[%s199 + $0x190] sm:%s192]
                %252 = vst [vmem:[%s200 + $0xc8] sm:%s192] %v251
                %v253 = vld [vmem:[%s199 + $0x1a0] sm:%s192]
                %254 = vst [vmem:[%s200 + $0xd0] sm:%s192] %v253
                %v255 = vld [vmem:[%s199 + $0x1b0] sm:%s192]
                %256 = vst [vmem:[%s200 + $0xd8] sm:%s192] %v255
                %v257 = vld [vmem:[%s199 + $0x1c0] sm:%s192]
                %258 = vst [vmem:[%s200 + $0xe0] sm:%s192] %v257
                %v259 = vld [vmem:[%s199 + $0x1d0] sm:%s192]
                %260 = vst [vmem:[%s200 + $0xe8] sm:%s192] %v259
                %v261 = vld [vmem:[%s199 + $0x1e0] sm:%s192]
                %262 = vst [vmem:[%s200 + $0xf0] sm:%s192] %v261
                %v263 = vld [vmem:[%s199 + $0x1f0] sm:%s192]
                %264 = vst [vmem:[%s200 + $0xf8] sm:%s192] %v263
                %v265 = vld [vmem:[%s199 + $0x200] sm:%s192]
                %266 = vst [vmem:[%s200 + $0x100] sm:%s192] %v265
                %v267 = vld [vmem:[%s199 + $0x210] sm:%s192]
                %268 = vst [vmem:[%s200 + $0x108] sm:%s192] %v267
                %v269 = vld [vmem:[%s199 + $0x220] sm:%s192]
                %270 = vst [vmem:[%s200 + $0x110] sm:%s192] %v269
                %v271 = vld [vmem:[%s199 + $0x230] sm:%s192]
                %272 = vst [vmem:[%s200 + $0x118] sm:%s192] %v271
                %v273 = vld [vmem:[%s199 + $0x240] sm:%s192]
                %274 = vst [vmem:[%s200 + $0x120] sm:%s192] %v273
                %v275 = vld [vmem:[%s199 + $0x250] sm:%s192]
                %276 = vst [vmem:[%s200 + $0x128] sm:%s192] %v275
                %v277 = vld [vmem:[%s199 + $0x260] sm:%s192]
                %278 = vst [vmem:[%s200 + $0x130] sm:%s192] %v277
                %v279 = vld [vmem:[%s199 + $0x270] sm:%s192]
                %280 = vst [vmem:[%s200 + $0x138] sm:%s192] %v279
                %v281 = vld [vmem:[%s199 + $0x280] sm:%s192]
                %282 = vst [vmem:[%s200 + $0x140] sm:%s192] %v281
                %v283 = vld [vmem:[%s199 + $0x290] sm:%s192]
                %284 = vst [vmem:[%s200 + $0x148] sm:%s192] %v283
                %v285 = vld [vmem:[%s199 + $0x2a0] sm:%s192]
                %286 = vst [vmem:[%s200 + $0x150] sm:%s192] %v285
                %v287 = vld [vmem:[%s199 + $0x2b0] sm:%s192]
                %288 = vst [vmem:[%s200 + $0x158] sm:%s192] %v287
                %v289 = vld [vmem:[%s199 + $0x2c0] sm:%s192]
                %290 = vst [vmem:[%s200 + $0x160] sm:%s192] %v289
                %v291 = vld [vmem:[%s199 + $0x2d0] sm:%s192]
                %292 = vst [vmem:[%s200 + $0x168] sm:%s192] %v291
                %v293 = vld [vmem:[%s199 + $0x2e0] sm:%s192]
                %294 = vst [vmem:[%s200 + $0x170] sm:%s192] %v293
                %v295 = vld [vmem:[%s199 + $0x2f0] sm:%s192]
                %296 = vst [vmem:[%s200 + $0x178] sm:%s192] %v295
                %v297 = vld [vmem:[%s199 + $0x300] sm:%s192]
                %298 = vst [vmem:[%s200 + $0x180] sm:%s192] %v297
                %v299 = vld [vmem:[%s199 + $0x310] sm:%s192]
                %300 = vst [vmem:[%s200 + $0x188] sm:%s192] %v299
                %v301 = vld [vmem:[%s199 + $0x320] sm:%s192]
                %302 = vst [vmem:[%s200 + $0x190] sm:%s192] %v301
                %v303 = vld [vmem:[%s199 + $0x330] sm:%s192]
                %304 = vst [vmem:[%s200 + $0x198] sm:%s192] %v303
                %v305 = vld [vmem:[%s199 + $0x340] sm:%s192]
                %306 = vst [vmem:[%s200 + $0x1a0] sm:%s192] %v305
                %v307 = vld [vmem:[%s199 + $0x350] sm:%s192]
                %308 = vst [vmem:[%s200 + $0x1a8] sm:%s192] %v307
                %v309 = vld [vmem:[%s199 + $0x360] sm:%s192]
                %310 = vst [vmem:[%s200 + $0x1b0] sm:%s192] %v309
                %v311 = vld [vmem:[%s199 + $0x370] sm:%s192]
                %312 = vst [vmem:[%s200 + $0x1b8] sm:%s192] %v311
                %v313 = vld [vmem:[%s199 + $0x380] sm:%s192]
                %314 = vst [vmem:[%s200 + $0x1c0] sm:%s192] %v313
                %v315 = vld [vmem:[%s199 + $0x390] sm:%s192]
                %316 = vst [vmem:[%s200 + $0x1c8] sm:%s192] %v315
                %v317 = vld [vmem:[%s199 + $0x3a0] sm:%s192]
                %318 = vst [vmem:[%s200 + $0x1d0] sm:%s192] %v317
                %v319 = vld [vmem:[%s199 + $0x3b0] sm:%s192]
                %320 = vst [vmem:[%s200 + $0x1d8] sm:%s192] %v319
                %v321 = vld [vmem:[%s199 + $0x3c0] sm:%s192]
                %322 = vst [vmem:[%s200 + $0x1e0] sm:%s192] %v321
                %v323 = vld [vmem:[%s199 + $0x3d0] sm:%s192]
                %324 = vst [vmem:[%s200 + $0x1e8] sm:%s192] %v323
                %v325 = vld [vmem:[%s199 + $0x3e0] sm:%s192]
                %326 = vst [vmem:[%s200 + $0x1f0] sm:%s192] %v325
                %v327 = vld [vmem:[%s199 + $0x3f0] sm:%s192]
                %328 = vst [vmem:[%s200 + $0x1f8] sm:%s192] %v327
                %v329 = vld [vmem:[%s199 + $0x400] sm:%s192]
                %330 = vst [vmem:[%s200 + $0x200] sm:%s192] %v329
                %v331 = vld [vmem:[%s199 + $0x410] sm:%s192]
                %332 = vst [vmem:[%s200 + $0x208] sm:%s192] %v331
                %v333 = vld [vmem:[%s199 + $0x420] sm:%s192]
                %334 = vst [vmem:[%s200 + $0x210] sm:%s192] %v333
                %v335 = vld [vmem:[%s199 + $0x430] sm:%s192]
                %336 = vst [vmem:[%s200 + $0x218] sm:%s192] %v335
                %v337 = vld [vmem:[%s199 + $0x440] sm:%s192]
                %338 = vst [vmem:[%s200 + $0x220] sm:%s192] %v337
                %v339 = vld [vmem:[%s199 + $0x450] sm:%s192]
                %340 = vst [vmem:[%s200 + $0x228] sm:%s192] %v339
                %v341 = vld [vmem:[%s199 + $0x460] sm:%s192]
                %342 = vst [vmem:[%s200 + $0x230] sm:%s192] %v341
                %v343 = vld [vmem:[%s199 + $0x470] sm:%s192]
                %344 = vst [vmem:[%s200 + $0x238] sm:%s192] %v343
                %v345 = vld [vmem:[%s199 + $0x480] sm:%s192]
                %346 = vst [vmem:[%s200 + $0x240] sm:%s192] %v345
                %v347 = vld [vmem:[%s199 + $0x490] sm:%s192]
                %348 = vst [vmem:[%s200 + $0x248] sm:%s192] %v347
                %v349 = vld [vmem:[%s199 + $0x4a0] sm:%s192]
                %350 = vst [vmem:[%s200 + $0x250] sm:%s192] %v349
                %v351 = vld [vmem:[%s199 + $0x4b0] sm:%s192]
                %352 = vst [vmem:[%s200 + $0x258] sm:%s192] %v351
                %v353 = vld [vmem:[%s199 + $0x4c0] sm:%s192]
                %354 = vst [vmem:[%s200 + $0x260] sm:%s192] %v353
                %v355 = vld [vmem:[%s199 + $0x4d0] sm:%s192]
                %356 = vst [vmem:[%s200 + $0x268] sm:%s192] %v355
                %v357 = vld [vmem:[%s199 + $0x4e0] sm:%s192]
                %358 = vst [vmem:[%s200 + $0x270] sm:%s192] %v357
                %v359 = vld [vmem:[%s199 + $0x4f0] sm:%s192]
                %360 = vst [vmem:[%s200 + $0x278] sm:%s192] %v359
                %v361 = vld [vmem:[%s199 + $0x500] sm:%s192]
                %362 = vst [vmem:[%s200 + $0x280] sm:%s192] %v361
                %v363 = vld [vmem:[%s199 + $0x510] sm:%s192]
                %364 = vst [vmem:[%s200 + $0x288] sm:%s192] %v363
                %v365 = vld [vmem:[%s199 + $0x520] sm:%s192]
                %366 = vst [vmem:[%s200 + $0x290] sm:%s192] %v365
                %v367 = vld [vmem:[%s199 + $0x530] sm:%s192]
                %368 = vst [vmem:[%s200 + $0x298] sm:%s192] %v367
                %v369 = vld [vmem:[%s199 + $0x540] sm:%s192]
                %370 = vst [vmem:[%s200 + $0x2a0] sm:%s192] %v369
                %v371 = vld [vmem:[%s199 + $0x550] sm:%s192]
                %372 = vst [vmem:[%s200 + $0x2a8] sm:%s192] %v371
                %v373 = vld [vmem:[%s199 + $0x560] sm:%s192]
                %374 = vst [vmem:[%s200 + $0x2b0] sm:%s192] %v373
                %v375 = vld [vmem:[%s199 + $0x570] sm:%s192]
                %376 = vst [vmem:[%s200 + $0x2b8] sm:%s192] %v375
                %v377 = vld [vmem:[%s199 + $0x580] sm:%s192]
                %378 = vst [vmem:[%s200 + $0x2c0] sm:%s192] %v377
                %v379 = vld [vmem:[%s199 + $0x590] sm:%s192]
                %380 = vst [vmem:[%s200 + $0x2c8] sm:%s192] %v379
                %v381 = vld [vmem:[%s199 + $0x5a0] sm:%s192]
                %382 = vst [vmem:[%s200 + $0x2d0] sm:%s192] %v381
                %v383 = vld [vmem:[%s199 + $0x5b0] sm:%s192]
                %384 = vst [vmem:[%s200 + $0x2d8] sm:%s192] %v383
                %v385 = vld [vmem:[%s199 + $0x5c0] sm:%s192]
                %386 = vst [vmem:[%s200 + $0x2e0] sm:%s192] %v385
                %v387 = vld [vmem:[%s199 + $0x5d0] sm:%s192]
                %388 = vst [vmem:[%s200 + $0x2e8] sm:%s192] %v387
                %v389 = vld [vmem:[%s199 + $0x5e0] sm:%s192]
                %390 = vst [vmem:[%s200 + $0x2f0] sm:%s192] %v389
                %v391 = vld [vmem:[%s199 + $0x5f0] sm:%s192]
                %392 = vst [vmem:[%s200 + $0x2f8] sm:%s192] %v391
                %v393 = vld [vmem:[%s199 + $0x600] sm:%s192]
                %394 = vst [vmem:[%s200 + $0x300] sm:%s192] %v393
                %v395 = vld [vmem:[%s199 + $0x610] sm:%s192]
                %396 = vst [vmem:[%s200 + $0x308] sm:%s192] %v395
                %v397 = vld [vmem:[%s199 + $0x620] sm:%s192]
                %398 = vst [vmem:[%s200 + $0x310] sm:%s192] %v397
                %v399 = vld [vmem:[%s199 + $0x630] sm:%s192]
                %400 = vst [vmem:[%s200 + $0x318] sm:%s192] %v399
                %v401 = vld [vmem:[%s199 + $0x640] sm:%s192]
                %402 = vst [vmem:[%s200 + $0x320] sm:%s192] %v401
                %v403 = vld [vmem:[%s199 + $0x650] sm:%s192]
                %404 = vst [vmem:[%s200 + $0x328] sm:%s192] %v403
                %v405 = vld [vmem:[%s199 + $0x660] sm:%s192]
                %406 = vst [vmem:[%s200 + $0x330] sm:%s192] %v405
                %v407 = vld [vmem:[%s199 + $0x670] sm:%s192]
                %408 = vst [vmem:[%s200 + $0x338] sm:%s192] %v407
                %v409 = vld [vmem:[%s199 + $0x680] sm:%s192]
                %410 = vst [vmem:[%s200 + $0x340] sm:%s192] %v409
                %v411 = vld [vmem:[%s199 + $0x690] sm:%s192]
                %412 = vst [vmem:[%s200 + $0x348] sm:%s192] %v411
                %v413 = vld [vmem:[%s199 + $0x6a0] sm:%s192]
                %414 = vst [vmem:[%s200 + $0x350] sm:%s192] %v413
                %v415 = vld [vmem:[%s199 + $0x6b0] sm:%s192]
                %416 = vst [vmem:[%s200 + $0x358] sm:%s192] %v415
                %v417 = vld [vmem:[%s199 + $0x6c0] sm:%s192]
                %418 = vst [vmem:[%s200 + $0x360] sm:%s192] %v417
                %v419 = vld [vmem:[%s199 + $0x6d0] sm:%s192]
                %420 = vst [vmem:[%s200 + $0x368] sm:%s192] %v419
                %v421 = vld [vmem:[%s199 + $0x6e0] sm:%s192]
                %422 = vst [vmem:[%s200 + $0x370] sm:%s192] %v421
                %v423 = vld [vmem:[%s199 + $0x6f0] sm:%s192]
                %424 = vst [vmem:[%s200 + $0x378] sm:%s192] %v423
                %v425 = vld [vmem:[%s199 + $0x700] sm:%s192]
                %426 = vst [vmem:[%s200 + $0x380] sm:%s192] %v425
                %v427 = vld [vmem:[%s199 + $0x710] sm:%s192]
                %428 = vst [vmem:[%s200 + $0x388] sm:%s192] %v427
                %v429 = vld [vmem:[%s199 + $0x720] sm:%s192]
                %430 = vst [vmem:[%s200 + $0x390] sm:%s192] %v429
                %v431 = vld [vmem:[%s199 + $0x730] sm:%s192]
                %432 = vst [vmem:[%s200 + $0x398] sm:%s192] %v431
                %v433 = vld [vmem:[%s199 + $0x740] sm:%s192]
                %434 = vst [vmem:[%s200 + $0x3a0] sm:%s192] %v433
                %v435 = vld [vmem:[%s199 + $0x750] sm:%s192]
                %436 = vst [vmem:[%s200 + $0x3a8] sm:%s192] %v435
                %v437 = vld [vmem:[%s199 + $0x760] sm:%s192]
                %438 = vst [vmem:[%s200 + $0x3b0] sm:%s192] %v437
                %v439 = vld [vmem:[%s199 + $0x770] sm:%s192]
                %440 = vst [vmem:[%s200 + $0x3b8] sm:%s192] %v439
                %v441 = vld [vmem:[%s199 + $0x780] sm:%s192]
                %442 = vst [vmem:[%s200 + $0x3c0] sm:%s192] %v441
                %v443 = vld [vmem:[%s199 + $0x790] sm:%s192]
                %444 = vst [vmem:[%s200 + $0x3c8] sm:%s192] %v443
                %v445 = vld [vmem:[%s199 + $0x7a0] sm:%s192]
                %446 = vst [vmem:[%s200 + $0x3d0] sm:%s192] %v445
                %v447 = vld [vmem:[%s199 + $0x7b0] sm:%s192]
                %448 = vst [vmem:[%s200 + $0x3d8] sm:%s192] %v447
                %v449 = vld [vmem:[%s199 + $0x7c0] sm:%s192]
                %450 = vst [vmem:[%s200 + $0x3e0] sm:%s192] %v449
                %v451 = vld [vmem:[%s199 + $0x7d0] sm:%s192]
                %452 = vst [vmem:[%s200 + $0x3e8] sm:%s192] %v451
                %v453 = vld [vmem:[%s199 + $0x7e0] sm:%s192]
                %454 = vst [vmem:[%s200 + $0x3f0] sm:%s192] %v453
                %v455 = vld [vmem:[%s199 + $0x7f0] sm:%s192]
                %456 = vst [vmem:[%s200 + $0x3f8] sm:%s192] %v455
              $region41: #{encoder_forward.7} parent=35 // loop_footer
                %s198 = sadd.s32 1, %s194
              $region42: #{encoder_forward.7} parent=35 // loop_footer_branch
                %193 = sbr.rel target = $region38
              $region43: #{encoder_forward.7} parent=35 // loop_exit
                _
            $region36: #{encoder_forward.7} parent=27 // pred_fallthru
              _
          $region28: #{encoder_forward.7} parent=23 // pred_fallthru
            _
          %725 = vnop
        $region24: #{encoder_forward.7} parent=19 // pred_fallthru
          _
        // Predicated region
        $region59: #{encoder_forward.7} parent=19 // pred_check
          %p726 = pneg %p107
        $region60: #{encoder_forward.7} parent=19 // pred_check_branch
          %728 = sbr.rel (%p726) target = $region62
        $region61: #{encoder_forward.7} parent=19 // pred_region
          %s729 = smul.u32 2, %s20
          %p730 = scmp.lt.s32.totalorder %s729, 3
          %s731 = scalar_select %p730, %s729, 3
          %s732 = scalar_lea.vmem %s2, %s731
          %s733 = smul.u32 2, %s20
        $region62: #{encoder_forward.7} parent=19 // pred_fallthru
          _
      $region20: #{encoder_forward.7} parent=5 // pred_fallthru
        _
      %p734 = scmp.le.s32.totalorder 1, %s12
      %p735 = scmp.lt.s32.totalorder %s12, 3
      %p736 = pnand %p734, %p735
      %p737 = pneg %p736
      // Predicated region
      $region63: #{encoder_forward.7} parent=5 // pred_check
        _
      $region64: #{encoder_forward.7} parent=5 // pred_check_branch
        %739 = sbr.rel (%p736) target = $region66
      $region65: #{encoder_forward.7} parent=5 // pred_region
        %s740 = ssub.s32 %s12, 1
        %s741 = sand.u32 %s74, 1
        %s742 = sand.u32 %s74, 1
        %s743 = smul.addr %s742, 1024
        %s744 = scalar_lea.vmem [#allocation3], %s743
        // Predicated region
        $region67: #{encoder_forward.7} parent=65 // pred_check
          %p745 = pneg %p87
        $region68: #{encoder_forward.7} parent=65 // pred_check_branch
          %747 = sbr.rel (%p745) target = $region70
        $region69: #{encoder_forward.7} parent=65 // pred_region
          _
        $region70: #{encoder_forward.7} parent=65 // pred_fallthru
          _
        %s748 = smul.u32 8, %s24
        %p749 = scmp.lt.s32.totalorder %s22, 0
        %s750 = scalar_select %p749, %s22, 0
        %p751 = scmp.lt.s32.totalorder %s748, 7
        %s752 = scalar_select %p751, %s748, 7
        %s753 = smul.addr %s750, 8
        %s754 = sadd.s32 %s752, %s753
        %s755 = scalar_lea.vmem %s0, %s754
        %p756 = pneg %p59
        %p757 = pneg %p56
        %s758 = sand.u32 %s74, 1
        %s759 = sand.u32 %s74, 1
        %s760 = smul.addr %s759, 1024
        %s761 = scalar_lea.vmem [#allocation3], %s760
        %p762 = pneg %p87
        %p763 = pneg %p84
        %s764 = smul.u32 2, %s23
        %p765 = scmp.lt.s32.totalorder %s764, 3
        %s766 = scalar_select %p765, %s764, 3
        %s767 = scalar_lea.vmem %s2, %s766
        %p768 = pneg %p113
        %p769 = pneg %p110
        %p770 = pneg %p141
        %p771 = pneg %p138
        %s772 = sand.u32 %s128, 1
        %s773 = scalar_lea.sflag [#allocation5], %s772
        %s774 = sand.u32 %s128, 1
        %s775 = smul.addr %s774, 4
        %s776 = scalar_lea.vmem [#allocation4], %s775
        %s777 = smul.u32 8, %s24
        %p778 = scmp.lt.s32.totalorder %s22, 0
        %s779 = scalar_select %p778, %s22, 0
        %p780 = scmp.lt.s32.totalorder %s777, 7
        %s781 = scalar_select %p780, %s777, 7
        %s782 = smul.addr %s779, 8
        %s783 = sadd.s32 %s781, %s782
        %s784 = scalar_lea.vmem %s0, %s783
        %s785 = smul.u32 8, %s24
        %s786 = smul.u32 128, %s24
        %s787 = smul.u32 2, %s23
        %s788 = smul.u32 2, %s23
        %p789 = scmp.lt.s32.totalorder %s788, 3
        %s790 = scalar_select %p789, %s788, 3
        %s791 = scalar_lea.vmem %s2, %s790
        %s792 = smul.u32 2, %s23
        %s793 = smul.u32 2, %s23
        %p794 = scmp.eq.s32.totalorder %s24, 0
        // Predicated region
        $region71: #{encoder_forward.7} parent=65 // pred_check
          %p795 = pneg %p794
        $region72: #{encoder_forward.7} parent=65 // pred_check_branch
          %797 = sbr.rel (%p795) target = $region74
        $region73: #{encoder_forward.7} parent=65 // pred_region
          %798 = vst [vmem:[#allocation2] sm:$0xf] 0.0
        $region74: #{encoder_forward.7} parent=65 // pred_fallthru
          _
        %v799 = vld [vmem:[#allocation2] sm:$0xf]
        %v800 = vld [vmem:[%s784] sm:$0xff]
        %v801 = vld [vmem:[%s744] sm:$0xff]
        %v802 = vld [vmem:[%s744 + $0x8] sm:$0xff]
        %v803 = vld [vmem:[%s744 + $0x10] sm:$0xff]
        %v804 = vld [vmem:[%s744 + $0x18] sm:$0xff]
        %v805 = vld [vmem:[%s744 + $0x20] sm:$0xff]
        %v806 = vld [vmem:[%s744 + $0x28] sm:$0xff]
        %v807 = vld [vmem:[%s744 + $0x30] sm:$0xff]
        %v808 = vld [vmem:[%s744 + $0x38] sm:$0xff]
        %v809 = vld [vmem:[%s744 + $0x40] sm:$0xff]
        %v810 = vld [vmem:[%s744 + $0x48] sm:$0xff]
        %v811 = vld [vmem:[%s744 + $0x50] sm:$0xff]
        %v812 = vld [vmem:[%s744 + $0x58] sm:$0xff]
        %v813 = vld [vmem:[%s744 + $0x60] sm:$0xff]
        %v814 = vld [vmem:[%s744 + $0x68] sm:$0xff]
        %v815 = vld [vmem:[%s744 + $0x70] sm:$0xff]
        %v816 = vld [vmem:[%s744 + $0x78] sm:$0xff]
        %v817 = vld [vmem:[%s744 + $0x80] sm:$0xff]
        %v818 = vld [vmem:[%s744 + $0x88] sm:$0xff]
        %v819 = vld [vmem:[%s744 + $0x90] sm:$0xff]
        %v820 = vld [vmem:[%s744 + $0x98] sm:$0xff]
        %v821 = vld [vmem:[%s744 + $0xa0] sm:$0xff]
        %v822 = vld [vmem:[%s744 + $0xa8] sm:$0xff]
        %v823 = vld [vmem:[%s744 + $0xb0] sm:$0xff]
        %v824 = vld [vmem:[%s744 + $0xb8] sm:$0xff]
        %v825 = vld [vmem:[%s744 + $0xc0] sm:$0xff]
        %v826 = vld [vmem:[%s744 + $0xc8] sm:$0xff]
        %v827 = vld [vmem:[%s744 + $0xd0] sm:$0xff]
        %v828 = vld [vmem:[%s744 + $0xd8] sm:$0xff]
        %v829 = vld [vmem:[%s744 + $0xe0] sm:$0xff]
        %v830 = vld [vmem:[%s744 + $0xe8] sm:$0xff]
        %v831 = vld [vmem:[%s744 + $0xf0] sm:$0xff]
        %v832 = vld [vmem:[%s744 + $0xf8] sm:$0xff]
        %v833 = vld [vmem:[%s744 + $0x100] sm:$0xff]
        %v834 = vld [vmem:[%s744 + $0x108] sm:$0xff]
        %v835 = vld [vmem:[%s744 + $0x110] sm:$0xff]
        %v836 = vld [vmem:[%s744 + $0x118] sm:$0xff]
        %v837 = vld [vmem:[%s744 + $0x120] sm:$0xff]
        %v838 = vld [vmem:[%s744 + $0x128] sm:$0xff]
        %v839 = vld [vmem:[%s744 + $0x130] sm:$0xff]
        %v840 = vld [vmem:[%s744 + $0x138] sm:$0xff]
        %v841 = vld [vmem:[%s744 + $0x140] sm:$0xff]
        %v842 = vld [vmem:[%s744 + $0x148] sm:$0xff]
        %v843 = vld [vmem:[%s744 + $0x150] sm:$0xff]
        %v844 = vld [vmem:[%s744 + $0x158] sm:$0xff]
        %v845 = vld [vmem:[%s744 + $0x160] sm:$0xff]
        %v846 = vld [vmem:[%s744 + $0x168] sm:$0xff]
        %v847 = vld [vmem:[%s744 + $0x170] sm:$0xff]
        %v848 = vld [vmem:[%s744 + $0x178] sm:$0xff]
        %v849 = vld [vmem:[%s744 + $0x180] sm:$0xff]
        %v850 = vld [vmem:[%s744 + $0x188] sm:$0xff]
        %v851 = vld [vmem:[%s744 + $0x190] sm:$0xff]
        %v852 = vld [vmem:[%s744 + $0x198] sm:$0xff]
        %v853 = vld [vmem:[%s744 + $0x1a0] sm:$0xff]
        %v854 = vld [vmem:[%s744 + $0x1a8] sm:$0xff]
        %v855 = vld [vmem:[%s744 + $0x1b0] sm:$0xff]
        %v856 = vld [vmem:[%s744 + $0x1b8] sm:$0xff]
        %v857 = vld [vmem:[%s744 + $0x1c0] sm:$0xff]
        %v858 = vld [vmem:[%s744 + $0x1c8] sm:$0xff]
        %v859 = vld [vmem:[%s744 + $0x1d0] sm:$0xff]
        %v860 = vld [vmem:[%s744 + $0x1d8] sm:$0xff]
        %v861 = vld [vmem:[%s744 + $0x1e0] sm:$0xff]
        %v862 = vld [vmem:[%s744 + $0x1e8] sm:$0xff]
        %v863 = vld [vmem:[%s744 + $0x1f0] sm:$0xff]
        %v864 = vld [vmem:[%s744 + $0x1f8] sm:$0xff]
        %v865 = vld [vmem:[%s744 + $0x200] sm:$0xff]
        %v866 = vld [vmem:[%s744 + $0x208] sm:$0xff]
        %v867 = vld [vmem:[%s744 + $0x210] sm:$0xff]
        %v868 = vld [vmem:[%s744 + $0x218] sm:$0xff]
        %v869 = vld [vmem:[%s744 + $0x220] sm:$0xff]
        %v870 = vld [vmem:[%s744 + $0x228] sm:$0xff]
        %v871 = vld [vmem:[%s744 + $0x230] sm:$0xff]
        %v872 = vld [vmem:[%s744 + $0x238] sm:$0xff]
        %v873 = vld [vmem:[%s744 + $0x240] sm:$0xff]
        %v874 = vld [vmem:[%s744 + $0x248] sm:$0xff]
        %v875 = vld [vmem:[%s744 + $0x250] sm:$0xff]
        %v876 = vld [vmem:[%s744 + $0x258] sm:$0xff]
        %v877 = vld [vmem:[%s744 + $0x260] sm:$0xff]
        %v878 = vld [vmem:[%s744 + $0x268] sm:$0xff]
        %v879 = vld [vmem:[%s744 + $0x270] sm:$0xff]
        %v880 = vld [vmem:[%s744 + $0x278] sm:$0xff]
        %v881 = vld [vmem:[%s744 + $0x280] sm:$0xff]
        %v882 = vld [vmem:[%s744 + $0x288] sm:$0xff]
        %v883 = vld [vmem:[%s744 + $0x290] sm:$0xff]
        %v884 = vld [vmem:[%s744 + $0x298] sm:$0xff]
        %v885 = vld [vmem:[%s744 + $0x2a0] sm:$0xff]
        %v886 = vld [vmem:[%s744 + $0x2a8] sm:$0xff]
        %v887 = vld [vmem:[%s744 + $0x2b0] sm:$0xff]
        %v888 = vld [vmem:[%s744 + $0x2b8] sm:$0xff]
        %v889 = vld [vmem:[%s744 + $0x2c0] sm:$0xff]
        %v890 = vld [vmem:[%s744 + $0x2c8] sm:$0xff]
        %v891 = vld [vmem:[%s744 + $0x2d0] sm:$0xff]
        %v892 = vld [vmem:[%s744 + $0x2d8] sm:$0xff]
        %v893 = vld [vmem:[%s744 + $0x2e0] sm:$0xff]
        %v894 = vld [vmem:[%s744 + $0x2e8] sm:$0xff]
        %v895 = vld [vmem:[%s744 + $0x2f0] sm:$0xff]
        %v896 = vld [vmem:[%s744 + $0x2f8] sm:$0xff]
        %v897 = vld [vmem:[%s744 + $0x300] sm:$0xff]
        %v898 = vld [vmem:[%s744 + $0x308] sm:$0xff]
        %v899 = vld [vmem:[%s744 + $0x310] sm:$0xff]
        %v900 = vld [vmem:[%s744 + $0x318] sm:$0xff]
        %v901 = vld [vmem:[%s744 + $0x320] sm:$0xff]
        %v902 = vld [vmem:[%s744 + $0x328] sm:$0xff]
        %v903 = vld [vmem:[%s744 + $0x330] sm:$0xff]
        %v904 = vld [vmem:[%s744 + $0x338] sm:$0xff]
        %v905 = vld [vmem:[%s744 + $0x340] sm:$0xff]
        %v906 = vld [vmem:[%s744 + $0x348] sm:$0xff]
        %v907 = vld [vmem:[%s744 + $0x350] sm:$0xff]
        %v908 = vld [vmem:[%s744 + $0x358] sm:$0xff]
        %v909 = vld [vmem:[%s744 + $0x360] sm:$0xff]
        %v910 = vld [vmem:[%s744 + $0x368] sm:$0xff]
        %v911 = vld [vmem:[%s744 + $0x370] sm:$0xff]
        %v912 = vld [vmem:[%s744 + $0x378] sm:$0xff]
        %v913 = vld [vmem:[%s744 + $0x380] sm:$0xff]
        %v914 = vld [vmem:[%s744 + $0x388] sm:$0xff]
        %v915 = vld [vmem:[%s744 + $0x390] sm:$0xff]
        %v916 = vld [vmem:[%s744 + $0x398] sm:$0xff]
        %v917 = vld [vmem:[%s744 + $0x3a0] sm:$0xff]
        %v918 = vld [vmem:[%s744 + $0x3a8] sm:$0xff]
        %v919 = vld [vmem:[%s744 + $0x3b0] sm:$0xff]
        %v920 = vld [vmem:[%s744 + $0x3b8] sm:$0xff]
        %v921 = vld [vmem:[%s744 + $0x3c0] sm:$0xff]
        %v922 = vld [vmem:[%s744 + $0x3c8] sm:$0xff]
        %v923 = vld [vmem:[%s744 + $0x3d0] sm:$0xff]
        %v924 = vld [vmem:[%s744 + $0x3d8] sm:$0xff]
        %v925 = vld [vmem:[%s744 + $0x3e0] sm:$0xff]
        %v926 = vld [vmem:[%s744 + $0x3e8] sm:$0xff]
        %v927 = vld [vmem:[%s744 + $0x3f0] sm:$0xff]
        %v928 = vld [vmem:[%s744 + $0x3f8] sm:$0xff]
        %v930 = vcombine.high %v800, %v800
        %v932 = vunpack.c.l.s4 1966171168
        %v933 = vunpack.c.0.s8 %v932
        %v934 = vlaneseq
        %v935 = vshrl.u32 %v934, 7
        %v936 = vsub.s32 %v933, %v935
        %v937 = vrot.slane %v800, %v936
        %v939 = vunpack.c.l.s4 1966171168
        %v940 = vunpack.c.0.s8 %v939
        %v941 = vlaneseq
        %v942 = vshrl.u32 %v941, 7
        %v943 = vsub.s32 %v940, %v942
        %v944 = vrot.slane %v930, %v943
        %v945 = vcombine.high %v937, %v937
        %v946 = vcombine.high %v944, %v944
        %v948 = vunpack.c.l.s4 1966171168
        %v949 = vunpack.c.0.s8 %v948
        %v950 = vlaneseq
        %v951 = vshrl.u32 %v950, 7
        %v952 = vsub.s32 %v949, %v951
        %v953 = vrot.slane %v937, %v952
        %v955 = vunpack.c.l.s4 1966171168
        %v956 = vunpack.c.0.s8 %v955
        %v957 = vlaneseq
        %v958 = vshrl.u32 %v957, 7
        %v959 = vsub.s32 %v956, %v958
        %v960 = vrot.slane %v944, %v959
        %v962 = vunpack.c.l.s4 1966171168
        %v963 = vunpack.c.0.s8 %v962
        %v964 = vlaneseq
        %v965 = vshrl.u32 %v964, 7
        %v966 = vsub.s32 %v963, %v965
        %v967 = vrot.slane %v945, %v966
        %v969 = vunpack.c.l.s4 1966171168
        %v970 = vunpack.c.0.s8 %v969
        %v971 = vlaneseq
        %v972 = vshrl.u32 %v971, 7
        %v973 = vsub.s32 %v970, %v972
        %v974 = vrot.slane %v946, %v973
        %v975 = vcombine.high %v953, %v953
        %v976 = vcombine.high %v960, %v960
        %v977 = vcombine.high %v967, %v967
        %v978 = vcombine.high %v974, %v974
        %v1115 = vunpack.c.l.b16 %v801
        %v1116 = vunpack.c.h.b16 %v801
        %v1117 = vunpack.c.l.b16 %v802
        %v1118 = vunpack.c.h.b16 %v802
        %v1119 = vunpack.c.l.b16 %v803
        %v1120 = vunpack.c.h.b16 %v803
        %v1121 = vunpack.c.l.b16 %v804
        %v1122 = vunpack.c.h.b16 %v804
        %v1123 = vunpack.c.l.b16 %v805
        %v1124 = vunpack.c.h.b16 %v805
        %v1125 = vunpack.c.l.b16 %v806
        %v1126 = vunpack.c.h.b16 %v806
        %v1127 = vunpack.c.l.b16 %v807
        %v1128 = vunpack.c.h.b16 %v807
        %v1129 = vunpack.c.l.b16 %v808
        %v1130 = vunpack.c.h.b16 %v808
        %v1131 = vunpack.c.l.b16 %v809
        %v1132 = vunpack.c.h.b16 %v809
        %v1133 = vunpack.c.l.b16 %v810
        %v1134 = vunpack.c.h.b16 %v810
        %v1135 = vunpack.c.l.b16 %v811
        %v1136 = vunpack.c.h.b16 %v811
        %v1137 = vunpack.c.l.b16 %v812
        %v1138 = vunpack.c.h.b16 %v812
        %v1139 = vunpack.c.l.b16 %v813
        %v1140 = vunpack.c.h.b16 %v813
        %v1141 = vunpack.c.l.b16 %v814
        %v1142 = vunpack.c.h.b16 %v814
        %v1143 = vunpack.c.l.b16 %v815
        %v1144 = vunpack.c.h.b16 %v815
        %v1145 = vunpack.c.l.b16 %v816
        %v1146 = vunpack.c.h.b16 %v816
        %v1147 = vunpack.c.l.b16 %v817
        %v1148 = vunpack.c.h.b16 %v817
        %v1149 = vunpack.c.l.b16 %v818
        %v1150 = vunpack.c.h.b16 %v818
        %v1151 = vunpack.c.l.b16 %v819
        %v1152 = vunpack.c.h.b16 %v819
        %v1153 = vunpack.c.l.b16 %v820
        %v1154 = vunpack.c.h.b16 %v820
        %v1155 = vunpack.c.l.b16 %v821
        %v1156 = vunpack.c.h.b16 %v821
        %v1157 = vunpack.c.l.b16 %v822
        %v1158 = vunpack.c.h.b16 %v822
        %v1159 = vunpack.c.l.b16 %v823
        %v1160 = vunpack.c.h.b16 %v823
        %v1161 = vunpack.c.l.b16 %v824
        %v1162 = vunpack.c.h.b16 %v824
        %v1163 = vunpack.c.l.b16 %v825
        %v1164 = vunpack.c.h.b16 %v825
        %v1165 = vunpack.c.l.b16 %v826
        %v1166 = vunpack.c.h.b16 %v826
        %v1167 = vunpack.c.l.b16 %v827
        %v1168 = vunpack.c.h.b16 %v827
        %v1169 = vunpack.c.l.b16 %v828
        %v1170 = vunpack.c.h.b16 %v828
        %v1171 = vunpack.c.l.b16 %v829
        %v1172 = vunpack.c.h.b16 %v829
        %v1173 = vunpack.c.l.b16 %v830
        %v1174 = vunpack.c.h.b16 %v830
        %v1175 = vunpack.c.l.b16 %v831
        %v1176 = vunpack.c.h.b16 %v831
        %v1177 = vunpack.c.l.b16 %v832
        %v1178 = vunpack.c.h.b16 %v832
        %v1179 = vunpack.c.l.b16 %v833
        %v1180 = vunpack.c.h.b16 %v833
        %v1181 = vunpack.c.l.b16 %v834
        %v1182 = vunpack.c.h.b16 %v834
        %v1183 = vunpack.c.l.b16 %v835
        %v1184 = vunpack.c.h.b16 %v835
        %v1185 = vunpack.c.l.b16 %v836
        %v1186 = vunpack.c.h.b16 %v836
        %v1187 = vunpack.c.l.b16 %v837
        %v1188 = vunpack.c.h.b16 %v837
        %v1189 = vunpack.c.l.b16 %v838
        %v1190 = vunpack.c.h.b16 %v838
        %v1191 = vunpack.c.l.b16 %v839
        %v1192 = vunpack.c.h.b16 %v839
        %v1193 = vunpack.c.l.b16 %v840
        %v1194 = vunpack.c.h.b16 %v840
        %v1195 = vunpack.c.l.b16 %v841
        %v1196 = vunpack.c.h.b16 %v841
        %v1197 = vunpack.c.l.b16 %v842
        %v1198 = vunpack.c.h.b16 %v842
        %v1199 = vunpack.c.l.b16 %v843
        %v1200 = vunpack.c.h.b16 %v843
        %v1201 = vunpack.c.l.b16 %v844
        %v1202 = vunpack.c.h.b16 %v844
        %v1203 = vunpack.c.l.b16 %v845
        %v1204 = vunpack.c.h.b16 %v845
        %v1205 = vunpack.c.l.b16 %v846
        %v1206 = vunpack.c.h.b16 %v846
        %v1207 = vunpack.c.l.b16 %v847
        %v1208 = vunpack.c.h.b16 %v847
        %v1209 = vunpack.c.l.b16 %v848
        %v1210 = vunpack.c.h.b16 %v848
        %v1211 = vunpack.c.l.b16 %v849
        %v1212 = vunpack.c.h.b16 %v849
        %v1213 = vunpack.c.l.b16 %v850
        %v1214 = vunpack.c.h.b16 %v850
        %v1215 = vunpack.c.l.b16 %v851
        %v1216 = vunpack.c.h.b16 %v851
        %v1217 = vunpack.c.l.b16 %v852
        %v1218 = vunpack.c.h.b16 %v852
        %v1219 = vunpack.c.l.b16 %v853
        %v1220 = vunpack.c.h.b16 %v853
        %v1221 = vunpack.c.l.b16 %v854
        %v1222 = vunpack.c.h.b16 %v854
        %v1223 = vunpack.c.l.b16 %v855
        %v1224 = vunpack.c.h.b16 %v855
        %v1225 = vunpack.c.l.b16 %v856
        %v1226 = vunpack.c.h.b16 %v856
        %v1227 = vunpack.c.l.b16 %v857
        %v1228 = vunpack.c.h.b16 %v857
        %v1229 = vunpack.c.l.b16 %v858
        %v1230 = vunpack.c.h.b16 %v858
        %v1231 = vunpack.c.l.b16 %v859
        %v1232 = vunpack.c.h.b16 %v859
        %v1233 = vunpack.c.l.b16 %v860
        %v1234 = vunpack.c.h.b16 %v860
        %v1235 = vunpack.c.l.b16 %v861
        %v1236 = vunpack.c.h.b16 %v861
        %v1237 = vunpack.c.l.b16 %v862
        %v1238 = vunpack.c.h.b16 %v862
        %v1239 = vunpack.c.l.b16 %v863
        %v1240 = vunpack.c.h.b16 %v863
        %v1241 = vunpack.c.l.b16 %v864
        %v1242 = vunpack.c.h.b16 %v864
        %v1243 = vunpack.c.l.b16 %v865
        %v1244 = vunpack.c.h.b16 %v865
        %v1245 = vunpack.c.l.b16 %v866
        %v1246 = vunpack.c.h.b16 %v866
        %v1247 = vunpack.c.l.b16 %v867
        %v1248 = vunpack.c.h.b16 %v867
        %v1249 = vunpack.c.l.b16 %v868
        %v1250 = vunpack.c.h.b16 %v868
        %v1251 = vunpack.c.l.b16 %v869
        %v1252 = vunpack.c.h.b16 %v869
        %v1253 = vunpack.c.l.b16 %v870
        %v1254 = vunpack.c.h.b16 %v870
        %v1255 = vunpack.c.l.b16 %v871
        %v1256 = vunpack.c.h.b16 %v871
        %v1257 = vunpack.c.l.b16 %v872
        %v1258 = vunpack.c.h.b16 %v872
        %v1259 = vunpack.c.l.b16 %v873
        %v1260 = vunpack.c.h.b16 %v873
        %v1261 = vunpack.c.l.b16 %v874
        %v1262 = vunpack.c.h.b16 %v874
        %v1263 = vunpack.c.l.b16 %v875
        %v1264 = vunpack.c.h.b16 %v875
        %v1265 = vunpack.c.l.b16 %v876
        %v1266 = vunpack.c.h.b16 %v876
        %v1267 = vunpack.c.l.b16 %v877
        %v1268 = vunpack.c.h.b16 %v877
        %v1269 = vunpack.c.l.b16 %v878
        %v1270 = vunpack.c.h.b16 %v878
        %v1271 = vunpack.c.l.b16 %v879
        %v1272 = vunpack.c.h.b16 %v879
        %v1273 = vunpack.c.l.b16 %v880
        %v1274 = vunpack.c.h.b16 %v880
        %v1275 = vunpack.c.l.b16 %v881
        %v1276 = vunpack.c.h.b16 %v881
        %v1277 = vunpack.c.l.b16 %v882
        %v1278 = vunpack.c.h.b16 %v882
        %v1279 = vunpack.c.l.b16 %v883
        %v1280 = vunpack.c.h.b16 %v883
        %v1281 = vunpack.c.l.b16 %v884
        %v1282 = vunpack.c.h.b16 %v884
        %v1283 = vunpack.c.l.b16 %v885
        %v1284 = vunpack.c.h.b16 %v885
        %v1285 = vunpack.c.l.b16 %v886
        %v1286 = vunpack.c.h.b16 %v886
        %v1287 = vunpack.c.l.b16 %v887
        %v1288 = vunpack.c.h.b16 %v887
        %v1289 = vunpack.c.l.b16 %v888
        %v1290 = vunpack.c.h.b16 %v888
        %v1291 = vunpack.c.l.b16 %v889
        %v1292 = vunpack.c.h.b16 %v889
        %v1293 = vunpack.c.l.b16 %v890
        %v1294 = vunpack.c.h.b16 %v890
        %v1295 = vunpack.c.l.b16 %v891
        %v1296 = vunpack.c.h.b16 %v891
        %v1297 = vunpack.c.l.b16 %v892
        %v1298 = vunpack.c.h.b16 %v892
        %v1299 = vunpack.c.l.b16 %v893
        %v1300 = vunpack.c.h.b16 %v893
        %v1301 = vunpack.c.l.b16 %v894
        %v1302 = vunpack.c.h.b16 %v894
        %v1303 = vunpack.c.l.b16 %v895
        %v1304 = vunpack.c.h.b16 %v895
        %v1305 = vunpack.c.l.b16 %v896
        %v1306 = vunpack.c.h.b16 %v896
        %v1307 = vunpack.c.l.b16 %v897
        %v1308 = vunpack.c.h.b16 %v897
        %v1309 = vunpack.c.l.b16 %v898
        %v1310 = vunpack.c.h.b16 %v898
        %v1311 = vunpack.c.l.b16 %v899
        %v1312 = vunpack.c.h.b16 %v899
        %v1313 = vunpack.c.l.b16 %v900
        %v1314 = vunpack.c.h.b16 %v900
        %v1315 = vunpack.c.l.b16 %v901
        %v1316 = vunpack.c.h.b16 %v901
        %v1317 = vunpack.c.l.b16 %v902
        %v1318 = vunpack.c.h.b16 %v902
        %v1319 = vunpack.c.l.b16 %v903
        %v1320 = vunpack.c.h.b16 %v903
        %v1321 = vunpack.c.l.b16 %v904
        %v1322 = vunpack.c.h.b16 %v904
        %v1323 = vunpack.c.l.b16 %v905
        %v1324 = vunpack.c.h.b16 %v905
        %v1325 = vunpack.c.l.b16 %v906
        %v1326 = vunpack.c.h.b16 %v906
        %v1327 = vunpack.c.l.b16 %v907
        %v1328 = vunpack.c.h.b16 %v907
        %v1329 = vunpack.c.l.b16 %v908
        %v1330 = vunpack.c.h.b16 %v908
        %v1331 = vunpack.c.l.b16 %v909
        %v1332 = vunpack.c.h.b16 %v909
        %v1333 = vunpack.c.l.b16 %v910
        %v1334 = vunpack.c.h.b16 %v910
        %v1335 = vunpack.c.l.b16 %v911
        %v1336 = vunpack.c.h.b16 %v911
        %v1337 = vunpack.c.l.b16 %v912
        %v1338 = vunpack.c.h.b16 %v912
        %v1339 = vunpack.c.l.b16 %v913
        %v1340 = vunpack.c.h.b16 %v913
        %v1341 = vunpack.c.l.b16 %v914
        %v1342 = vunpack.c.h.b16 %v914
        %v1343 = vunpack.c.l.b16 %v915
        %v1344 = vunpack.c.h.b16 %v915
        %v1345 = vunpack.c.l.b16 %v916
        %v1346 = vunpack.c.h.b16 %v916
        %v1347 = vunpack.c.l.b16 %v917
        %v1348 = vunpack.c.h.b16 %v917
        %v1349 = vunpack.c.l.b16 %v918
        %v1350 = vunpack.c.h.b16 %v918
        %v1351 = vunpack.c.l.b16 %v919
        %v1352 = vunpack.c.h.b16 %v919
        %v1353 = vunpack.c.l.b16 %v920
        %v1354 = vunpack.c.h.b16 %v920
        %v1355 = vunpack.c.l.b16 %v921
        %v1356 = vunpack.c.h.b16 %v921
        %v1357 = vunpack.c.l.b16 %v922
        %v1358 = vunpack.c.h.b16 %v922
        %v1359 = vunpack.c.l.b16 %v923
        %v1360 = vunpack.c.h.b16 %v923
        %v1361 = vunpack.c.l.b16 %v924
        %v1362 = vunpack.c.h.b16 %v924
        %v1363 = vunpack.c.l.b16 %v925
        %v1364 = vunpack.c.h.b16 %v925
        %v1365 = vunpack.c.l.b16 %v926
        %v1366 = vunpack.c.h.b16 %v926
        %v1367 = vunpack.c.l.b16 %v927
        %v1368 = vunpack.c.h.b16 %v927
        %v1369 = vunpack.c.l.b16 %v928
        %v1370 = vunpack.c.h.b16 %v928
        %v1371 = vpack.c.b16 %v1117, %v1115
        %v1372 = vpack.c.b16 %v1118, %v1116
        %v1373 = vpack.c.b16 %v1121, %v1119
        %v1374 = vpack.c.b16 %v1122, %v1120
        %v1375 = vpack.c.b16 %v1125, %v1123
        %v1376 = vpack.c.b16 %v1126, %v1124
        %v1377 = vpack.c.b16 %v1129, %v1127
        %v1378 = vpack.c.b16 %v1130, %v1128
        %v1379 = vpack.c.b16 %v1133, %v1131
        %v1380 = vpack.c.b16 %v1134, %v1132
        %v1381 = vpack.c.b16 %v1137, %v1135
        %v1382 = vpack.c.b16 %v1138, %v1136
        %v1383 = vpack.c.b16 %v1141, %v1139
        %v1384 = vpack.c.b16 %v1142, %v1140
        %v1385 = vpack.c.b16 %v1145, %v1143
        %v1386 = vpack.c.b16 %v1146, %v1144
        %v1387 = vpack.c.b16 %v1149, %v1147
        %v1388 = vpack.c.b16 %v1150, %v1148
        %v1389 = vpack.c.b16 %v1153, %v1151
        %v1390 = vpack.c.b16 %v1154, %v1152
        %v1391 = vpack.c.b16 %v1157, %v1155
        %v1392 = vpack.c.b16 %v1158, %v1156
        %v1393 = vpack.c.b16 %v1161, %v1159
        %v1394 = vpack.c.b16 %v1162, %v1160
        %v1395 = vpack.c.b16 %v1165, %v1163
        %v1396 = vpack.c.b16 %v1166, %v1164
        %v1397 = vpack.c.b16 %v1169, %v1167
        %v1398 = vpack.c.b16 %v1170, %v1168
        %v1399 = vpack.c.b16 %v1173, %v1171
        %v1400 = vpack.c.b16 %v1174, %v1172
        %v1401 = vpack.c.b16 %v1177, %v1175
        %v1402 = vpack.c.b16 %v1178, %v1176
        %v1403 = vpack.c.b16 %v1181, %v1179
        %v1404 = vpack.c.b16 %v1182, %v1180
        %v1405 = vpack.c.b16 %v1185, %v1183
        %v1406 = vpack.c.b16 %v1186, %v1184
        %v1407 = vpack.c.b16 %v1189, %v1187
        %v1408 = vpack.c.b16 %v1190, %v1188
        %v1409 = vpack.c.b16 %v1193, %v1191
        %v1410 = vpack.c.b16 %v1194, %v1192
        %v1411 = vpack.c.b16 %v1197, %v1195
        %v1412 = vpack.c.b16 %v1198, %v1196
        %v1413 = vpack.c.b16 %v1201, %v1199
        %v1414 = vpack.c.b16 %v1202, %v1200
        %v1415 = vpack.c.b16 %v1205, %v1203
        %v1416 = vpack.c.b16 %v1206, %v1204
        %v1417 = vpack.c.b16 %v1209, %v1207
        %v1418 = vpack.c.b16 %v1210, %v1208
        %v1419 = vpack.c.b16 %v1213, %v1211
        %v1420 = vpack.c.b16 %v1214, %v1212
        %v1421 = vpack.c.b16 %v1217, %v1215
        %v1422 = vpack.c.b16 %v1218, %v1216
        %v1423 = vpack.c.b16 %v1221, %v1219
        %v1424 = vpack.c.b16 %v1222, %v1220
        %v1425 = vpack.c.b16 %v1225, %v1223
        %v1426 = vpack.c.b16 %v1226, %v1224
        %v1427 = vpack.c.b16 %v1229, %v1227
        %v1428 = vpack.c.b16 %v1230, %v1228
        %v1429 = vpack.c.b16 %v1233, %v1231
        %v1430 = vpack.c.b16 %v1234, %v1232
        %v1431 = vpack.c.b16 %v1237, %v1235
        %v1432 = vpack.c.b16 %v1238, %v1236
        %v1433 = vpack.c.b16 %v1241, %v1239
        %v1434 = vpack.c.b16 %v1242, %v1240
        %v1435 = vpack.c.b16 %v1245, %v1243
        %v1436 = vpack.c.b16 %v1246, %v1244
        %v1437 = vpack.c.b16 %v1249, %v1247
        %v1438 = vpack.c.b16 %v1250, %v1248
        %v1439 = vpack.c.b16 %v1253, %v1251
        %v1440 = vpack.c.b16 %v1254, %v1252
        %v1441 = vpack.c.b16 %v1257, %v1255
        %v1442 = vpack.c.b16 %v1258, %v1256
        %v1443 = vpack.c.b16 %v1261, %v1259
        %v1444 = vpack.c.b16 %v1262, %v1260
        %v1445 = vpack.c.b16 %v1265, %v1263
        %v1446 = vpack.c.b16 %v1266, %v1264
        %v1447 = vpack.c.b16 %v1269, %v1267
        %v1448 = vpack.c.b16 %v1270, %v1268
        %v1449 = vpack.c.b16 %v1273, %v1271
        %v1450 = vpack.c.b16 %v1274, %v1272
        %v1451 = vpack.c.b16 %v1277, %v1275
        %v1452 = vpack.c.b16 %v1278, %v1276
        %v1453 = vpack.c.b16 %v1281, %v1279
        %v1454 = vpack.c.b16 %v1282, %v1280
        %v1455 = vpack.c.b16 %v1285, %v1283
        %v1456 = vpack.c.b16 %v1286, %v1284
        %v1457 = vpack.c.b16 %v1289, %v1287
        %v1458 = vpack.c.b16 %v1290, %v1288
        %v1459 = vpack.c.b16 %v1293, %v1291
        %v1460 = vpack.c.b16 %v1294, %v1292
        %v1461 = vpack.c.b16 %v1297, %v1295
        %v1462 = vpack.c.b16 %v1298, %v1296
        %v1463 = vpack.c.b16 %v1301, %v1299
        %v1464 = vpack.c.b16 %v1302, %v1300
        %v1465 = vpack.c.b16 %v1305, %v1303
        %v1466 = vpack.c.b16 %v1306, %v1304
        %v1467 = vpack.c.b16 %v1309, %v1307
        %v1468 = vpack.c.b16 %v1310, %v1308
        %v1469 = vpack.c.b16 %v1313, %v1311
        %v1470 = vpack.c.b16 %v1314, %v1312
        %v1471 = vpack.c.b16 %v1317, %v1315
        %v1472 = vpack.c.b16 %v1318, %v1316
        %v1473 = vpack.c.b16 %v1321, %v1319
        %v1474 = vpack.c.b16 %v1322, %v1320
        %v1475 = vpack.c.b16 %v1325, %v1323
        %v1476 = vpack.c.b16 %v1326, %v1324
        %v1477 = vpack.c.b16 %v1329, %v1327
        %v1478 = vpack.c.b16 %v1330, %v1328
        %v1479 = vpack.c.b16 %v1333, %v1331
        %v1480 = vpack.c.b16 %v1334, %v1332
        %v1481 = vpack.c.b16 %v1337, %v1335
        %v1482 = vpack.c.b16 %v1338, %v1336
        %v1483 = vpack.c.b16 %v1341, %v1339
        %v1484 = vpack.c.b16 %v1342, %v1340
        %v1485 = vpack.c.b16 %v1345, %v1343
        %v1486 = vpack.c.b16 %v1346, %v1344
        %v1487 = vpack.c.b16 %v1349, %v1347
        %v1488 = vpack.c.b16 %v1350, %v1348
        %v1489 = vpack.c.b16 %v1353, %v1351
        %v1490 = vpack.c.b16 %v1354, %v1352
        %v1491 = vpack.c.b16 %v1357, %v1355
        %v1492 = vpack.c.b16 %v1358, %v1356
        %v1493 = vpack.c.b16 %v1361, %v1359
        %v1494 = vpack.c.b16 %v1362, %v1360
        %v1495 = vpack.c.b16 %v1365, %v1363
        %v1496 = vpack.c.b16 %v1366, %v1364
        %v1497 = vpack.c.b16 %v1369, %v1367
        %v1498 = vpack.c.b16 %v1370, %v1368
        %1627 = vmatprep.subr.bf16.mxu0 %v1386
        %1628 = vmatpush1.bf16.msra.mxu0 %v1385
        %1629 = vmatprep.subr.bf16.mxu0 %v1384
        %1630 = vmatpush1.bf16.msra.mxu0 %v1383
        %1631 = vmatprep.subr.bf16.mxu0 %v1382
        %1632 = vmatpush1.bf16.msra.mxu0 %v1381
        %1633 = vmatprep.subr.bf16.mxu0 %v1380
        %1634 = vmatpush1.bf16.msra.mxu0 %v1379
        %1635 = vmatprep.subr.bf16.mxu0 %v1378
        %1636 = vmatpush1.bf16.msra.mxu0 %v1377
        %1637 = vmatprep.subr.bf16.mxu0 %v1376
        %1638 = vmatpush1.bf16.msra.mxu0 %v1375
        %1639 = vmatprep.subr.bf16.mxu0 %v1374
        %1640 = vmatpush1.bf16.msra.mxu0 %v1373
        %1641 = vmatprep.subr.bf16.mxu0 %v1372
        %1642 = vmatpush1.bf16.msra.mxu0 %v1371
        %1643 = vmatprep.subr.bf16.mxu0 %v1402
        %1644 = vmatpush2.bf16.msra.mxu0 %v1401
        %1645 = vmatprep.subr.bf16.mxu0 %v1400
        %1646 = vmatpush2.bf16.msra.mxu0 %v1399
        %1647 = vmatprep.subr.bf16.mxu0 %v1398
        %1648 = vmatpush2.bf16.msra.mxu0 %v1397
        %1649 = vmatprep.subr.bf16.mxu0 %v1396
        %1650 = vmatpush2.bf16.msra.mxu0 %v1395
        %1651 = vmatprep.subr.bf16.mxu0 %v1394
        %1652 = vmatpush2.bf16.msra.mxu0 %v1393
        %1653 = vmatprep.subr.bf16.mxu0 %v1392
        %1654 = vmatpush2.bf16.msra.mxu0 %v1391
        %1655 = vmatprep.subr.bf16.mxu0 %v1390
        %1656 = vmatpush2.bf16.msra.mxu0 %v1389
        %1657 = vmatprep.subr.bf16.mxu0 %v1388
        %1658 = vmatpush2.bf16.msra.mxu0 %v1387
        %1659 = vmatprep.mubr.bf16.mxu0 %v967
        %1660 = vmatmul.mubr.bf16.gmra.mxu0 %v953
        %v1661 = vpop.f32.mrf.mxu0
        %v1662 = vadd.f32 0.0, %v1661
        %v1663 = vpop.f32.mrf.mxu0
        %v1664 = vadd.f32 0.0, %v1663
        %v1665 = vpop.f32.mrf.mxu0
        %v1666 = vpop.f32.mrf.mxu0
        %1667 = vdwg.mxu0
        %1668 = vmatprep.subr.bf16.mxu0 %v1418
        %1669 = vmatpush1.bf16.msra.mxu0 %v1417
        %1670 = vmatprep.subr.bf16.mxu0 %v1416
        %1671 = vmatpush1.bf16.msra.mxu0 %v1415
        %1672 = vmatprep.subr.bf16.mxu0 %v1414
        %1673 = vmatpush1.bf16.msra.mxu0 %v1413
        %1674 = vmatprep.subr.bf16.mxu0 %v1412
        %1675 = vmatpush1.bf16.msra.mxu0 %v1411
        %1676 = vmatprep.subr.bf16.mxu0 %v1410
        %1677 = vmatpush1.bf16.msra.mxu0 %v1409
        %1678 = vmatprep.subr.bf16.mxu0 %v1408
        %1679 = vmatpush1.bf16.msra.mxu0 %v1407
        %1680 = vmatprep.subr.bf16.mxu0 %v1406
        %1681 = vmatpush1.bf16.msra.mxu0 %v1405
        %1682 = vmatprep.subr.bf16.mxu0 %v1404
        %1683 = vmatpush1.bf16.msra.mxu0 %v1403
        %1684 = vmatprep.subr.bf16.mxu0 %v1434
        %1685 = vmatpush2.bf16.msra.mxu0 %v1433
        %1686 = vmatprep.subr.bf16.mxu0 %v1432
        %1687 = vmatpush2.bf16.msra.mxu0 %v1431
        %1688 = vmatprep.subr.bf16.mxu0 %v1430
        %1689 = vmatpush2.bf16.msra.mxu0 %v1429
        %1690 = vmatprep.subr.bf16.mxu0 %v1428
        %1691 = vmatpush2.bf16.msra.mxu0 %v1427
        %1692 = vmatprep.subr.bf16.mxu0 %v1426
        %1693 = vmatpush2.bf16.msra.mxu0 %v1425
        %1694 = vmatprep.subr.bf16.mxu0 %v1424
        %1695 = vmatpush2.bf16.msra.mxu0 %v1423
        %1696 = vmatprep.subr.bf16.mxu0 %v1422
        %1697 = vmatpush2.bf16.msra.mxu0 %v1421
        %1698 = vmatprep.subr.bf16.mxu0 %v1420
        %1699 = vmatpush2.bf16.msra.mxu0 %v1419
        %1700 = vmatprep.mubr.bf16.mxu0 %v977
        %1701 = vmatmul.mubr.bf16.gmra.mxu0 %v975
        %v1702 = vpop.f32.mrf.mxu0
        %v1703 = vadd.f32 %v1662, %v1702
        %v1704 = vpop.f32.mrf.mxu0
        %v1705 = vadd.f32 %v1664, %v1704
        %v1706 = vpop.f32.mrf.mxu0
        %v1707 = vpop.f32.mrf.mxu0
        %1708 = vdwg.mxu0
        %1709 = vmatprep.subr.bf16.mxu0 %v1450
        %1710 = vmatpush1.bf16.msra.mxu0 %v1449
        %1711 = vmatprep.subr.bf16.mxu0 %v1448
        %1712 = vmatpush1.bf16.msra.mxu0 %v1447
        %1713 = vmatprep.subr.bf16.mxu0 %v1446
        %1714 = vmatpush1.bf16.msra.mxu0 %v1445
        %1715 = vmatprep.subr.bf16.mxu0 %v1444
        %1716 = vmatpush1.bf16.msra.mxu0 %v1443
        %1717 = vmatprep.subr.bf16.mxu0 %v1442
        %1718 = vmatpush1.bf16.msra.mxu0 %v1441
        %1719 = vmatprep.subr.bf16.mxu0 %v1440
        %1720 = vmatpush1.bf16.msra.mxu0 %v1439
        %1721 = vmatprep.subr.bf16.mxu0 %v1438
        %1722 = vmatpush1.bf16.msra.mxu0 %v1437
        %1723 = vmatprep.subr.bf16.mxu0 %v1436
        %1724 = vmatpush1.bf16.msra.mxu0 %v1435
        %1725 = vmatprep.subr.bf16.mxu0 %v1466
        %1726 = vmatpush2.bf16.msra.mxu0 %v1465
        %1727 = vmatprep.subr.bf16.mxu0 %v1464
        %1728 = vmatpush2.bf16.msra.mxu0 %v1463
        %1729 = vmatprep.subr.bf16.mxu0 %v1462
        %1730 = vmatpush2.bf16.msra.mxu0 %v1461
        %1731 = vmatprep.subr.bf16.mxu0 %v1460
        %1732 = vmatpush2.bf16.msra.mxu0 %v1459
        %1733 = vmatprep.subr.bf16.mxu0 %v1458
        %1734 = vmatpush2.bf16.msra.mxu0 %v1457
        %1735 = vmatprep.subr.bf16.mxu0 %v1456
        %1736 = vmatpush2.bf16.msra.mxu0 %v1455
        %1737 = vmatprep.subr.bf16.mxu0 %v1454
        %1738 = vmatpush2.bf16.msra.mxu0 %v1453
        %1739 = vmatprep.subr.bf16.mxu0 %v1452
        %1740 = vmatpush2.bf16.msra.mxu0 %v1451
        %1741 = vmatprep.mubr.bf16.mxu0 %v974
        %1742 = vmatmul.mubr.bf16.gmra.mxu0 %v960
        %v1743 = vpop.f32.mrf.mxu0
        %v1744 = vadd.f32 %v1703, %v1743
        %v1745 = vpop.f32.mrf.mxu0
        %v1746 = vadd.f32 %v1705, %v1745
        %v1747 = vpop.f32.mrf.mxu0
        %v1748 = vpop.f32.mrf.mxu0
        %1749 = vdwg.mxu0
        %1750 = vmatprep.subr.bf16.mxu0 %v1482
        %1751 = vmatpush1.bf16.msra.mxu0 %v1481
        %1752 = vmatprep.subr.bf16.mxu0 %v1480
        %1753 = vmatpush1.bf16.msra.mxu0 %v1479
        %1754 = vmatprep.subr.bf16.mxu0 %v1478
        %1755 = vmatpush1.bf16.msra.mxu0 %v1477
        %1756 = vmatprep.subr.bf16.mxu0 %v1476
        %1757 = vmatpush1.bf16.msra.mxu0 %v1475
        %1758 = vmatprep.subr.bf16.mxu0 %v1474
        %1759 = vmatpush1.bf16.msra.mxu0 %v1473
        %1760 = vmatprep.subr.bf16.mxu0 %v1472
        %1761 = vmatpush1.bf16.msra.mxu0 %v1471
        %1762 = vmatprep.subr.bf16.mxu0 %v1470
        %1763 = vmatpush1.bf16.msra.mxu0 %v1469
        %1764 = vmatprep.subr.bf16.mxu0 %v1468
        %1765 = vmatpush1.bf16.msra.mxu0 %v1467
        %1766 = vmatprep.subr.bf16.mxu0 %v1498
        %1767 = vmatpush2.bf16.msra.mxu0 %v1497
        %1768 = vmatprep.subr.bf16.mxu0 %v1496
        %1769 = vmatpush2.bf16.msra.mxu0 %v1495
        %1770 = vmatprep.subr.bf16.mxu0 %v1494
        %1771 = vmatpush2.bf16.msra.mxu0 %v1493
        %1772 = vmatprep.subr.bf16.mxu0 %v1492
        %1773 = vmatpush2.bf16.msra.mxu0 %v1491
        %1774 = vmatprep.subr.bf16.mxu0 %v1490
        %1775 = vmatpush2.bf16.msra.mxu0 %v1489
        %1776 = vmatprep.subr.bf16.mxu0 %v1488
        %1777 = vmatpush2.bf16.msra.mxu0 %v1487
        %1778 = vmatprep.subr.bf16.mxu0 %v1486
        %1779 = vmatpush2.bf16.msra.mxu0 %v1485
        %1780 = vmatprep.subr.bf16.mxu0 %v1484
        %1781 = vmatpush2.bf16.msra.mxu0 %v1483
        %1782 = vmatprep.mubr.bf16.mxu0 %v978
        %1783 = vmatmul.mubr.bf16.gmra.mxu0 %v976
        %v1784 = vpop.f32.mrf.mxu0
        %v1785 = vadd.f32 %v1744, %v1784
        %v1786 = vpop.f32.mrf.mxu0
        %v1787 = vadd.f32 %v1746, %v1786
        %v1788 = vpop.f32.mrf.mxu0
        %v1789 = vpop.f32.mrf.mxu0
        %1790 = vdwg.mxu0
        %v1793 = vcombine.low %v1785, %v1787
        %v1795 = vunpack.c.l.s4 1983009808
        %v1796 = vunpack.c.0.s8 %v1795
        %v1797 = vlaneseq
        %v1798 = vshrl.u32 %v1797, 7
        %v1799 = vsub.s32 %v1796, %v1798
        %v1800 = vrot.slane %v1793, %v1799
        %v1802 = vadd.f32 %v799, %v1800
        %1803 = vst [vmem:[#allocation2] sm:$0xf] %v1802
        // Predicated region
        $region75: #{encoder_forward.7} parent=65 // pred_check
          %p1804 = pneg %p794
        $region76: #{encoder_forward.7} parent=65 // pred_check_branch
          %1806 = sbr.rel (%p1804) target = $region78
        $region77: #{encoder_forward.7} parent=65 // pred_region
          %v1807 = vld [vmem:[#allocation2] sm:$0xf]
          %v1808 = vld [vmem:[%s791] sm:$0x3]
          %v1810 = vlaneseq
          %v1811 = vshrl.u32 %v1810, 7
          %v1812 = vsub.s32 0, %v1811
          %v1813 = vrot.slane %v1808, %v1812
          %v1814 = vlaneseq
          %v1815 = vshrl.u32 %v1814, 7
          %v1816 = vsub.s32 1, %v1815
          %v1817 = vrot.slane %v1808, %v1816
          %v1818 = vcombine.low %v1813, %v1817
          %v1820 = vunpack.c.l.s4 1983009808
          %v1821 = vunpack.c.0.s8 %v1820
          %v1822 = vlaneseq
          %v1823 = vshrl.u32 %v1822, 7
          %v1824 = vsub.s32 %v1821, %v1823
          %v1825 = vrot.slane %v1818, %v1824
          %v1827 = vadd.f32 %v1807, %v1825
          %1828 = vst [vmem:[%s776] sm:$0xf] %v1827
        $region78: #{encoder_forward.7} parent=65 // pred_fallthru
          _
        %s1829 = sand.u32 %s128, 1
        %s1830 = scalar_lea.sflag [#allocation5], %s1829
        %s1831 = sand.u32 %s128, 1
        %s1832 = smul.addr %s1831, 4
        %s1833 = scalar_lea.vmem [#allocation4], %s1832
        // Predicated region
        $region79: #{encoder_forward.7} parent=65 // pred_check
          %p1834 = pneg %p138
        $region80: #{encoder_forward.7} parent=65 // pred_check_branch
          %1836 = sbr.rel (%p1834) target = $region82
        $region81: #{encoder_forward.7} parent=65 // pred_region
          %s1837 = smul.u32 2, %s23
          %s1839 = ssub.s32 64, 64
          %1840 = vsyncadd %s1830, %s1839
          %s1841 = smul.addr %s22, 4
          %s1842 = sadd.s32 %s1837, %s1841
          %s1843 = smul.addr %s1842, 32
          %s1844 = scalar_lea.hbm %s3, %s1843
          %s1846 = sshll.u32 %s1833, 4
          %s1847 = int_to_ptr.vmem [resolvable:$true] %s1846
          %1849 = dma.vmem_to_hbm [thread:$0]  %s1847, 64, %s1844, %s1830
        $region82: #{encoder_forward.7} parent=65 // pred_fallthru
          _
      $region66: #{encoder_forward.7} parent=5 // pred_fallthru
        _
      %p1850 = scmp.le.s32.totalorder 2, %s12
      // Predicated region
      $region83: #{encoder_forward.7} parent=5 // pred_check
        %p1851 = pneg %p1850
      $region84: #{encoder_forward.7} parent=5 // pred_check_branch
        %1853 = sbr.rel (%p1851) target = $region86
      $region85: #{encoder_forward.7} parent=5 // pred_region
        %s1854 = ssub.s32 %s12, 2
        // Predicated region
        $region87: #{encoder_forward.7} parent=85 // pred_check
          %p1855 = pneg %p144
        $region88: #{encoder_forward.7} parent=85 // pred_check_branch
          %1857 = sbr.rel (%p1855) target = $region90
        $region89: #{encoder_forward.7} parent=85 // pred_region
          %s1858 = sand.u32 %s129, 1
          %s1859 = scalar_lea.sflag [#allocation5], %s1858
          %s1860 = sand.u32 %s129, 1
          %s1861 = smul.addr %s1860, 4
          %s1862 = scalar_lea.vmem [#allocation4], %s1861
          %1863 = dma.done %s1859, 64
        $region90: #{encoder_forward.7} parent=85 // pred_fallthru
          _
      $region86: #{encoder_forward.7} parent=5 // pred_fallthru
        _
    $region6: #{encoder_forward.7} parent=1 // loop_footer
      %s16 = sadd.s32 1, %s12
    $region7: #{encoder_forward.7} parent=1 // loop_footer_branch
      %11 = sbr.rel target = $region3
    $region8: #{encoder_forward.7} parent=1 // loop_exit
      _
    %1864 = vsyncpa [#allocation5], 1
    %s1865 = scalar_lea.sflag [#allocation5], 1
    %1866 = vsyncpa %s1865, 1

// kernel: encoder_forward.6
$region0: #{encoder_forward.6}
  #allocation0 [shape = 'u32[]', space=smem, size = 0x4, offset = 0x4, fixed_abs, tag = 'smem constant byte address 0x4 - core index']
  #allocation1 [shape = 'u32[144,128]{1,0:T(1,128)}', space=vmem, size = 0x12000, scoped, tag = 'internal scratch']
  #allocation2 [shape = 'f32[16,128]{1,0:T(8,128)}', space=vmem, size = 0x2000, scoped, tag = 'scratch operand']
  %s0 = inlined_call_operand.vmem [shape: bf16[16,1728], index: 0, kind: input, shape index: {}]
  %s1 = inlined_call_operand.vmem [shape: bf16[1728,128], index: 1, kind: input, shape index: {}]
  %s2 = inlined_call_operand.vmem [shape: f32[1,128], index: 2, kind: input, shape index: {}]
  %s3 = inlined_call_operand.vmem [shape: bf16[16,128], index: 3, kind: output, shape index: {}]
  %s4 = sld [smem:[#allocation0]]
  $region30: #{encoder_forward.6} parent=0
    _
  %s6 = ssub.s32 1, %s4
  %s7 = scalar_select 0, %s6, %s4
  // Predicated region
  $region2: #{encoder_forward.6} parent=0 // pred_check
    _
  $region3: #{encoder_forward.6} parent=0 // pred_check_branch
    %9 = sbr.rel (0) target = $region5
  $region4: #{encoder_forward.6} parent=0 // pred_region
    _
  $region5: #{encoder_forward.6} parent=0 // pred_fallthru
    _
  // Predicated region
  $region6: #{encoder_forward.6} parent=0 // pred_check
    _
  $region7: #{encoder_forward.6} parent=0 // pred_check_branch
    %11 = sbr.rel (0) target = $region9
  $region8: #{encoder_forward.6} parent=0 // pred_region
    _
  $region9: #{encoder_forward.6} parent=0 // pred_fallthru
    _
  // Predicated region
  $region10: #{encoder_forward.6} parent=0 // pred_check
    _
  $region11: #{encoder_forward.6} parent=0 // pred_check_branch
    %13 = sbr.rel (0) target = $region13
  $region12: #{encoder_forward.6} parent=0 // pred_region
    _
  $region13: #{encoder_forward.6} parent=0 // pred_fallthru
    _
  %p15 = scmp.eq.s32.totalorder 0, 0
  // Predicated region
  $region14: #{encoder_forward.6} parent=0 // pred_check
    %p16 = pneg %p15
  $region15: #{encoder_forward.6} parent=0 // pred_check_branch
    %18 = sbr.rel (%p16) target = $region17
  $region16: #{encoder_forward.6} parent=0 // pred_region
    %19 = vst [vmem:[#allocation2] sm:$0xff] 0.0
    %20 = vst [vmem:[#allocation2 + $0x8] sm:$0xff] 0.0
  $region17: #{encoder_forward.6} parent=0 // pred_fallthru
    _
  %v21 = vld [vmem:[#allocation2] sm:$0xff]
  %v22 = vld [vmem:[#allocation2 + $0x8] sm:$0xff]
  %v23 = vld [vmem:[%s0] sm:$0xff]
  %v24 = vld [vmem:[%s0 + $0x8] sm:$0xff]
  %v25 = vld [vmem:[%s0 + $0x10] sm:$0xff]
  %v26 = vld [vmem:[%s0 + $0x18] sm:$0xff]
  %v27 = vld [vmem:[%s0 + $0x20] sm:$0xff]
  %v28 = vld [vmem:[%s0 + $0x28] sm:$0xff]
  %v29 = vld [vmem:[%s0 + $0x30] sm:$0xff]
  %v30 = vld [vmem:[%s0 + $0x38] sm:$0xff]
  %v31 = vld [vmem:[%s0 + $0x40] sm:$0xff]
  %v32 = vld [vmem:[%s0 + $0x48] sm:$0xff]
  %v33 = vld [vmem:[%s0 + $0x50] sm:$0xff]
  %v34 = vld [vmem:[%s0 + $0x58] sm:$0xff]
  %v35 = vld [vmem:[%s0 + $0x60] sm:$0xff]
  %v36 = vld [vmem:[%s0 + $0x68] sm:$0xff]
  %v37 = vld [vmem:[%s1] sm:$0xf]
  %v38 = vld [vmem:[%s1 + $0x4] sm:$0xf]
  %v39 = vld [vmem:[%s1 + $0x8] sm:$0xf]
  %v40 = vld [vmem:[%s1 + $0xc] sm:$0xf]
  %v41 = vld [vmem:[%s1 + $0x10] sm:$0xf]
  %v42 = vld [vmem:[%s1 + $0x14] sm:$0xf]
  %v43 = vld [vmem:[%s1 + $0x18] sm:$0xf]
  %v44 = vld [vmem:[%s1 + $0x1c] sm:$0xf]
  %v45 = vld [vmem:[%s1 + $0x20] sm:$0xf]
  %v46 = vld [vmem:[%s1 + $0x24] sm:$0xf]
  %v47 = vld [vmem:[%s1 + $0x28] sm:$0xf]
  %v48 = vld [vmem:[%s1 + $0x2c] sm:$0xf]
  %v49 = vld [vmem:[%s1 + $0x30] sm:$0xf]
  %v50 = vld [vmem:[%s1 + $0x34] sm:$0xf]
  %v51 = vld [vmem:[%s1 + $0x38] sm:$0xf]
  %v52 = vld [vmem:[%s1 + $0x3c] sm:$0xf]
  %v53 = vld [vmem:[%s1 + $0x40] sm:$0xf]
  %v54 = vld [vmem:[%s1 + $0x44] sm:$0xf]
  %v55 = vld [vmem:[%s1 + $0x48] sm:$0xf]
  %v56 = vld [vmem:[%s1 + $0x4c] sm:$0xf]
  %v57 = vld [vmem:[%s1 + $0x50] sm:$0xf]
  %v58 = vld [vmem:[%s1 + $0x54] sm:$0xf]
  %v59 = vld [vmem:[%s1 + $0x58] sm:$0xf]
  %v60 = vld [vmem:[%s1 + $0x5c] sm:$0xf]
  %v61 = vld [vmem:[%s1 + $0x60] sm:$0xf]
  %v62 = vld [vmem:[%s1 + $0x64] sm:$0xf]
  %v63 = vld [vmem:[%s1 + $0x68] sm:$0xf]
  %v64 = vld [vmem:[%s1 + $0x6c] sm:$0xf]
  %v65 = vld [vmem:[%s1 + $0x70] sm:$0xf]
  %v66 = vld [vmem:[%s1 + $0x74] sm:$0xf]
  %v67 = vld [vmem:[%s1 + $0x78] sm:$0xf]
  %v68 = vld [vmem:[%s1 + $0x7c] sm:$0xf]
  %v69 = vld [vmem:[%s1 + $0x80] sm:$0xf]
  %v70 = vld [vmem:[%s1 + $0x84] sm:$0xf]
  %v71 = vld [vmem:[%s1 + $0x88] sm:$0xf]
  %v72 = vld [vmem:[%s1 + $0x8c] sm:$0xf]
  %v73 = vld [vmem:[%s1 + $0x90] sm:$0xf]
  %v74 = vld [vmem:[%s1 + $0x94] sm:$0xf]
  %v75 = vld [vmem:[%s1 + $0x98] sm:$0xf]
  %v76 = vld [vmem:[%s1 + $0x9c] sm:$0xf]
  %v77 = vld [vmem:[%s1 + $0xa0] sm:$0xf]
  %v78 = vld [vmem:[%s1 + $0xa4] sm:$0xf]
  %v79 = vld [vmem:[%s1 + $0xa8] sm:$0xf]
  %v80 = vld [vmem:[%s1 + $0xac] sm:$0xf]
  %v81 = vld [vmem:[%s1 + $0xb0] sm:$0xf]
  %v82 = vld [vmem:[%s1 + $0xb4] sm:$0xf]
  %v83 = vld [vmem:[%s1 + $0xb8] sm:$0xf]
  %v84 = vld [vmem:[%s1 + $0xbc] sm:$0xf]
  %v85 = vld [vmem:[%s1 + $0xc0] sm:$0xf]
  %v86 = vld [vmem:[%s1 + $0xc4] sm:$0xf]
  %v87 = vld [vmem:[%s1 + $0xc8] sm:$0xf]
  %v88 = vld [vmem:[%s1 + $0xcc] sm:$0xf]
  %v89 = vld [vmem:[%s1 + $0xd0] sm:$0xf]
  %v90 = vld [vmem:[%s1 + $0xd4] sm:$0xf]
  %v91 = vld [vmem:[%s1 + $0xd8] sm:$0xf]
  %v92 = vld [vmem:[%s1 + $0xdc] sm:$0xf]
  %v93 = vld [vmem:[%s1 + $0xe0] sm:$0xf]
  %v94 = vld [vmem:[%s1 + $0xe4] sm:$0xf]
  %v95 = vld [vmem:[%s1 + $0xe8] sm:$0xf]
  %v96 = vld [vmem:[%s1 + $0xec] sm:$0xf]
  %v97 = vld [vmem:[%s1 + $0xf0] sm:$0xf]
  %v98 = vld [vmem:[%s1 + $0xf4] sm:$0xf]
  %v99 = vld [vmem:[%s1 + $0xf8] sm:$0xf]
  %v100 = vld [vmem:[%s1 + $0xfc] sm:$0xf]
  %v101 = vld [vmem:[%s1 + $0x100] sm:$0xf]
  %v102 = vld [vmem:[%s1 + $0x104] sm:$0xf]
  %v103 = vld [vmem:[%s1 + $0x108] sm:$0xf]
  %v104 = vld [vmem:[%s1 + $0x10c] sm:$0xf]
  %v105 = vld [vmem:[%s1 + $0x110] sm:$0xf]
  %v106 = vld [vmem:[%s1 + $0x114] sm:$0xf]
  %v107 = vld [vmem:[%s1 + $0x118] sm:$0xf]
  %v108 = vld [vmem:[%s1 + $0x11c] sm:$0xf]
  %v109 = vld [vmem:[%s1 + $0x120] sm:$0xf]
  %v110 = vld [vmem:[%s1 + $0x124] sm:$0xf]
  %v111 = vld [vmem:[%s1 + $0x128] sm:$0xf]
  %v112 = vld [vmem:[%s1 + $0x12c] sm:$0xf]
  %v113 = vld [vmem:[%s1 + $0x130] sm:$0xf]
  %v114 = vld [vmem:[%s1 + $0x134] sm:$0xf]
  %v115 = vld [vmem:[%s1 + $0x138] sm:$0xf]
  %v116 = vld [vmem:[%s1 + $0x13c] sm:$0xf]
  %v117 = vld [vmem:[%s1 + $0x140] sm:$0xf]
  %v118 = vld [vmem:[%s1 + $0x144] sm:$0xf]
  %v119 = vld [vmem:[%s1 + $0x148] sm:$0xf]
  %v120 = vld [vmem:[%s1 + $0x14c] sm:$0xf]
  %v121 = vld [vmem:[%s1 + $0x150] sm:$0xf]
  %v122 = vld [vmem:[%s1 + $0x154] sm:$0xf]
  %v123 = vld [vmem:[%s1 + $0x158] sm:$0xf]
  %v124 = vld [vmem:[%s1 + $0x15c] sm:$0xf]
  %v125 = vld [vmem:[%s1 + $0x160] sm:$0xf]
  %v126 = vld [vmem:[%s1 + $0x164] sm:$0xf]
  %v127 = vld [vmem:[%s1 + $0x168] sm:$0xf]
  %v128 = vld [vmem:[%s1 + $0x16c] sm:$0xf]
  %v129 = vld [vmem:[%s1 + $0x170] sm:$0xf]
  %v130 = vld [vmem:[%s1 + $0x174] sm:$0xf]
  %v131 = vld [vmem:[%s1 + $0x178] sm:$0xf]
  %v132 = vld [vmem:[%s1 + $0x17c] sm:$0xf]
  %v133 = vld [vmem:[%s1 + $0x180] sm:$0xf]
  %v134 = vld [vmem:[%s1 + $0x184] sm:$0xf]
  %v135 = vld [vmem:[%s1 + $0x188] sm:$0xf]
  %v136 = vld [vmem:[%s1 + $0x18c] sm:$0xf]
  %v137 = vld [vmem:[%s1 + $0x190] sm:$0xf]
  %v138 = vld [vmem:[%s1 + $0x194] sm:$0xf]
  %v139 = vld [vmem:[%s1 + $0x198] sm:$0xf]
  %v140 = vld [vmem:[%s1 + $0x19c] sm:$0xf]
  %v141 = vld [vmem:[%s1 + $0x1a0] sm:$0xf]
  %v142 = vld [vmem:[%s1 + $0x1a4] sm:$0xf]
  %v143 = vld [vmem:[%s1 + $0x1a8] sm:$0xf]
  %v144 = vld [vmem:[%s1 + $0x1ac] sm:$0xf]
  %v145 = vld [vmem:[%s1 + $0x1b0] sm:$0xf]
  %v146 = vld [vmem:[%s1 + $0x1b4] sm:$0xf]
  %v147 = vld [vmem:[%s1 + $0x1b8] sm:$0xf]
  %v148 = vld [vmem:[%s1 + $0x1bc] sm:$0xf]
  %v149 = vld [vmem:[%s1 + $0x1c0] sm:$0xf]
  %v150 = vld [vmem:[%s1 + $0x1c4] sm:$0xf]
  %v151 = vld [vmem:[%s1 + $0x1c8] sm:$0xf]
  %v152 = vld [vmem:[%s1 + $0x1cc] sm:$0xf]
  %v153 = vld [vmem:[%s1 + $0x1d0] sm:$0xf]
  %v154 = vld [vmem:[%s1 + $0x1d4] sm:$0xf]
  %v155 = vld [vmem:[%s1 + $0x1d8] sm:$0xf]
  %v156 = vld [vmem:[%s1 + $0x1dc] sm:$0xf]
  %v157 = vld [vmem:[%s1 + $0x1e0] sm:$0xf]
  %v158 = vld [vmem:[%s1 + $0x1e4] sm:$0xf]
  %v159 = vld [vmem:[%s1 + $0x1e8] sm:$0xf]
  %v160 = vld [vmem:[%s1 + $0x1ec] sm:$0xf]
  %v161 = vld [vmem:[%s1 + $0x1f0] sm:$0xf]
  %v162 = vld [vmem:[%s1 + $0x1f4] sm:$0xf]
  %v163 = vld [vmem:[%s1 + $0x1f8] sm:$0xf]
  %v164 = vld [vmem:[%s1 + $0x1fc] sm:$0xf]
  %v165 = vld [vmem:[%s1 + $0x200] sm:$0xf]
  %v166 = vld [vmem:[%s1 + $0x204] sm:$0xf]
  %v167 = vld [vmem:[%s1 + $0x208] sm:$0xf]
  %v168 = vld [vmem:[%s1 + $0x20c] sm:$0xf]
  %v169 = vld [vmem:[%s1 + $0x210] sm:$0xf]
  %v170 = vld [vmem:[%s1 + $0x214] sm:$0xf]
  %v171 = vld [vmem:[%s1 + $0x218] sm:$0xf]
  %v172 = vld [vmem:[%s1 + $0x21c] sm:$0xf]
  %v173 = vld [vmem:[%s1 + $0x220] sm:$0xf]
  %v174 = vld [vmem:[%s1 + $0x224] sm:$0xf]
  %v175 = vld [vmem:[%s1 + $0x228] sm:$0xf]
  %v176 = vld [vmem:[%s1 + $0x22c] sm:$0xf]
  %v177 = vld [vmem:[%s1 + $0x230] sm:$0xf]
  %v178 = vld [vmem:[%s1 + $0x234] sm:$0xf]
  %v179 = vld [vmem:[%s1 + $0x238] sm:$0xf]
  %v180 = vld [vmem:[%s1 + $0x23c] sm:$0xf]
  %v181 = vld [vmem:[%s1 + $0x240] sm:$0xf]
  %v182 = vld [vmem:[%s1 + $0x244] sm:$0xf]
  %v183 = vld [vmem:[%s1 + $0x248] sm:$0xf]
  %v184 = vld [vmem:[%s1 + $0x24c] sm:$0xf]
  %v185 = vld [vmem:[%s1 + $0x250] sm:$0xf]
  %v186 = vld [vmem:[%s1 + $0x254] sm:$0xf]
  %v187 = vld [vmem:[%s1 + $0x258] sm:$0xf]
  %v188 = vld [vmem:[%s1 + $0x25c] sm:$0xf]
  %v189 = vld [vmem:[%s1 + $0x260] sm:$0xf]
  %v190 = vld [vmem:[%s1 + $0x264] sm:$0xf]
  %v191 = vld [vmem:[%s1 + $0x268] sm:$0xf]
  %v192 = vld [vmem:[%s1 + $0x26c] sm:$0xf]
  %v193 = vld [vmem:[%s1 + $0x270] sm:$0xf]
  %v194 = vld [vmem:[%s1 + $0x274] sm:$0xf]
  %v195 = vld [vmem:[%s1 + $0x278] sm:$0xf]
  %v196 = vld [vmem:[%s1 + $0x27c] sm:$0xf]
  %v197 = vld [vmem:[%s1 + $0x280] sm:$0xf]
  %v198 = vld [vmem:[%s1 + $0x284] sm:$0xf]
  %v199 = vld [vmem:[%s1 + $0x288] sm:$0xf]
  %v200 = vld [vmem:[%s1 + $0x28c] sm:$0xf]
  %v201 = vld [vmem:[%s1 + $0x290] sm:$0xf]
  %v202 = vld [vmem:[%s1 + $0x294] sm:$0xf]
  %v203 = vld [vmem:[%s1 + $0x298] sm:$0xf]
  %v204 = vld [vmem:[%s1 + $0x29c] sm:$0xf]
  %v205 = vld [vmem:[%s1 + $0x2a0] sm:$0xf]
  %v206 = vld [vmem:[%s1 + $0x2a4] sm:$0xf]
  %v207 = vld [vmem:[%s1 + $0x2a8] sm:$0xf]
  %v208 = vld [vmem:[%s1 + $0x2ac] sm:$0xf]
  %v209 = vld [vmem:[%s1 + $0x2b0] sm:$0xf]
  %v210 = vld [vmem:[%s1 + $0x2b4] sm:$0xf]
  %v211 = vld [vmem:[%s1 + $0x2b8] sm:$0xf]
  %v212 = vld [vmem:[%s1 + $0x2bc] sm:$0xf]
  %v213 = vld [vmem:[%s1 + $0x2c0] sm:$0xf]
  %v214 = vld [vmem:[%s1 + $0x2c4] sm:$0xf]
  %v215 = vld [vmem:[%s1 + $0x2c8] sm:$0xf]
  %v216 = vld [vmem:[%s1 + $0x2cc] sm:$0xf]
  %v217 = vld [vmem:[%s1 + $0x2d0] sm:$0xf]
  %v218 = vld [vmem:[%s1 + $0x2d4] sm:$0xf]
  %v219 = vld [vmem:[%s1 + $0x2d8] sm:$0xf]
  %v220 = vld [vmem:[%s1 + $0x2dc] sm:$0xf]
  %v221 = vld [vmem:[%s1 + $0x2e0] sm:$0xf]
  %v222 = vld [vmem:[%s1 + $0x2e4] sm:$0xf]
  %v223 = vld [vmem:[%s1 + $0x2e8] sm:$0xf]
  %v224 = vld [vmem:[%s1 + $0x2ec] sm:$0xf]
  %v225 = vld [vmem:[%s1 + $0x2f0] sm:$0xf]
  %v226 = vld [vmem:[%s1 + $0x2f4] sm:$0xf]
  %v227 = vld [vmem:[%s1 + $0x2f8] sm:$0xf]
  %v228 = vld [vmem:[%s1 + $0x2fc] sm:$0xf]
  %v229 = vld [vmem:[%s1 + $0x300] sm:$0xf]
  %v230 = vld [vmem:[%s1 + $0x304] sm:$0xf]
  %v231 = vld [vmem:[%s1 + $0x308] sm:$0xf]
  %v232 = vld [vmem:[%s1 + $0x30c] sm:$0xf]
  %v233 = vld [vmem:[%s1 + $0x310] sm:$0xf]
  %v234 = vld [vmem:[%s1 + $0x314] sm:$0xf]
  %v235 = vld [vmem:[%s1 + $0x318] sm:$0xf]
  %v236 = vld [vmem:[%s1 + $0x31c] sm:$0xf]
  %v237 = vld [vmem:[%s1 + $0x320] sm:$0xf]
  %v238 = vld [vmem:[%s1 + $0x324] sm:$0xf]
  %v239 = vld [vmem:[%s1 + $0x328] sm:$0xf]
  %v240 = vld [vmem:[%s1 + $0x32c] sm:$0xf]
  %v241 = vld [vmem:[%s1 + $0x330] sm:$0xf]
  %v242 = vld [vmem:[%s1 + $0x334] sm:$0xf]
  %v243 = vld [vmem:[%s1 + $0x338] sm:$0xf]
  %v244 = vld [vmem:[%s1 + $0x33c] sm:$0xf]
  %v245 = vld [vmem:[%s1 + $0x340] sm:$0xf]
  %v246 = vld [vmem:[%s1 + $0x344] sm:$0xf]
  %v247 = vld [vmem:[%s1 + $0x348] sm:$0xf]
  %v248 = vld [vmem:[%s1 + $0x34c] sm:$0xf]
  %v249 = vld [vmem:[%s1 + $0x350] sm:$0xf]
  %v250 = vld [vmem:[%s1 + $0x354] sm:$0xf]
  %v251 = vld [vmem:[%s1 + $0x358] sm:$0xf]
  %v252 = vld [vmem:[%s1 + $0x35c] sm:$0xf]
  %v267 = vunpack.c.l.b16 %v23
  %v268 = vunpack.c.h.b16 %v23
  %v269 = vunpack.c.l.b16 %v24
  %v270 = vunpack.c.h.b16 %v24
  %v271 = vunpack.c.l.b16 %v25
  %v272 = vunpack.c.h.b16 %v25
  %v273 = vunpack.c.l.b16 %v26
  %v274 = vunpack.c.h.b16 %v26
  %v275 = vunpack.c.l.b16 %v27
  %v276 = vunpack.c.h.b16 %v27
  %v277 = vunpack.c.l.b16 %v28
  %v278 = vunpack.c.h.b16 %v28
  %v279 = vunpack.c.l.b16 %v29
  %v280 = vunpack.c.h.b16 %v29
  %v281 = vunpack.c.l.b16 %v30
  %v282 = vunpack.c.h.b16 %v30
  %v283 = vunpack.c.l.b16 %v31
  %v284 = vunpack.c.h.b16 %v31
  %v285 = vunpack.c.l.b16 %v32
  %v286 = vunpack.c.h.b16 %v32
  %v287 = vunpack.c.l.b16 %v33
  %v288 = vunpack.c.h.b16 %v33
  %v289 = vunpack.c.l.b16 %v34
  %v290 = vunpack.c.h.b16 %v34
  %v291 = vunpack.c.l.b16 %v35
  %v292 = vunpack.c.h.b16 %v35
  %v293 = vunpack.c.l.b16 %v36
  %v294 = vunpack.c.h.b16 %v36
  %v295 = vpack.c.b16 %v281, %v267
  %v296 = vpack.c.b16 %v282, %v268
  %v297 = vpack.c.b16 %v283, %v269
  %v298 = vpack.c.b16 %v284, %v270
  %v299 = vpack.c.b16 %v285, %v271
  %v300 = vpack.c.b16 %v286, %v272
  %v301 = vpack.c.b16 %v287, %v273
  %v302 = vpack.c.b16 %v288, %v274
  %v303 = vpack.c.b16 %v289, %v275
  %v304 = vpack.c.b16 %v290, %v276
  %v305 = vpack.c.b16 %v291, %v277
  %v306 = vpack.c.b16 %v292, %v278
  %v307 = vpack.c.b16 %v293, %v279
  %v308 = vpack.c.b16 %v294, %v280
  %v538 = vunpack.c.l.b16 %v37
  %v539 = vunpack.c.l.b16 %v38
  %v540 = vunpack.c.l.b16 %v39
  %v541 = vunpack.c.l.b16 %v40
  %v542 = vunpack.c.l.b16 %v41
  %v543 = vunpack.c.l.b16 %v42
  %v544 = vunpack.c.l.b16 %v43
  %v545 = vunpack.c.l.b16 %v44
  %v546 = vunpack.c.l.b16 %v45
  %v547 = vunpack.c.l.b16 %v46
  %v548 = vunpack.c.l.b16 %v47
  %v549 = vunpack.c.l.b16 %v48
  %v550 = vunpack.c.l.b16 %v49
  %v551 = vunpack.c.l.b16 %v50
  %v552 = vunpack.c.l.b16 %v51
  %v553 = vunpack.c.l.b16 %v52
  %v554 = vunpack.c.l.b16 %v53
  %v555 = vunpack.c.l.b16 %v54
  %v556 = vunpack.c.l.b16 %v55
  %v557 = vunpack.c.l.b16 %v56
  %v558 = vunpack.c.l.b16 %v57
  %v559 = vunpack.c.l.b16 %v58
  %v560 = vunpack.c.l.b16 %v59
  %v561 = vunpack.c.l.b16 %v60
  %v562 = vunpack.c.l.b16 %v61
  %v563 = vunpack.c.l.b16 %v62
  %v564 = vunpack.c.l.b16 %v63
  %v565 = vunpack.c.l.b16 %v64
  %v566 = vunpack.c.l.b16 %v65
  %v567 = vunpack.c.l.b16 %v66
  %v568 = vunpack.c.l.b16 %v67
  %v569 = vunpack.c.l.b16 %v68
  %v570 = vunpack.c.l.b16 %v69
  %v571 = vunpack.c.l.b16 %v70
  %v572 = vunpack.c.l.b16 %v71
  %v573 = vunpack.c.l.b16 %v72
  %v574 = vunpack.c.l.b16 %v73
  %v575 = vunpack.c.l.b16 %v74
  %v576 = vunpack.c.l.b16 %v75
  %v577 = vunpack.c.l.b16 %v76
  %v578 = vunpack.c.l.b16 %v77
  %v579 = vunpack.c.l.b16 %v78
  %v580 = vunpack.c.l.b16 %v79
  %v581 = vunpack.c.l.b16 %v80
  %v582 = vunpack.c.l.b16 %v81
  %v583 = vunpack.c.l.b16 %v82
  %v584 = vunpack.c.l.b16 %v83
  %v585 = vunpack.c.l.b16 %v84
  %v586 = vunpack.c.l.b16 %v85
  %v587 = vunpack.c.l.b16 %v86
  %v588 = vunpack.c.l.b16 %v87
  %v589 = vunpack.c.l.b16 %v88
  %v590 = vunpack.c.l.b16 %v89
  %v591 = vunpack.c.l.b16 %v90
  %v592 = vunpack.c.l.b16 %v91
  %v593 = vunpack.c.l.b16 %v92
  %v594 = vunpack.c.l.b16 %v93
  %v595 = vunpack.c.l.b16 %v94
  %v596 = vunpack.c.l.b16 %v95
  %v597 = vunpack.c.l.b16 %v96
  %v598 = vunpack.c.l.b16 %v97
  %v599 = vunpack.c.l.b16 %v98
  %v600 = vunpack.c.l.b16 %v99
  %v601 = vunpack.c.l.b16 %v100
  %v602 = vunpack.c.l.b16 %v101
  %v603 = vunpack.c.l.b16 %v102
  %v604 = vunpack.c.l.b16 %v103
  %v605 = vunpack.c.l.b16 %v104
  %v606 = vunpack.c.l.b16 %v105
  %v607 = vunpack.c.l.b16 %v106
  %v608 = vunpack.c.l.b16 %v107
  %v609 = vunpack.c.l.b16 %v108
  %v610 = vunpack.c.l.b16 %v109
  %v611 = vunpack.c.l.b16 %v110
  %v612 = vunpack.c.l.b16 %v111
  %v613 = vunpack.c.l.b16 %v112
  %v614 = vunpack.c.l.b16 %v113
  %v615 = vunpack.c.l.b16 %v114
  %v616 = vunpack.c.l.b16 %v115
  %v617 = vunpack.c.l.b16 %v116
  %v618 = vunpack.c.l.b16 %v117
  %v619 = vunpack.c.l.b16 %v118
  %v620 = vunpack.c.l.b16 %v119
  %v621 = vunpack.c.l.b16 %v120
  %v622 = vunpack.c.l.b16 %v121
  %v623 = vunpack.c.l.b16 %v122
  %v624 = vunpack.c.l.b16 %v123
  %v625 = vunpack.c.l.b16 %v124
  %v626 = vunpack.c.l.b16 %v125
  %v627 = vunpack.c.l.b16 %v126
  %v628 = vunpack.c.l.b16 %v127
  %v629 = vunpack.c.l.b16 %v128
  %v630 = vunpack.c.l.b16 %v129
  %v631 = vunpack.c.l.b16 %v130
  %v632 = vunpack.c.l.b16 %v131
  %v633 = vunpack.c.l.b16 %v132
  %v634 = vunpack.c.l.b16 %v133
  %v635 = vunpack.c.l.b16 %v134
  %v636 = vunpack.c.l.b16 %v135
  %v637 = vunpack.c.l.b16 %v136
  %v638 = vunpack.c.l.b16 %v137
  %v639 = vunpack.c.l.b16 %v138
  %v640 = vunpack.c.l.b16 %v139
  %v641 = vunpack.c.l.b16 %v140
  %v642 = vunpack.c.l.b16 %v141
  %v643 = vunpack.c.l.b16 %v142
  %v644 = vunpack.c.l.b16 %v143
  %v645 = vunpack.c.l.b16 %v144
  %v646 = vunpack.c.l.b16 %v145
  %v647 = vunpack.c.l.b16 %v146
  %v648 = vunpack.c.l.b16 %v147
  %v649 = vunpack.c.l.b16 %v148
  %v650 = vunpack.c.l.b16 %v149
  %v651 = vunpack.c.l.b16 %v150
  %v652 = vunpack.c.l.b16 %v151
  %v653 = vunpack.c.l.b16 %v152
  %v654 = vunpack.c.l.b16 %v153
  %v655 = vunpack.c.l.b16 %v154
  %v656 = vunpack.c.l.b16 %v155
  %v657 = vunpack.c.l.b16 %v156
  %v658 = vunpack.c.l.b16 %v157
  %v659 = vunpack.c.l.b16 %v158
  %v660 = vunpack.c.l.b16 %v159
  %v661 = vunpack.c.l.b16 %v160
  %v662 = vunpack.c.l.b16 %v161
  %v663 = vunpack.c.l.b16 %v162
  %v664 = vunpack.c.l.b16 %v163
  %v665 = vunpack.c.l.b16 %v164
  %v666 = vunpack.c.l.b16 %v165
  %v667 = vunpack.c.l.b16 %v166
  %v668 = vunpack.c.l.b16 %v167
  %v669 = vunpack.c.l.b16 %v168
  %v670 = vunpack.c.l.b16 %v169
  %v671 = vunpack.c.l.b16 %v170
  %v672 = vunpack.c.l.b16 %v171
  %v673 = vunpack.c.l.b16 %v172
  %v674 = vunpack.c.l.b16 %v173
  %v675 = vunpack.c.l.b16 %v174
  %v676 = vunpack.c.l.b16 %v175
  %v677 = vunpack.c.l.b16 %v176
  %v678 = vunpack.c.l.b16 %v177
  %v679 = vunpack.c.l.b16 %v178
  %v680 = vunpack.c.l.b16 %v179
  %v681 = vunpack.c.l.b16 %v180
  %v682 = vunpack.c.l.b16 %v181
  %v683 = vunpack.c.l.b16 %v182
  %v684 = vunpack.c.l.b16 %v183
  %v685 = vunpack.c.l.b16 %v184
  %v686 = vunpack.c.l.b16 %v185
  %v687 = vunpack.c.l.b16 %v186
  %v688 = vunpack.c.l.b16 %v187
  %v689 = vunpack.c.l.b16 %v188
  %v690 = vunpack.c.l.b16 %v189
  %v691 = vunpack.c.l.b16 %v190
  %v692 = vunpack.c.l.b16 %v191
  %v693 = vunpack.c.l.b16 %v192
  %v694 = vunpack.c.l.b16 %v193
  %v695 = vunpack.c.l.b16 %v194
  %v696 = vunpack.c.l.b16 %v195
  %v697 = vunpack.c.l.b16 %v196
  %v698 = vunpack.c.l.b16 %v197
  %v699 = vunpack.c.l.b16 %v198
  %v700 = vunpack.c.l.b16 %v199
  %v701 = vunpack.c.l.b16 %v200
  %v702 = vunpack.c.l.b16 %v201
  %v703 = vunpack.c.l.b16 %v202
  %v704 = vunpack.c.l.b16 %v203
  %v705 = vunpack.c.l.b16 %v204
  %v706 = vunpack.c.l.b16 %v205
  %v707 = vunpack.c.l.b16 %v206
  %v708 = vunpack.c.l.b16 %v207
  %v709 = vunpack.c.l.b16 %v208
  %v710 = vunpack.c.l.b16 %v209
  %v711 = vunpack.c.l.b16 %v210
  %v712 = vunpack.c.l.b16 %v211
  %v713 = vunpack.c.l.b16 %v212
  %v714 = vunpack.c.l.b16 %v213
  %v715 = vunpack.c.l.b16 %v214
  %v716 = vunpack.c.l.b16 %v215
  %v717 = vunpack.c.l.b16 %v216
  %v718 = vunpack.c.l.b16 %v217
  %v719 = vunpack.c.l.b16 %v218
  %v720 = vunpack.c.l.b16 %v219
  %v721 = vunpack.c.l.b16 %v220
  %v722 = vunpack.c.l.b16 %v221
  %v723 = vunpack.c.l.b16 %v222
  %v724 = vunpack.c.l.b16 %v223
  %v725 = vunpack.c.l.b16 %v224
  %v726 = vunpack.c.l.b16 %v225
  %v727 = vunpack.c.l.b16 %v226
  %v728 = vunpack.c.l.b16 %v227
  %v729 = vunpack.c.l.b16 %v228
  %v730 = vunpack.c.l.b16 %v229
  %v731 = vunpack.c.l.b16 %v230
  %v732 = vunpack.c.l.b16 %v231
  %v733 = vunpack.c.l.b16 %v232
  %v734 = vunpack.c.l.b16 %v233
  %v735 = vunpack.c.l.b16 %v234
  %v736 = vunpack.c.l.b16 %v235
  %v737 = vunpack.c.l.b16 %v236
  %v738 = vunpack.c.l.b16 %v237
  %v739 = vunpack.c.l.b16 %v238
  %v740 = vunpack.c.l.b16 %v239
  %v741 = vunpack.c.l.b16 %v240
  %v742 = vunpack.c.l.b16 %v241
  %v743 = vunpack.c.l.b16 %v242
  %v744 = vunpack.c.l.b16 %v243
  %v745 = vunpack.c.l.b16 %v244
  %v746 = vunpack.c.l.b16 %v245
  %v747 = vunpack.c.l.b16 %v246
  %v748 = vunpack.c.l.b16 %v247
  %v749 = vunpack.c.l.b16 %v248
  %v750 = vunpack.c.l.b16 %v249
  %v751 = vunpack.c.l.b16 %v250
  %v752 = vunpack.c.l.b16 %v251
  %v753 = vunpack.c.l.b16 %v252
  %v754 = vpack.c.b16 %v539, %v538
  %v755 = vpack.c.b16 %v541, %v540
  %v756 = vpack.c.b16 %v543, %v542
  %v757 = vpack.c.b16 %v545, %v544
  %v758 = vpack.c.b16 %v547, %v546
  %v759 = vpack.c.b16 %v549, %v548
  %v760 = vpack.c.b16 %v551, %v550
  %v761 = vpack.c.b16 %v553, %v552
  %v762 = vpack.c.b16 %v555, %v554
  %v763 = vpack.c.b16 %v557, %v556
  %v764 = vpack.c.b16 %v559, %v558
  %v765 = vpack.c.b16 %v561, %v560
  %v766 = vpack.c.b16 %v563, %v562
  %v767 = vpack.c.b16 %v565, %v564
  %v768 = vpack.c.b16 %v567, %v566
  %v769 = vpack.c.b16 %v569, %v568
  %v770 = vpack.c.b16 %v571, %v570
  %v771 = vpack.c.b16 %v573, %v572
  %v772 = vpack.c.b16 %v575, %v574
  %v773 = vpack.c.b16 %v577, %v576
  %v774 = vpack.c.b16 %v579, %v578
  %v775 = vpack.c.b16 %v581, %v580
  %v776 = vpack.c.b16 %v583, %v582
  %v777 = vpack.c.b16 %v585, %v584
  %v778 = vpack.c.b16 %v587, %v586
  %v779 = vpack.c.b16 %v589, %v588
  %v780 = vpack.c.b16 %v591, %v590
  %v781 = vpack.c.b16 %v593, %v592
  %v782 = vpack.c.b16 %v595, %v594
  %v783 = vpack.c.b16 %v597, %v596
  %v784 = vpack.c.b16 %v599, %v598
  %v785 = vpack.c.b16 %v601, %v600
  %v786 = vpack.c.b16 %v603, %v602
  %v787 = vpack.c.b16 %v605, %v604
  %v788 = vpack.c.b16 %v607, %v606
  %v789 = vpack.c.b16 %v609, %v608
  %v790 = vpack.c.b16 %v611, %v610
  %v791 = vpack.c.b16 %v613, %v612
  %v792 = vpack.c.b16 %v615, %v614
  %v793 = vpack.c.b16 %v617, %v616
  %v794 = vpack.c.b16 %v619, %v618
  %v795 = vpack.c.b16 %v621, %v620
  %v796 = vpack.c.b16 %v623, %v622
  %v797 = vpack.c.b16 %v625, %v624
  %v798 = vpack.c.b16 %v627, %v626
  %v799 = vpack.c.b16 %v629, %v628
  %v800 = vpack.c.b16 %v631, %v630
  %v801 = vpack.c.b16 %v633, %v632
  %v802 = vpack.c.b16 %v635, %v634
  %v803 = vpack.c.b16 %v637, %v636
  %v804 = vpack.c.b16 %v639, %v638
  %v805 = vpack.c.b16 %v641, %v640
  %v806 = vpack.c.b16 %v643, %v642
  %v807 = vpack.c.b16 %v645, %v644
  %v808 = vpack.c.b16 %v647, %v646
  %v809 = vpack.c.b16 %v649, %v648
  %v810 = vpack.c.b16 %v651, %v650
  %v811 = vpack.c.b16 %v653, %v652
  %v812 = vpack.c.b16 %v655, %v654
  %v813 = vpack.c.b16 %v657, %v656
  %v814 = vpack.c.b16 %v659, %v658
  %v815 = vpack.c.b16 %v661, %v660
  %v816 = vpack.c.b16 %v663, %v662
  %v817 = vpack.c.b16 %v665, %v664
  %v818 = vpack.c.b16 %v667, %v666
  %v819 = vpack.c.b16 %v669, %v668
  %v820 = vpack.c.b16 %v671, %v670
  %v821 = vpack.c.b16 %v673, %v672
  %v822 = vpack.c.b16 %v675, %v674
  %v823 = vpack.c.b16 %v677, %v676
  %v824 = vpack.c.b16 %v679, %v678
  %v825 = vpack.c.b16 %v681, %v680
  %v826 = vpack.c.b16 %v683, %v682
  %v827 = vpack.c.b16 %v685, %v684
  %v828 = vpack.c.b16 %v687, %v686
  %v829 = vpack.c.b16 %v689, %v688
  %v830 = vpack.c.b16 %v691, %v690
  %v831 = vpack.c.b16 %v693, %v692
  %v832 = vpack.c.b16 %v695, %v694
  %v833 = vpack.c.b16 %v697, %v696
  %v834 = vpack.c.b16 %v699, %v698
  %v835 = vpack.c.b16 %v701, %v700
  %v836 = vpack.c.b16 %v703, %v702
  %v837 = vpack.c.b16 %v705, %v704
  %v838 = vpack.c.b16 %v707, %v706
  %v839 = vpack.c.b16 %v709, %v708
  %v840 = vpack.c.b16 %v711, %v710
  %v841 = vpack.c.b16 %v713, %v712
  %v842 = vpack.c.b16 %v715, %v714
  %v843 = vpack.c.b16 %v717, %v716
  %v844 = vpack.c.b16 %v719, %v718
  %v845 = vpack.c.b16 %v721, %v720
  %v846 = vpack.c.b16 %v723, %v722
  %v847 = vpack.c.b16 %v725, %v724
  %v848 = vpack.c.b16 %v727, %v726
  %v849 = vpack.c.b16 %v729, %v728
  %v850 = vpack.c.b16 %v731, %v730
  %v851 = vpack.c.b16 %v733, %v732
  %v852 = vpack.c.b16 %v735, %v734
  %v853 = vpack.c.b16 %v737, %v736
  %v854 = vpack.c.b16 %v739, %v738
  %v855 = vpack.c.b16 %v741, %v740
  %v856 = vpack.c.b16 %v743, %v742
  %v857 = vpack.c.b16 %v745, %v744
  %v858 = vpack.c.b16 %v747, %v746
  %v859 = vpack.c.b16 %v749, %v748
  %v860 = vpack.c.b16 %v751, %v750
  %v861 = vpack.c.b16 %v753, %v752
  %vm970 = vcmask 523264
  %v972 = vsel %vm970, %v308, 0
  %974 = vmatprep.subr.bf16.mxu0 0
  %975 = vmatpush1.bf16.msra.mxu0 %v761
  %976 = vmatprep.subr.bf16.mxu0 0
  %977 = vmatpush1.bf16.msra.mxu0 %v760
  %978 = vmatprep.subr.bf16.mxu0 0
  %979 = vmatpush1.bf16.msra.mxu0 %v759
  %980 = vmatprep.subr.bf16.mxu0 0
  %981 = vmatpush1.bf16.msra.mxu0 %v758
  %982 = vmatprep.subr.bf16.mxu0 0
  %983 = vmatpush1.bf16.msra.mxu0 %v757
  %984 = vmatprep.subr.bf16.mxu0 0
  %985 = vmatpush1.bf16.msra.mxu0 %v756
  %986 = vmatprep.subr.bf16.mxu0 0
  %987 = vmatpush1.bf16.msra.mxu0 %v755
  %988 = vmatprep.subr.bf16.mxu0 0
  %989 = vmatpush1.bf16.msra.mxu0 %v754
  %990 = vmatprep.subr.bf16.mxu0 0
  %991 = vmatpush2.bf16.msra.mxu0 %v769
  %992 = vmatprep.subr.bf16.mxu0 0
  %993 = vmatpush2.bf16.msra.mxu0 %v768
  %994 = vmatprep.subr.bf16.mxu0 0
  %995 = vmatpush2.bf16.msra.mxu0 %v767
  %996 = vmatprep.subr.bf16.mxu0 0
  %997 = vmatpush2.bf16.msra.mxu0 %v766
  %998 = vmatprep.subr.bf16.mxu0 0
  %999 = vmatpush2.bf16.msra.mxu0 %v765
  %1000 = vmatprep.subr.bf16.mxu0 0
  %1001 = vmatpush2.bf16.msra.mxu0 %v764
  %1002 = vmatprep.subr.bf16.mxu0 0
  %1003 = vmatpush2.bf16.msra.mxu0 %v763
  %1004 = vmatprep.subr.bf16.mxu0 0
  %1005 = vmatpush2.bf16.msra.mxu0 %v762
  %1006 = vmatprep.mubr.bf16.mxu0 %v296
  %1007 = vmatmul.mubr.bf16.gmra.mxu0 %v295
  %v1008 = vpop.f32.mrf.mxu0
  %v1009 = vadd.f32 0.0, %v1008
  %v1010 = vpop.f32.mrf.mxu0
  %v1011 = vpop.f32.mrf.mxu0
  %v1012 = vadd.f32 0.0, %v1011
  %v1013 = vpop.f32.mrf.mxu0
  %1014 = vdwg.mxu0
  %1015 = vmatprep.subr.bf16.mxu0 0
  %1016 = vmatpush1.bf16.msra.mxu0 %v777
  %1017 = vmatprep.subr.bf16.mxu0 0
  %1018 = vmatpush1.bf16.msra.mxu0 %v776
  %1019 = vmatprep.subr.bf16.mxu0 0
  %1020 = vmatpush1.bf16.msra.mxu0 %v775
  %1021 = vmatprep.subr.bf16.mxu0 0
  %1022 = vmatpush1.bf16.msra.mxu0 %v774
  %1023 = vmatprep.subr.bf16.mxu0 0
  %1024 = vmatpush1.bf16.msra.mxu0 %v773
  %1025 = vmatprep.subr.bf16.mxu0 0
  %1026 = vmatpush1.bf16.msra.mxu0 %v772
  %1027 = vmatprep.subr.bf16.mxu0 0
  %1028 = vmatpush1.bf16.msra.mxu0 %v771
  %1029 = vmatprep.subr.bf16.mxu0 0
  %1030 = vmatpush1.bf16.msra.mxu0 %v770
  %1031 = vmatprep.subr.bf16.mxu0 0
  %1032 = vmatpush2.bf16.msra.mxu0 %v785
  %1033 = vmatprep.subr.bf16.mxu0 0
  %1034 = vmatpush2.bf16.msra.mxu0 %v784
  %1035 = vmatprep.subr.bf16.mxu0 0
  %1036 = vmatpush2.bf16.msra.mxu0 %v783
  %1037 = vmatprep.subr.bf16.mxu0 0
  %1038 = vmatpush2.bf16.msra.mxu0 %v782
  %1039 = vmatprep.subr.bf16.mxu0 0
  %1040 = vmatpush2.bf16.msra.mxu0 %v781
  %1041 = vmatprep.subr.bf16.mxu0 0
  %1042 = vmatpush2.bf16.msra.mxu0 %v780
  %1043 = vmatprep.subr.bf16.mxu0 0
  %1044 = vmatpush2.bf16.msra.mxu0 %v779
  %1045 = vmatprep.subr.bf16.mxu0 0
  %1046 = vmatpush2.bf16.msra.mxu0 %v778
  %1047 = vmatprep.mubr.bf16.mxu0 %v298
  %1048 = vmatmul.mubr.bf16.gmra.mxu0 %v297
  %v1049 = vpop.f32.mrf.mxu0
  %v1050 = vadd.f32 %v1009, %v1049
  %v1051 = vpop.f32.mrf.mxu0
  %v1052 = vpop.f32.mrf.mxu0
  %v1053 = vadd.f32 %v1012, %v1052
  %v1054 = vpop.f32.mrf.mxu0
  %1055 = vdwg.mxu0
  %1056 = vmatprep.subr.bf16.mxu0 0
  %1057 = vmatpush1.bf16.msra.mxu0 %v793
  %1058 = vmatprep.subr.bf16.mxu0 0
  %1059 = vmatpush1.bf16.msra.mxu0 %v792
  %1060 = vmatprep.subr.bf16.mxu0 0
  %1061 = vmatpush1.bf16.msra.mxu0 %v791
  %1062 = vmatprep.subr.bf16.mxu0 0
  %1063 = vmatpush1.bf16.msra.mxu0 %v790
  %1064 = vmatprep.subr.bf16.mxu0 0
  %1065 = vmatpush1.bf16.msra.mxu0 %v789
  %1066 = vmatprep.subr.bf16.mxu0 0
  %1067 = vmatpush1.bf16.msra.mxu0 %v788
  %1068 = vmatprep.subr.bf16.mxu0 0
  %1069 = vmatpush1.bf16.msra.mxu0 %v787
  %1070 = vmatprep.subr.bf16.mxu0 0
  %1071 = vmatpush1.bf16.msra.mxu0 %v786
  %1072 = vmatprep.subr.bf16.mxu0 0
  %1073 = vmatpush2.bf16.msra.mxu0 %v801
  %1074 = vmatprep.subr.bf16.mxu0 0
  %1075 = vmatpush2.bf16.msra.mxu0 %v800
  %1076 = vmatprep.subr.bf16.mxu0 0
  %1077 = vmatpush2.bf16.msra.mxu0 %v799
  %1078 = vmatprep.subr.bf16.mxu0 0
  %1079 = vmatpush2.bf16.msra.mxu0 %v798
  %1080 = vmatprep.subr.bf16.mxu0 0
  %1081 = vmatpush2.bf16.msra.mxu0 %v797
  %1082 = vmatprep.subr.bf16.mxu0 0
  %1083 = vmatpush2.bf16.msra.mxu0 %v796
  %1084 = vmatprep.subr.bf16.mxu0 0
  %1085 = vmatpush2.bf16.msra.mxu0 %v795
  %1086 = vmatprep.subr.bf16.mxu0 0
  %1087 = vmatpush2.bf16.msra.mxu0 %v794
  %1088 = vmatprep.mubr.bf16.mxu0 %v300
  %1089 = vmatmul.mubr.bf16.gmra.mxu0 %v299
  %v1090 = vpop.f32.mrf.mxu0
  %v1091 = vadd.f32 %v1050, %v1090
  %v1092 = vpop.f32.mrf.mxu0
  %v1093 = vpop.f32.mrf.mxu0
  %v1094 = vadd.f32 %v1053, %v1093
  %v1095 = vpop.f32.mrf.mxu0
  %1096 = vdwg.mxu0
  %1097 = vmatprep.subr.bf16.mxu0 0
  %1098 = vmatpush1.bf16.msra.mxu0 %v809
  %1099 = vmatprep.subr.bf16.mxu0 0
  %1100 = vmatpush1.bf16.msra.mxu0 %v808
  %1101 = vmatprep.subr.bf16.mxu0 0
  %1102 = vmatpush1.bf16.msra.mxu0 %v807
  %1103 = vmatprep.subr.bf16.mxu0 0
  %1104 = vmatpush1.bf16.msra.mxu0 %v806
  %1105 = vmatprep.subr.bf16.mxu0 0
  %1106 = vmatpush1.bf16.msra.mxu0 %v805
  %1107 = vmatprep.subr.bf16.mxu0 0
  %1108 = vmatpush1.bf16.msra.mxu0 %v804
  %1109 = vmatprep.subr.bf16.mxu0 0
  %1110 = vmatpush1.bf16.msra.mxu0 %v803
  %1111 = vmatprep.subr.bf16.mxu0 0
  %1112 = vmatpush1.bf16.msra.mxu0 %v802
  %1113 = vmatprep.subr.bf16.mxu0 0
  %1114 = vmatpush2.bf16.msra.mxu0 %v817
  %1115 = vmatprep.subr.bf16.mxu0 0
  %1116 = vmatpush2.bf16.msra.mxu0 %v816
  %1117 = vmatprep.subr.bf16.mxu0 0
  %1118 = vmatpush2.bf16.msra.mxu0 %v815
  %1119 = vmatprep.subr.bf16.mxu0 0
  %1120 = vmatpush2.bf16.msra.mxu0 %v814
  %1121 = vmatprep.subr.bf16.mxu0 0
  %1122 = vmatpush2.bf16.msra.mxu0 %v813
  %1123 = vmatprep.subr.bf16.mxu0 0
  %1124 = vmatpush2.bf16.msra.mxu0 %v812
  %1125 = vmatprep.subr.bf16.mxu0 0
  %1126 = vmatpush2.bf16.msra.mxu0 %v811
  %1127 = vmatprep.subr.bf16.mxu0 0
  %1128 = vmatpush2.bf16.msra.mxu0 %v810
  %1129 = vmatprep.mubr.bf16.mxu0 %v302
  %1130 = vmatmul.mubr.bf16.gmra.mxu0 %v301
  %v1131 = vpop.f32.mrf.mxu0
  %v1132 = vadd.f32 %v1091, %v1131
  %v1133 = vpop.f32.mrf.mxu0
  %v1134 = vpop.f32.mrf.mxu0
  %v1135 = vadd.f32 %v1094, %v1134
  %v1136 = vpop.f32.mrf.mxu0
  %1137 = vdwg.mxu0
  %1138 = vmatprep.subr.bf16.mxu0 0
  %1139 = vmatpush1.bf16.msra.mxu0 %v825
  %1140 = vmatprep.subr.bf16.mxu0 0
  %1141 = vmatpush1.bf16.msra.mxu0 %v824
  %1142 = vmatprep.subr.bf16.mxu0 0
  %1143 = vmatpush1.bf16.msra.mxu0 %v823
  %1144 = vmatprep.subr.bf16.mxu0 0
  %1145 = vmatpush1.bf16.msra.mxu0 %v822
  %1146 = vmatprep.subr.bf16.mxu0 0
  %1147 = vmatpush1.bf16.msra.mxu0 %v821
  %1148 = vmatprep.subr.bf16.mxu0 0
  %1149 = vmatpush1.bf16.msra.mxu0 %v820
  %1150 = vmatprep.subr.bf16.mxu0 0
  %1151 = vmatpush1.bf16.msra.mxu0 %v819
  %1152 = vmatprep.subr.bf16.mxu0 0
  %1153 = vmatpush1.bf16.msra.mxu0 %v818
  %1154 = vmatprep.subr.bf16.mxu0 0
  %1155 = vmatpush2.bf16.msra.mxu0 %v833
  %1156 = vmatprep.subr.bf16.mxu0 0
  %1157 = vmatpush2.bf16.msra.mxu0 %v832
  %1158 = vmatprep.subr.bf16.mxu0 0
  %1159 = vmatpush2.bf16.msra.mxu0 %v831
  %1160 = vmatprep.subr.bf16.mxu0 0
  %1161 = vmatpush2.bf16.msra.mxu0 %v830
  %1162 = vmatprep.subr.bf16.mxu0 0
  %1163 = vmatpush2.bf16.msra.mxu0 %v829
  %1164 = vmatprep.subr.bf16.mxu0 0
  %1165 = vmatpush2.bf16.msra.mxu0 %v828
  %1166 = vmatprep.subr.bf16.mxu0 0
  %1167 = vmatpush2.bf16.msra.mxu0 %v827
  %1168 = vmatprep.subr.bf16.mxu0 0
  %1169 = vmatpush2.bf16.msra.mxu0 %v826
  %1170 = vmatprep.mubr.bf16.mxu0 %v304
  %1171 = vmatmul.mubr.bf16.gmra.mxu0 %v303
  %v1172 = vpop.f32.mrf.mxu0
  %v1173 = vadd.f32 %v1132, %v1172
  %v1174 = vpop.f32.mrf.mxu0
  %v1175 = vpop.f32.mrf.mxu0
  %v1176 = vadd.f32 %v1135, %v1175
  %v1177 = vpop.f32.mrf.mxu0
  %1178 = vdwg.mxu0
  %1179 = vmatprep.subr.bf16.mxu0 0
  %1180 = vmatpush1.bf16.msra.mxu0 %v841
  %1181 = vmatprep.subr.bf16.mxu0 0
  %1182 = vmatpush1.bf16.msra.mxu0 %v840
  %1183 = vmatprep.subr.bf16.mxu0 0
  %1184 = vmatpush1.bf16.msra.mxu0 %v839
  %1185 = vmatprep.subr.bf16.mxu0 0
  %1186 = vmatpush1.bf16.msra.mxu0 %v838
  %1187 = vmatprep.subr.bf16.mxu0 0
  %1188 = vmatpush1.bf16.msra.mxu0 %v837
  %1189 = vmatprep.subr.bf16.mxu0 0
  %1190 = vmatpush1.bf16.msra.mxu0 %v836
  %1191 = vmatprep.subr.bf16.mxu0 0
  %1192 = vmatpush1.bf16.msra.mxu0 %v835
  %1193 = vmatprep.subr.bf16.mxu0 0
  %1194 = vmatpush1.bf16.msra.mxu0 %v834
  %1195 = vmatprep.subr.bf16.mxu0 0
  %1196 = vmatpush2.bf16.msra.mxu0 %v849
  %1197 = vmatprep.subr.bf16.mxu0 0
  %1198 = vmatpush2.bf16.msra.mxu0 %v848
  %1199 = vmatprep.subr.bf16.mxu0 0
  %1200 = vmatpush2.bf16.msra.mxu0 %v847
  %1201 = vmatprep.subr.bf16.mxu0 0
  %1202 = vmatpush2.bf16.msra.mxu0 %v846
  %1203 = vmatprep.subr.bf16.mxu0 0
  %1204 = vmatpush2.bf16.msra.mxu0 %v845
  %1205 = vmatprep.subr.bf16.mxu0 0
  %1206 = vmatpush2.bf16.msra.mxu0 %v844
  %1207 = vmatprep.subr.bf16.mxu0 0
  %1208 = vmatpush2.bf16.msra.mxu0 %v843
  %1209 = vmatprep.subr.bf16.mxu0 0
  %1210 = vmatpush2.bf16.msra.mxu0 %v842
  %1211 = vmatprep.mubr.bf16.mxu0 %v306
  %1212 = vmatmul.mubr.bf16.gmra.mxu0 %v305
  %v1213 = vpop.f32.mrf.mxu0
  %v1214 = vadd.f32 %v1173, %v1213
  %v1215 = vpop.f32.mrf.mxu0
  %v1216 = vpop.f32.mrf.mxu0
  %v1217 = vadd.f32 %v1176, %v1216
  %v1218 = vpop.f32.mrf.mxu0
  %1219 = vdwg.mxu0
  %1220 = vmatprep.subr.bf16.mxu0 0
  %1221 = vmatpush1.bf16.msra.mxu0 %v857
  %1222 = vmatprep.subr.bf16.mxu0 0
  %1223 = vmatpush1.bf16.msra.mxu0 %v856
  %1224 = vmatprep.subr.bf16.mxu0 0
  %1225 = vmatpush1.bf16.msra.mxu0 %v855
  %1226 = vmatprep.subr.bf16.mxu0 0
  %1227 = vmatpush1.bf16.msra.mxu0 %v854
  %1228 = vmatprep.subr.bf16.mxu0 0
  %1229 = vmatpush1.bf16.msra.mxu0 %v853
  %1230 = vmatprep.subr.bf16.mxu0 0
  %1231 = vmatpush1.bf16.msra.mxu0 %v852
  %1232 = vmatprep.subr.bf16.mxu0 0
  %1233 = vmatpush1.bf16.msra.mxu0 %v851
  %1234 = vmatprep.subr.bf16.mxu0 0
  %1235 = vmatpush1.bf16.msra.mxu0 %v850
  %1236 = vmatprep.subr.bf16.mxu0 0
  %1237 = vmatpush2.bf16.msra.mxu0 0
  %1238 = vmatprep.subr.bf16.mxu0 0
  %1239 = vmatpush2.bf16.msra.mxu0 0
  %1240 = vmatprep.subr.bf16.mxu0 0
  %1241 = vmatpush2.bf16.msra.mxu0 0
  %1242 = vmatprep.subr.bf16.mxu0 0
  %1243 = vmatpush2.bf16.msra.mxu0 0
  %1244 = vmatprep.subr.bf16.mxu0 0
  %1245 = vmatpush2.bf16.msra.mxu0 %v861
  %1246 = vmatprep.subr.bf16.mxu0 0
  %1247 = vmatpush2.bf16.msra.mxu0 %v860
  %1248 = vmatprep.subr.bf16.mxu0 0
  %1249 = vmatpush2.bf16.msra.mxu0 %v859
  %1250 = vmatprep.subr.bf16.mxu0 0
  %1251 = vmatpush2.bf16.msra.mxu0 %v858
  %1252 = vmatprep.mubr.bf16.mxu0 %v972
  %1253 = vmatmul.mubr.bf16.gmra.mxu0 %v307
  %v1254 = vpop.f32.mrf.mxu0
  %v1255 = vadd.f32 %v1214, %v1254
  %v1256 = vpop.f32.mrf.mxu0
  %v1257 = vpop.f32.mrf.mxu0
  %v1258 = vadd.f32 %v1217, %v1257
  %v1259 = vpop.f32.mrf.mxu0
  %1260 = vdwg.mxu0
  %v1261 = vadd.f32 %v21, %v1255
  %v1262 = vadd.f32 %v22, %v1258
  %1263 = vst [vmem:[#allocation2] sm:$0xff] %v1261
  %1264 = vst [vmem:[#allocation2 + $0x8] sm:$0xff] %v1262
  // Predicated region
  $region18: #{encoder_forward.6} parent=0 // pred_check
    %p1265 = pneg %p15
  $region19: #{encoder_forward.6} parent=0 // pred_check_branch
    %1267 = sbr.rel (%p1265) target = $region21
  $region20: #{encoder_forward.6} parent=0 // pred_region
    %v1268 = vld [vmem:[#allocation2] sm:$0xff]
    %v1269 = vld [vmem:[#allocation2 + $0x8] sm:$0xff]
    %v1270 = vld [vmem:[%s2] sm:$0x1]
    %v1272 = vlaneseq
    %v1273 = vshrl.u32 %v1272, 7
    %v1274 = vsub.s32 0, %v1273
    %v1275 = vrot.slane %v1270, %v1274
    %v1277 = vadd.f32 %v1268, %v1275
    %v1278 = vadd.f32 %v1269, %v1275
    %v1279 = vmax.f32 %v1277, 0.0
    %v1280 = vmax.f32 %v1278, 0.0
    %v1281 = vpack.c.bf16 %v1280, %v1279
    %v1283 = vunpack.c.l.b16 %v1281
    %v1284 = vunpack.c.h.b16 %v1281
    %v1285 = vpack.c.b16 %v1283, %v1283
    %v1286 = vpack.c.b16 %v1284, %v1284
    %1289 = vst [vmem:[%s3] sm:$0xf] %v1285
    %1290 = vst [vmem:[%s3 + $0x4] sm:$0xf] %v1286
  $region21: #{encoder_forward.6} parent=0 // pred_fallthru
    _
  // Predicated region
  $region22: #{encoder_forward.6} parent=0 // pred_check
    _
  $region23: #{encoder_forward.6} parent=0 // pred_check_branch
    %1292 = sbr.rel (0) target = $region25
  $region24: #{encoder_forward.6} parent=0 // pred_region
    _
  $region25: #{encoder_forward.6} parent=0 // pred_fallthru
    _
  // Predicated region
  $region26: #{encoder_forward.6} parent=0 // pred_check
    _
  $region27: #{encoder_forward.6} parent=0 // pred_check_branch
    %1294 = sbr.rel (0) target = $region29
  $region28: #{encoder_forward.6} parent=0 // pred_region
    _
  $region29: #{encoder_forward.6} parent=0 // pred_fallthru
    _

</llo_original>
